<compile_context>
chip_gen: v5e
topology: v5e:2x2
jax: 0.10.0
libtpu: 0.0.40
codegen_flags: <defaults>
</compile_context>

<pallas_src>
import functools

import jax
import jax.numpy as jnp
from jax.experimental import pallas as pl
from jax.experimental.pallas import tpu as pltpu


def _round_up(v, m):
    return (v + m - 1) // m * m


# ---------------------------------------------------------------------------
# Fused (im2col) matmul + bias + optional ReLU   (stem 7x7 and stride-2 3x3)
# ---------------------------------------------------------------------------
def _mm_bias_kernel(a_ref, b_ref, shift_ref, o_ref, *, relu):
    acc = jnp.dot(a_ref[...], b_ref[...], preferred_element_type=jnp.float32)
    y = acc + shift_ref[...]
    if relu:
        y = jnp.maximum(y, 0.0)
    o_ref[...] = y.astype(o_ref.dtype)


def matmul_bias(a, b, shift, *, relu, out_dtype=jnp.bfloat16):
    """out = act(a @ b + shift).  a: [M,K] bf16, b: [K,N] bf16, shift: [1,N] f32."""
    M, K = a.shape
    K2, N = b.shape
    assert K == K2
    tm = min(128, _round_up(M, 16))          # bf16 sublane tile is (16, 128)
    Mp = _round_up(M, tm)
    if Mp != M:
        a = jnp.pad(a, ((0, Mp - M), (0, 0)))
    out = pl.pallas_call(
        functools.partial(_mm_bias_kernel, relu=relu),
        out_shape=jax.ShapeDtypeStruct((Mp, N), out_dtype),
        grid=(Mp // tm,),
        in_specs=[
            pl.BlockSpec((tm, K), lambda i: (i, 0)),
            pl.BlockSpec((K, N), lambda i: (0, 0)),
            pl.BlockSpec((1, N), lambda i: (0, 0)),
        ],
        out_specs=pl.BlockSpec((tm, N), lambda i: (i, 0)),
        compiler_params=pltpu.CompilerParams(dimension_semantics=("parallel",)),
    )(a, b, shift)
    return out[:M]


def im2col(x, kh, kw, stride, pad):
    """x: NHWC bf16 -> A [N*Ho*Wo, kh*kw*C] bf16 (tap-major, cin-minor columns)."""
    N, H, W, C = x.shape
    Ho = (H + 2 * pad - kh) // stride + 1
    Wo = (W + 2 * pad - kw) // stride + 1
    xp = jnp.pad(x, ((0, 0), (pad, pad), (pad, pad), (0, 0)))
    patches = []
    for i in range(kh):
        for j in range(kw):
            patches.append(xp[:, i:i + stride * Ho:stride,
                              j:j + stride * Wo:stride, :])
    p = jnp.stack(patches, axis=3)                        # [N, Ho, Wo, kh*kw, C]
    return p.reshape(N * Ho * Wo, kh * kw * C), (N, Ho, Wo)


def conv_im2col(x, wmat, shift, *, kh, kw, stride, pad, relu):
    a, (N, Ho, Wo) = im2col(x, kh, kw, stride, pad)
    Cout = wmat.shape[1]
    y = matmul_bias(a, wmat, shift, relu=relu)
    return y.reshape(N, Ho, Wo, Cout)


# ---------------------------------------------------------------------------
# Fused stride-1 3x3 conv + bias + BatchNorm(inference) + ReLU
# (no im2col materialization in HBM: taps are applied as shifted slices of the
#  flattened, zero-padded feature map held in VMEM, accumulated in f32)
# ---------------------------------------------------------------------------
def _conv3x3_s1_kernel(x_ref, w_ref, scale_ref, shift_ref, o_ref, *, Wp, relu):
    # x_ref: (Sp, Cin) bf16 flat padded map  |  w_ref: (9, Cin, Cout) bf16
    # o_ref: (Q, Cout) bf16 with Q = H*Wp flat rows (extra cols sliced off outside)
    Q, Cout = o_ref.shape
    acc = jnp.zeros((Q, Cout), jnp.float32)
    for t in range(9):
        off = (t // 3) * Wp + (t % 3)
        a = x_ref[off:off + Q, :]
        acc = acc + jnp.dot(a, w_ref[t], preferred_element_type=jnp.float32)
    y = acc * scale_ref[...] + shift_ref[...]
    if relu:
        y = jnp.maximum(y, 0.0)
    o_ref[...] = y.astype(o_ref.dtype)


def conv3x3_s1_bn_relu(x, w_taps, scale, shift, *, relu=True):
    """x: NHWC bf16; Conv2d(k=3, s=1, p=1) + per-channel affine (+ReLU)."""
    N, H, W, C = x.shape
    Cout = w_taps.shape[-1]
    Hp, Wp = H + 2, W + 2
    xp = jnp.pad(x, ((0, 0), (1, 1), (1, 1), (0, 0)))     # zero pad (Conv2d semantics)
    xf = xp.reshape(N, Hp * Wp, C)
    Q = H * Wp                                            # flat output rows computed
    Sp = _round_up(Q + 2 * Wp + 2, 8)                     # tap slices never read OOB
    xf = jnp.pad(xf, ((0, 0), (0, Sp - Hp * Wp), (0, 0)))
    out = pl.pallas_call(
        functools.partial(_conv3x3_s1_kernel, Wp=Wp, relu=relu),
        out_shape=jax.ShapeDtypeStruct((N, Q, Cout), jnp.bfloat16),
        grid=(N,),
        in_specs=[
            pl.BlockSpec((None, Sp, C), lambda n: (n, 0, 0)),
            pl.BlockSpec((9, C, Cout), lambda n: (0, 0, 0)),
            pl.BlockSpec((1, Cout), lambda n: (0, 0)),
            pl.BlockSpec((1, Cout), lambda n: (0, 0)),
        ],
        out_specs=pl.BlockSpec((None, Q, Cout), lambda n: (n, 0, 0)),
        compiler_params=pltpu.CompilerParams(dimension_semantics=("parallel",)),
    )(xf, w_taps, scale, shift)
    return out.reshape(N, H, Wp, Cout)[:, :, :W, :]


# ---------------------------------------------------------------------------
# MaxPool2d(kernel_size=3, stride=2, padding=1)
# (window max from two parity-split views of the padded map; no 9x HBM stack)
# ---------------------------------------------------------------------------
def _maxpool_kernel(xe_ref, xo_ref, o_ref, *, Wp):
    Q, _ = o_ref.shape
    m = None
    for i in range(3):
        for j in range(3):
            d = i * Wp + j                   # element 2*q + d -> parity d%2, row q + d//2
            src = xe_ref if d % 2 == 0 else xo_ref
            v = src[d // 2:d // 2 + Q, :]
            m = v if m is None else jnp.maximum(m, v)
    o_ref[...] = m


def maxpool_3x3_s2_p1(x):
    N, H, W, C = x.shape
    Ho = (H + 2 - 3) // 2 + 1
    Wo = (W + 2 - 3) // 2 + 1
    Hp, Wp = H + 2, W + 2
    ninf = float("-inf")
    xp = jnp.pad(x, ((0, 0), (1, 1), (1, 1), (0, 0)), constant_values=ninf)
    xf = xp.reshape(N, Hp * Wp, C)
    Q = Ho * Wp                                           # flat output rows computed
    Sp = _round_up(Q + Wp + 2, 8)                         # per-parity rows needed
    xf = jnp.pad(xf, ((0, 0), (0, 2 * Sp - Hp * Wp), (0, 0)), constant_values=ninf)
    xe = xf[:, 0::2, :]
    xo = xf[:, 1::2, :]
    out = pl.pallas_call(
        functools.partial(_maxpool_kernel, Wp=Wp),
        out_shape=jax.ShapeDtypeStruct((N, Q, C), x.dtype),
        grid=(N,),
        in_specs=[
            pl.BlockSpec((None, Sp, C), lambda n: (n, 0, 0)),
            pl.BlockSpec((None, Sp, C), lambda n: (n, 0, 0)),
        ],
        out_specs=pl.BlockSpec((None, Q, C), lambda n: (n, 0, 0)),
        compiler_params=pltpu.CompilerParams(dimension_semantics=("parallel",)),
    )(xe, xo)
    return out.reshape(N, Ho, Wp, C)[:, :, :Wo, :]


# ---------------------------------------------------------------------------
# Global spatial mean fused with the Linear classifier (single pallas_call)
# ---------------------------------------------------------------------------
def _gap_fc_kernel(x_ref, w_ref, b_ref, o_ref, *, inv_hw):
    z = jnp.sum(x_ref[...].astype(jnp.float32), axis=1) * inv_hw        # (N, C)
    logits = jnp.dot(z.astype(jnp.bfloat16), w_ref[...],
                     preferred_element_type=jnp.float32)
    o_ref[...] = logits + b_ref[...]


def gap_linear(x, w, b):
    """x: NHWC bf16; w: (C, n_classes) bf16; b: (1, n_classes) f32 -> (N, n_classes) f32."""
    N, H, W, C = x.shape
    ncls = w.shape[1]
    xr = x.reshape(N, H * W, C)
    return pl.pallas_call(
        functools.partial(_gap_fc_kernel, inv_hw=1.0 / (H * W)),
        out_shape=jax.ShapeDtypeStruct((N, ncls), jnp.float32),
        grid=(1,),
        in_specs=[
            pl.BlockSpec((N, H * W, C), lambda i: (0, 0, 0)),
            pl.BlockSpec((C, ncls), lambda i: (0, 0)),
            pl.BlockSpec((1, ncls), lambda i: (0, 0)),
        ],
        out_specs=pl.BlockSpec((N, ncls), lambda i: (0, 0)),
    )(xr, w, b)


# ---------------------------------------------------------------------------
# Parameters: deterministic synthetic init + one-time packing (outside jit)
# ---------------------------------------------------------------------------
def init_params(key, layers=(32, 64, 128), n_input_channels=3, n_classes=3):
    ks = jax.random.split(key, 40)
    it = iter(ks)

    def nrm(shape, s=0.05):
        return s * jax.random.normal(next(it), shape, jnp.float32)

    params = {
        "norm_mean": jnp.array([0.233, 0.298, 0.256], jnp.float32),
        "norm_std": jnp.array([0.199, 0.118, 0.201], jnp.float32),
        "conv0_w": nrm((layers[0], n_input_channels, 7, 7)),
        "conv0_b": nrm((layers[0],)),
    }
    blocks = []
    c = layers[0]
    for l in layers:
        blocks.append(dict(
            wa=nrm((l, c, 3, 3)), ba=nrm((l,)),
            wb=nrm((l, l, 3, 3)), bb=nrm((l,)),
            gamma=1.0 + nrm((l,)), beta=nrm((l,)),
            mu=nrm((l,)), var=1.0 + jnp.abs(nrm((l,))),
        ))
        c = l
    params["blocks"] = blocks
    params["fc_w"] = nrm((n_classes, c))
    params["fc_b"] = nrm((n_classes,))
    return params


def _pack_conv_matrix(w):
    # PyTorch (Cout, Cin, kh, kw) -> [kh*kw*Cin, Cout] bf16 (tap-major rows).
    Cout, Cin, kh, kw = w.shape
    return jnp.transpose(w, (2, 3, 1, 0)).reshape(kh * kw * Cin, Cout).astype(jnp.bfloat16)


def _pack_conv_taps(w):
    # PyTorch (Cout, Cin, 3, 3) -> [9, Cin, Cout] bf16 per-tap matrices.
    Cout, Cin, kh, kw = w.shape
    return jnp.transpose(w, (2, 3, 1, 0)).reshape(kh * kw, Cin, Cout).astype(jnp.bfloat16)


def prepare_params(params):
    """One-time weight packing (transpose / bf16 cast / BN+bias fold) outside the forward."""
    packed = {
        "norm_mean": params["norm_mean"],
        "norm_std": params["norm_std"],
        "stem_w": _pack_conv_matrix(params["conv0_w"]),
        "stem_shift": params["conv0_b"].reshape(1, -1).astype(jnp.float32),
    }
    blocks = []
    for blk in params["blocks"]:
        s = blk["gamma"] / jnp.sqrt(blk["var"] + 1e-5)     # inference-mode BN fold
        blocks.append(dict(
            wa=_pack_conv_matrix(blk["wa"]),
            shift_a=blk["ba"].reshape(1, -1).astype(jnp.float32),
            wb=_pack_conv_taps(blk["wb"]),
            scale_b=s.reshape(1, -1).astype(jnp.float32),
            shift_b=(s * (blk["bb"] - blk["mu"]) + blk["beta"]).reshape(1, -1).astype(jnp.float32),
        ))
    packed["blocks"] = blocks
    packed["fc_w"] = params["fc_w"].T.astype(jnp.bfloat16)
    packed["fc_b"] = params["fc_b"].reshape(1, -1).astype(jnp.float32)
    return packed


# ---------------------------------------------------------------------------
# Forward pass
# ---------------------------------------------------------------------------
def convo_classifier_forward(packed, x_nchw):
    # NCHW -> NHWC once; torchvision Normalize applied *before* any padding so the
    # stem conv's zero padding matches PyTorch exactly.
    x = jnp.transpose(x_nchw, (0, 2, 3, 1)).astype(jnp.float32)
    x = (x - packed["norm_mean"]) / packed["norm_std"]
    x = x.astype(jnp.bfloat16)

    # Stem: Conv(7x7, s=2, p=3) + ReLU, then MaxPool(3, s=2, p=1).
    x = conv_im2col(x, packed["stem_w"], packed["stem_shift"],
                    kh=7, kw=7, stride=2, pad=3, relu=True)
    x = maxpool_3x3_s2_p1(x)

    # Blocks: Conv(3x3, s=2) + ReLU, then fused Conv(3x3, s=1) + BN + ReLU.
    for blk in packed["blocks"]:
        x = conv_im2col(x, blk["wa"], blk["shift_a"],
                        kh=3, kw=3, stride=2, pad=1, relu=True)
        x = conv3x3_s1_bn_relu(x, blk["wb"], blk["scale_b"], blk["shift_b"], relu=True)

    # Global mean over H, W fused with the Linear classifier.
    return gap_linear(x, packed["fc_w"], packed["fc_b"])


if __name__ == "__main__":
    key = jax.random.PRNGKey(0)
    pkey, xkey = jax.random.split(key)
    params = init_params(pkey)
    packed = prepare_params(params)          # one-time packing, not re-done per call
    # N=2, C=3, H=W=32 -> spatial path 32 -> 16 -> 8 -> 4 -> 2 -> 1
    x = jax.random.uniform(xkey, (2, 3, 32, 32), dtype=jnp.float32)

    fwd = jax.jit(convo_classifier_forward)
    logits = fwd(packed, x)
    jax.block_until_ready(logits)
    assert logits.shape == (2, 3) and logits.dtype == jnp.float32
    print("KERNEL_OK")
</pallas_src>

<mosaic_0001>
module attributes {stable_mosaic.version = 11 : i64} {
  func.func @_mm_bias_kernel(%arg0: i32, %arg1: memref<128x147xbf16, #tpu.memory_space<vmem>>, %arg2: memref<147x32xbf16, #tpu.memory_space<vmem>>, %arg3: memref<1x32xf32, #tpu.memory_space<vmem>>, %arg4: memref<128x32xbf16, #tpu.memory_space<vmem>>) attributes {dimension_semantics = [#tpu.dimension_semantics<parallel>], iteration_bounds = array<i64: 4>, scalar_prefetch = 0 : i64, scratch_operands = 0 : i64, tpu.core_type = #tpu.core_type<tc>, window_params = [{transform_indices = @transform_0, window_bounds = array<i64: 128, 147>}, {pipeline_mode = #tpu.pipeline_mode<synchronous>, transform_indices = @transform_1, window_bounds = array<i64: 147, 32>}, {pipeline_mode = #tpu.pipeline_mode<synchronous>, transform_indices = @transform_2, window_bounds = array<i64: 1, 32>}, {transform_indices = @transform_3, window_bounds = array<i64: 128, 32>}]} {
    %c0 = arith.constant 0 : index
    %c0_0 = arith.constant 0 : index
    %0 = vector.load %arg1[%c0, %c0_0] : memref<128x147xbf16, #tpu.memory_space<vmem>>, vector<128x147xbf16>
    %c0_1 = arith.constant 0 : index
    %c0_2 = arith.constant 0 : index
    %1 = vector.load %arg2[%c0_1, %c0_2] : memref<147x32xbf16, #tpu.memory_space<vmem>>, vector<147x32xbf16>
    %cst = arith.constant dense<0.000000e+00> : vector<128x32xf32>
    %2 = tpu.matmul %0, %1, %cst {dimension_numbers = #tpu.dot_dimension_numbers<[1], [0], [0], [1], [0, 0, 1, 1], [], []>} : vector<128x147xbf16>, vector<147x32xbf16>, vector<128x32xf32> -> vector<128x32xf32>
    %c0_3 = arith.constant 0 : index
    %c0_4 = arith.constant 0 : index
    %3 = vector.load %arg3[%c0_3, %c0_4] : memref<1x32xf32, #tpu.memory_space<vmem>>, vector<1x32xf32>
    %4 = vector.broadcast %3 : vector<1x32xf32> to vector<128x32xf32>
    %5 = arith.addf %2, %4 : vector<128x32xf32>
    %cst_5 = arith.constant 0.000000e+00 : f32
    %6 = vector.broadcast %cst_5 : f32 to vector<128x32xf32>
    %7 = arith.maximumf %5, %6 : vector<128x32xf32>
    %8 = arith.truncf %7 : vector<128x32xf32> to vector<128x32xbf16>
    %c0_6 = arith.constant 0 : index
    %c0_7 = arith.constant 0 : index
    %9 = vector.load %arg4[%c0_6, %c0_7] : memref<128x32xbf16, #tpu.memory_space<vmem>>, vector<128x32xbf16>
    tpu.vector_store %arg4[%c0_6, %c0_7], %8 {strides = array<i32>} : memref<128x32xbf16, #tpu.memory_space<vmem>>, vector<128x32xbf16>,
    return
  }
  func.func @transform_0(%arg0: i32) -> (i32, i32) {
    %c0_i32 = arith.constant 0 : i32
    %c0_i32_0 = arith.constant 0 : i32
    return %arg0, %c0_i32 : i32, i32
  }
  func.func @transform_1(%arg0: i32) -> (i32, i32) {
    %c0_i32 = arith.constant 0 : i32
    %c0_i32_0 = arith.constant 0 : i32
    %c0_i32_1 = arith.constant 0 : i32
    return %c0_i32, %c0_i32_0 : i32, i32
  }
  func.func @transform_2(%arg0: i32) -> (i32, i32) {
    %c0_i32 = arith.constant 0 : i32
    %c0_i32_0 = arith.constant 0 : i32
    %c0_i32_1 = arith.constant 0 : i32
    return %c0_i32, %c0_i32_0 : i32, i32
  }
  func.func @transform_3(%arg0: i32) -> (i32, i32) {
    %c0_i32 = arith.constant 0 : i32
    %c0_i32_0 = arith.constant 0 : i32
    return %arg0, %c0_i32 : i32, i32
  }
}

module attributes {stable_mosaic.version = 11 : i64} {
  func.func @_maxpool_kernel(%arg0: i32, %arg1: memref<1x168x32xbf16, #tpu.memory_space<vmem>>, %arg2: memref<1x168x32xbf16, #tpu.memory_space<vmem>>, %arg3: memref<1x144x32xbf16, #tpu.memory_space<vmem>>) attributes {dimension_semantics = [#tpu.dimension_semantics<parallel>], iteration_bounds = array<i64: 2>, scalar_prefetch = 0 : i64, scratch_operands = 0 : i64, tpu.core_type = #tpu.core_type<tc>, window_params = [{transform_indices = @transform_0, window_bounds = array<i64: 1, 168, 32>}, {transform_indices = @transform_1, window_bounds = array<i64: 1, 168, 32>}, {transform_indices = @transform_2, window_bounds = array<i64: 1, 144, 32>}]} {
    %c0 = arith.constant 0 : index
    %c0_0 = arith.constant 0 : index
    %c0_1 = arith.constant 0 : index
    %0 = vector.load %arg1[%c0, %c0_0, %c0_1] : memref<1x168x32xbf16, #tpu.memory_space<vmem>>, vector<1x144x32xbf16>
    %1 = vector.shape_cast %0 : vector<1x144x32xbf16> to vector<144x32xbf16>
    %c0_2 = arith.constant 0 : index
    %c0_3 = arith.constant 0 : index
    %c0_4 = arith.constant 0 : index
    %2 = vector.load %arg2[%c0_2, %c0_3, %c0_4] : memref<1x168x32xbf16, #tpu.memory_space<vmem>>, vector<1x144x32xbf16>
    %3 = vector.shape_cast %2 : vector<1x144x32xbf16> to vector<144x32xbf16>
    %4 = arith.maximumf %1, %3 : vector<144x32xbf16>
    %c0_5 = arith.constant 0 : index
    %c1 = arith.constant 1 : index
    %c0_6 = arith.constant 0 : index
    %5 = vector.load %arg1[%c0_5, %c1, %c0_6] : memref<1x168x32xbf16, #tpu.memory_space<vmem>>, vector<1x144x32xbf16>
    %6 = vector.shape_cast %5 : vector<1x144x32xbf16> to vector<144x32xbf16>
    %7 = arith.maximumf %4, %6 : vector<144x32xbf16>
    %c0_7 = arith.constant 0 : index
    %c9 = arith.constant 9 : index
    %c0_8 = arith.constant 0 : index
    %8 = vector.load %arg1[%c0_7, %c9, %c0_8] : memref<1x168x32xbf16, #tpu.memory_space<vmem>>, vector<1x144x32xbf16>
    %9 = vector.shape_cast %8 : vector<1x144x32xbf16> to vector<144x32xbf16>
    %10 = arith.maximumf %7, %9 : vector<144x32xbf16>
    %c0_9 = arith.constant 0 : index
    %c9_10 = arith.constant 9 : index
    %c0_11 = arith.constant 0 : index
    %11 = vector.load %arg2[%c0_9, %c9_10, %c0_11] : memref<1x168x32xbf16, #tpu.memory_space<vmem>>, vector<1x144x32xbf16>
    %12 = vector.shape_cast %11 : vector<1x144x32xbf16> to vector<144x32xbf16>
    %13 = arith.maximumf %10, %12 : vector<144x32xbf16>
    %c0_12 = arith.constant 0 : index
    %c10 = arith.constant 10 : index
    %c0_13 = arith.constant 0 : index
    %14 = vector.load %arg1[%c0_12, %c10, %c0_13] : memref<1x168x32xbf16, #tpu.memory_space<vmem>>, vector<1x144x32xbf16>
    %15 = vector.shape_cast %14 : vector<1x144x32xbf16> to vector<144x32xbf16>
    %16 = arith.maximumf %13, %15 : vector<144x32xbf16>
    %c0_14 = arith.constant 0 : index
    %c18 = arith.constant 18 : index
    %c0_15 = arith.constant 0 : index
    %17 = vector.load %arg1[%c0_14, %c18, %c0_15] : memref<1x168x32xbf16, #tpu.memory_space<vmem>>, vector<1x144x32xbf16>
    %18 = vector.shape_cast %17 : vector<1x144x32xbf16> to vector<144x32xbf16>
    %19 = arith.maximumf %16, %18 : vector<144x32xbf16>
    %c0_16 = arith.constant 0 : index
    %c18_17 = arith.constant 18 : index
    %c0_18 = arith.constant 0 : index
    %20 = vector.load %arg2[%c0_16, %c18_17, %c0_18] : memref<1x168x32xbf16, #tpu.memory_space<vmem>>, vector<1x144x32xbf16>
    %21 = vector.shape_cast %20 : vector<1x144x32xbf16> to vector<144x32xbf16>
    %22 = arith.maximumf %19, %21 : vector<144x32xbf16>
    %c0_19 = arith.constant 0 : index
    %c19 = arith.constant 19 : index
    %c0_20 = arith.constant 0 : index
    %23 = vector.load %arg1[%c0_19, %c19, %c0_20] : memref<1x168x32xbf16, #tpu.memory_space<vmem>>, vector<1x144x32xbf16>
    %24 = vector.shape_cast %23 : vector<1x144x32xbf16> to vector<144x32xbf16>
    %25 = arith.maximumf %22, %24 : vector<144x32xbf16>
    %c0_21 = arith.constant 0 : index
    %c0_22 = arith.constant 0 : index
    %c0_23 = arith.constant 0 : index
    %26 = vector.load %arg3[%c0_21, %c0_22, %c0_23] : memref<1x144x32xbf16, #tpu.memory_space<vmem>>, vector<1x144x32xbf16>
    %27 = vector.shape_cast %26 : vector<1x144x32xbf16> to vector<144x32xbf16>
    %28 = vector.shape_cast %25 : vector<144x32xbf16> to vector<1x144x32xbf16>
    tpu.vector_store %arg3[%c0_21, %c0_22, %c0_23], %28 {strides = array<i32>} : memref<1x144x32xbf16, #tpu.memory_space<vmem>>, vector<1x144x32xbf16>,
    return
  }
  func.func @transform_0(%arg0: i32) -> (i32, i32, i32) {
    %c0_i32 = arith.constant 0 : i32
    %c0_i32_0 = arith.constant 0 : i32
    %c0_i32_1 = arith.constant 0 : i32
    return %arg0, %c0_i32, %c0_i32_0 : i32, i32, i32
  }
  func.func @transform_1(%arg0: i32) -> (i32, i32, i32) {
    %c0_i32 = arith.constant 0 : i32
    %c0_i32_0 = arith.constant 0 : i32
    %c0_i32_1 = arith.constant 0 : i32
    return %arg0, %c0_i32, %c0_i32_0 : i32, i32, i32
  }
  func.func @transform_2(%arg0: i32) -> (i32, i32, i32) {
    %c0_i32 = arith.constant 0 : i32
    %c0_i32_0 = arith.constant 0 : i32
    %c0_i32_1 = arith.constant 0 : i32
    return %arg0, %c0_i32, %c0_i32_0 : i32, i32, i32
  }
}

module attributes {stable_mosaic.version = 11 : i64} {
  func.func @_mm_bias_kernel(%arg0: i32, %arg1: memref<32x288xbf16, #tpu.memory_space<vmem>>, %arg2: memref<288x32xbf16, #tpu.memory_space<vmem>>, %arg3: memref<1x32xf32, #tpu.memory_space<vmem>>, %arg4: memref<32x32xbf16, #tpu.memory_space<vmem>>) attributes {dimension_semantics = [#tpu.dimension_semantics<parallel>], iteration_bounds = array<i64: 1>, scalar_prefetch = 0 : i64, scratch_operands = 0 : i64, tpu.core_type = #tpu.core_type<tc>, window_params = [{transform_indices = @transform_0, window_bounds = array<i64: 32, 288>}, {pipeline_mode = #tpu.pipeline_mode<synchronous>, transform_indices = @transform_1, window_bounds = array<i64: 288, 32>}, {pipeline_mode = #tpu.pipeline_mode<synchronous>, transform_indices = @transform_2, window_bounds = array<i64: 1, 32>}, {transform_indices = @transform_3, window_bounds = array<i64: 32, 32>}]} {
    %c0 = arith.constant 0 : index
    %c0_0 = arith.constant 0 : index
    %0 = vector.load %arg1[%c0, %c0_0] : memref<32x288xbf16, #tpu.memory_space<vmem>>, vector<32x288xbf16>
    %c0_1 = arith.constant 0 : index
    %c0_2 = arith.constant 0 : index
    %1 = vector.load %arg2[%c0_1, %c0_2] : memref<288x32xbf16, #tpu.memory_space<vmem>>, vector<288x32xbf16>
    %cst = arith.constant dense<0.000000e+00> : vector<32x32xf32>
    %2 = tpu.matmul %0, %1, %cst {dimension_numbers = #tpu.dot_dimension_numbers<[1], [0], [0], [1], [0, 0, 1, 1], [], []>} : vector<32x288xbf16>, vector<288x32xbf16>, vector<32x32xf32> -> vector<32x32xf32>
    %c0_3 = arith.constant 0 : index
    %c0_4 = arith.constant 0 : index
    %3 = vector.load %arg3[%c0_3, %c0_4] : memref<1x32xf32, #tpu.memory_space<vmem>>, vector<1x32xf32>
    %4 = vector.broadcast %3 : vector<1x32xf32> to vector<32x32xf32>
    %5 = arith.addf %2, %4 : vector<32x32xf32>
    %cst_5 = arith.constant 0.000000e+00 : f32
    %6 = vector.broadcast %cst_5 : f32 to vector<32x32xf32>
    %7 = arith.maximumf %5, %6 : vector<32x32xf32>
    %8 = arith.truncf %7 : vector<32x32xf32> to vector<32x32xbf16>
    %c0_6 = arith.constant 0 : index
    %c0_7 = arith.constant 0 : index
    %9 = vector.load %arg4[%c0_6, %c0_7] : memref<32x32xbf16, #tpu.memory_space<vmem>>, vector<32x32xbf16>
    tpu.vector_store %arg4[%c0_6, %c0_7], %8 {strides = array<i32>} : memref<32x32xbf16, #tpu.memory_space<vmem>>, vector<32x32xbf16>,
    return
  }
  func.func @transform_0(%arg0: i32) -> (i32, i32) {
    %c0_i32 = arith.constant 0 : i32
    %c0_i32_0 = arith.constant 0 : i32
    return %arg0, %c0_i32 : i32, i32
  }
  func.func @transform_1(%arg0: i32) -> (i32, i32) {
    %c0_i32 = arith.constant 0 : i32
    %c0_i32_0 = arith.constant 0 : i32
    %c0_i32_1 = arith.constant 0 : i32
    return %c0_i32, %c0_i32_0 : i32, i32
  }
  func.func @transform_2(%arg0: i32) -> (i32, i32) {
    %c0_i32 = arith.constant 0 : i32
    %c0_i32_0 = arith.constant 0 : i32
    %c0_i32_1 = arith.constant 0 : i32
    return %c0_i32, %c0_i32_0 : i32, i32
  }
  func.func @transform_3(%arg0: i32) -> (i32, i32) {
    %c0_i32 = arith.constant 0 : i32
    %c0_i32_0 = arith.constant 0 : i32
    return %arg0, %c0_i32 : i32, i32
  }
}

module attributes {stable_mosaic.version = 11 : i64} {
  func.func @_conv3x3_s1_kernel(%arg0: i32, %arg1: memref<1x40x32xbf16, #tpu.memory_space<vmem>>, %arg2: memref<9x32x32xbf16, #tpu.memory_space<vmem>>, %arg3: memref<1x32xf32, #tpu.memory_space<vmem>>, %arg4: memref<1x32xf32, #tpu.memory_space<vmem>>, %arg5: memref<1x24x32xbf16, #tpu.memory_space<vmem>>) attributes {dimension_semantics = [#tpu.dimension_semantics<parallel>], iteration_bounds = array<i64: 2>, scalar_prefetch = 0 : i64, scratch_operands = 0 : i64, tpu.core_type = #tpu.core_type<tc>, window_params = [{transform_indices = @transform_0, window_bounds = array<i64: 1, 40, 32>}, {pipeline_mode = #tpu.pipeline_mode<synchronous>, transform_indices = @transform_1, window_bounds = array<i64: 9, 32, 32>}, {pipeline_mode = #tpu.pipeline_mode<synchronous>, transform_indices = @transform_2, window_bounds = array<i64: 1, 32>}, {pipeline_mode = #tpu.pipeline_mode<synchronous>, transform_indices = @transform_3, window_bounds = array<i64: 1, 32>}, {transform_indices = @transform_4, window_bounds = array<i64: 1, 24, 32>}]} {
    %cst = arith.constant 0.000000e+00 : f32
    %0 = vector.broadcast %cst : f32 to vector<24x32xf32>
    %c0 = arith.constant 0 : index
    %c0_0 = arith.constant 0 : index
    %c0_1 = arith.constant 0 : index
    %1 = vector.load %arg1[%c0, %c0_0, %c0_1] : memref<1x40x32xbf16, #tpu.memory_space<vmem>>, vector<1x24x32xbf16>
    %2 = vector.shape_cast %1 : vector<1x24x32xbf16> to vector<24x32xbf16>
    %c0_2 = arith.constant 0 : index
    %c0_3 = arith.constant 0 : index
    %c0_4 = arith.constant 0 : index
    %3 = vector.load %arg2[%c0_2, %c0_3, %c0_4] : memref<9x32x32xbf16, #tpu.memory_space<vmem>>, vector<1x32x32xbf16>
    %4 = vector.shape_cast %3 : vector<1x32x32xbf16> to vector<32x32xbf16>
    %cst_5 = arith.constant dense<0.000000e+00> : vector<24x32xf32>
    %5 = tpu.matmul %2, %4, %cst_5 {dimension_numbers = #tpu.dot_dimension_numbers<[1], [0], [0], [1], [0, 0, 1, 1], [], []>} : vector<24x32xbf16>, vector<32x32xbf16>, vector<24x32xf32> -> vector<24x32xf32>
    %6 = arith.addf %0, %5 : vector<24x32xf32>
    %c0_6 = arith.constant 0 : index
    %c1 = arith.constant 1 : index
    %c0_7 = arith.constant 0 : index
    %7 = vector.load %arg1[%c0_6, %c1, %c0_7] : memref<1x40x32xbf16, #tpu.memory_space<vmem>>, vector<1x24x32xbf16>
    %8 = vector.shape_cast %7 : vector<1x24x32xbf16> to vector<24x32xbf16>
    %c1_8 = arith.constant 1 : index
    %c0_9 = arith.constant 0 : index
    %c0_10 = arith.constant 0 : index
    %9 = vector.load %arg2[%c1_8, %c0_9, %c0_10] : memref<9x32x32xbf16, #tpu.memory_space<vmem>>, vector<1x32x32xbf16>
    %10 = vector.shape_cast %9 : vector<1x32x32xbf16> to vector<32x32xbf16>
    %cst_11 = arith.constant dense<0.000000e+00> : vector<24x32xf32>
    %11 = tpu.matmul %8, %10, %cst_11 {dimension_numbers = #tpu.dot_dimension_numbers<[1], [0], [0], [1], [0, 0, 1, 1], [], []>} : vector<24x32xbf16>, vector<32x32xbf16>, vector<24x32xf32> -> vector<24x32xf32>
    %12 = arith.addf %6, %11 : vector<24x32xf32>
    %c0_12 = arith.constant 0 : index
    %c2 = arith.constant 2 : index
    %c0_13 = arith.constant 0 : index
    %13 = vector.load %arg1[%c0_12, %c2, %c0_13] : memref<1x40x32xbf16, #tpu.memory_space<vmem>>, vector<1x24x32xbf16>
    %14 = vector.shape_cast %13 : vector<1x24x32xbf16> to vector<24x32xbf16>
    %c2_14 = arith.constant 2 : index
    %c0_15 = arith.constant 0 : index
    %c0_16 = arith.constant 0 : index
    %15 = vector.load %arg2[%c2_14, %c0_15, %c0_16] : memref<9x32x32xbf16, #tpu.memory_space<vmem>>, vector<1x32x32xbf16>
    %16 = vector.shape_cast %15 : vector<1x32x32xbf16> to vector<32x32xbf16>
    %cst_17 = arith.constant dense<0.000000e+00> : vector<24x32xf32>
    %17 = tpu.matmul %14, %16, %cst_17 {dimension_numbers = #tpu.dot_dimension_numbers<[1], [0], [0], [1], [0, 0, 1, 1], [], []>} : vector<24x32xbf16>, vector<32x32xbf16>, vector<24x32xf32> -> vector<24x32xf32>
    %18 = arith.addf %12, %17 : vector<24x32xf32>
    %c0_18 = arith.constant 0 : index
    %c6 = arith.constant 6 : index
    %c0_19 = arith.constant 0 : index
    %19 = vector.load %arg1[%c0_18, %c6, %c0_19] : memref<1x40x32xbf16, #tpu.memory_space<vmem>>, vector<1x24x32xbf16>
    %20 = vector.shape_cast %19 : vector<1x24x32xbf16> to vector<24x32xbf16>
    %c3 = arith.constant 3 : index
    %c0_20 = arith.constant 0 : index
    %c0_21 = arith.constant 0 : index
    %21 = vector.load %arg2[%c3, %c0_20, %c0_21] : memref<9x32x32xbf16, #tpu.memory_space<vmem>>, vector<1x32x32xbf16>
    %22 = vector.shape_cast %21 : vector<1x32x32xbf16> to vector<32x32xbf16>
    %cst_22 = arith.constant dense<0.000000e+00> : vector<24x32xf32>
    %23 = tpu.matmul %20, %22, %cst_22 {dimension_numbers = #tpu.dot_dimension_numbers<[1], [0], [0], [1], [0, 0, 1, 1], [], []>} : vector<24x32xbf16>, vector<32x32xbf16>, vector<24x32xf32> -> vector<24x32xf32>
    %24 = arith.addf %18, %23 : vector<24x32xf32>
    %c0_23 = arith.constant 0 : index
    %c7 = arith.constant 7 : index
    %c0_24 = arith.constant 0 : index
    %25 = vector.load %arg1[%c0_23, %c7, %c0_24] : memref<1x40x32xbf16, #tpu.memory_space<vmem>>, vector<1x24x32xbf16>
    %26 = vector.shape_cast %25 : vector<1x24x32xbf16> to vector<24x32xbf16>
    %c4 = arith.constant 4 : index
    %c0_25 = arith.constant 0 : index
    %c0_26 = arith.constant 0 : index
    %27 = vector.load %arg2[%c4, %c0_25, %c0_26] : memref<9x32x32xbf16, #tpu.memory_space<vmem>>, vector<1x32x32xbf16>
    %28 = vector.shape_cast %27 : vector<1x32x32xbf16> to vector<32x32xbf16>
    %cst_27 = arith.constant dense<0.000000e+00> : vector<24x32xf32>
    %29 = tpu.matmul %26, %28, %cst_27 {dimension_numbers = #tpu.dot_dimension_numbers<[1], [0], [0], [1], [0, 0, 1, 1], [], []>} : vector<24x32xbf16>, vector<32x32xbf16>, vector<24x32xf32> -> vector<24x32xf32>
    %30 = arith.addf %24, %29 : vector<24x32xf32>
    %c0_28 = arith.constant 0 : index
    %c8 = arith.constant 8 : index
    %c0_29 = arith.constant 0 : index
    %31 = vector.load %arg1[%c0_28, %c8, %c0_29] : memref<1x40x32xbf16, #tpu.memory_space<vmem>>, vector<1x24x32xbf16>
    %32 = vector.shape_cast %31 : vector<1x24x32xbf16> to vector<24x32xbf16>
    %c5 = arith.constant 5 : index
    %c0_30 = arith.constant 0 : index
    %c0_31 = arith.constant 0 : index
    %33 = vector.load %arg2[%c5, %c0_30, %c0_31] : memref<9x32x32xbf16, #tpu.memory_space<vmem>>, vector<1x32x32xbf16>
    %34 = vector.shape_cast %33 : vector<1x32x32xbf16> to vector<32x32xbf16>
    %cst_32 = arith.constant dense<0.000000e+00> : vector<24x32xf32>
    %35 = tpu.matmul %32, %34, %cst_32 {dimension_numbers = #tpu.dot_dimension_numbers<[1], [0], [0], [1], [0, 0, 1, 1], [], []>} : vector<24x32xbf16>, vector<32x32xbf16>, vector<24x32xf32> -> vector<24x32xf32>
    %36 = arith.addf %30, %35 : vector<24x32xf32>
    %c0_33 = arith.constant 0 : index
    %c12 = arith.constant 12 : index
    %c0_34 = arith.constant 0 : index
    %37 = vector.load %arg1[%c0_33, %c12, %c0_34] : memref<1x40x32xbf16, #tpu.memory_space<vmem>>, vector<1x24x32xbf16>
    %38 = vector.shape_cast %37 : vector<1x24x32xbf16> to vector<24x32xbf16>
    %c6_35 = arith.constant 6 : index
    %c0_36 = arith.constant 0 : index
    %c0_37 = arith.constant 0 : index
    %39 = vector.load %arg2[%c6_35, %c0_36, %c0_37] : memref<9x32x32xbf16, #tpu.memory_space<vmem>>, vector<1x32x32xbf16>
    %40 = vector.shape_cast %39 : vector<1x32x32xbf16> to vector<32x32xbf16>
    %cst_38 = arith.constant dense<0.000000e+00> : vector<24x32xf32>
    %41 = tpu.matmul %38, %40, %cst_38 {dimension_numbers = #tpu.dot_dimension_numbers<[1], [0], [0], [1], [0, 0, 1, 1], [], []>} : vector<24x32xbf16>, vector<32x32xbf16>, vector<24x32xf32> -> vector<24x32xf32>
    %42 = arith.addf %36, %41 : vector<24x32xf32>
    %c0_39 = arith.constant 0 : index
    %c13 = arith.constant 13 : index
    %c0_40 = arith.constant 0 : index
    %43 = vector.load %arg1[%c0_39, %c13, %c0_40] : memref<1x40x32xbf16, #tpu.memory_space<vmem>>, vector<1x24x32xbf16>
    %44 = vector.shape_cast %43 : vector<1x24x32xbf16> to vector<24x32xbf16>
    %c7_41 = arith.constant 7 : index
    %c0_42 = arith.constant 0 : index
    %c0_43 = arith.constant 0 : index
    %45 = vector.load %arg2[%c7_41, %c0_42, %c0_43] : memref<9x32x32xbf16, #tpu.memory_space<vmem>>, vector<1x32x32xbf16>
    %46 = vector.shape_cast %45 : vector<1x32x32xbf16> to vector<32x32xbf16>
    %cst_44 = arith.constant dense<0.000000e+00> : vector<24x32xf32>
    %47 = tpu.matmul %44, %46, %cst_44 {dimension_numbers = #tpu.dot_dimension_numbers<[1], [0], [0], [1], [0, 0, 1, 1], [], []>} : vector<24x32xbf16>, vector<32x32xbf16>, vector<24x32xf32> -> vector<24x32xf32>
    %48 = arith.addf %42, %47 : vector<24x32xf32>
    %c0_45 = arith.constant 0 : index
    %c14 = arith.constant 14 : index
    %c0_46 = arith.constant 0 : index
    %49 = vector.load %arg1[%c0_45, %c14, %c0_46] : memref<1x40x32xbf16, #tpu.memory_space<vmem>>, vector<1x24x32xbf16>
    %50 = vector.shape_cast %49 : vector<1x24x32xbf16> to vector<24x32xbf16>
    %c8_47 = arith.constant 8 : index
    %c0_48 = arith.constant 0 : index
    %c0_49 = arith.constant 0 : index
    %51 = vector.load %arg2[%c8_47, %c0_48, %c0_49] : memref<9x32x32xbf16, #tpu.memory_space<vmem>>, vector<1x32x32xbf16>
    %52 = vector.shape_cast %51 : vector<1x32x32xbf16> to vector<32x32xbf16>
    %cst_50 = arith.constant dense<0.000000e+00> : vector<24x32xf32>
    %53 = tpu.matmul %50, %52, %cst_50 {dimension_numbers = #tpu.dot_dimension_numbers<[1], [0], [0], [1], [0, 0, 1, 1], [], []>} : vector<24x32xbf16>, vector<32x32xbf16>, vector<24x32xf32> -> vector<24x32xf32>
    %54 = arith.addf %48, %53 : vector<24x32xf32>
    %c0_51 = arith.constant 0 : index
    %c0_52 = arith.constant 0 : index
    %55 = vector.load %arg3[%c0_51, %c0_52] : memref<1x32xf32, #tpu.memory_space<vmem>>, vector<1x32xf32>
    %56 = vector.broadcast %55 : vector<1x32xf32> to vector<24x32xf32>
    %57 = arith.mulf %54, %56 : vector<24x32xf32>
    %c0_53 = arith.constant 0 : index
    %c0_54 = arith.constant 0 : index
    %58 = vector.load %arg4[%c0_53, %c0_54] : memref<1x32xf32, #tpu.memory_space<vmem>>, vector<1x32xf32>
    %59 = vector.broadcast %58 : vector<1x32xf32> to vector<24x32xf32>
    %60 = arith.addf %57, %59 : vector<24x32xf32>
    %cst_55 = arith.constant 0.000000e+00 : f32
    %61 = vector.broadcast %cst_55 : f32 to vector<24x32xf32>
    %62 = arith.maximumf %60, %61 : vector<24x32xf32>
    %63 = arith.truncf %62 : vector<24x32xf32> to vector<24x32xbf16>
    %c0_56 = arith.constant 0 : index
    %c0_57 = arith.constant 0 : index
    %c0_58 = arith.constant 0 : index
    %64 = vector.load %arg5[%c0_56, %c0_57, %c0_58] : memref<1x24x32xbf16, #tpu.memory_space<vmem>>, vector<1x24x32xbf16>
    %65 = vector.shape_cast %64 : vector<1x24x32xbf16> to vector<24x32xbf16>
    %66 = vector.shape_cast %63 : vector<24x32xbf16> to vector<1x24x32xbf16>
    tpu.vector_store %arg5[%c0_56, %c0_57, %c0_58], %66 {strides = array<i32>} : memref<1x24x32xbf16, #tpu.memory_space<vmem>>, vector<1x24x32xbf16>,
    return
  }
  func.func @transform_0(%arg0: i32) -> (i32, i32, i32) {
    %c0_i32 = arith.constant 0 : i32
    %c0_i32_0 = arith.constant 0 : i32
    %c0_i32_1 = arith.constant 0 : i32
    return %arg0, %c0_i32, %c0_i32_0 : i32, i32, i32
  }
  func.func @transform_1(%arg0: i32) -> (i32, i32, i32) {
    %c0_i32 = arith.constant 0 : i32
    %c0_i32_0 = arith.constant 0 : i32
    %c0_i32_1 = arith.constant 0 : i32
    %c0_i32_2 = arith.constant 0 : i32
    return %c0_i32, %c0_i32_0, %c0_i32_1 : i32, i32, i32
  }
  func.func @transform_2(%arg0: i32) -> (i32, i32) {
    %c0_i32 = arith.constant 0 : i32
    %c0_i32_0 = arith.constant 0 : i32
    %c0_i32_1 = arith.constant 0 : i32
    return %c0_i32, %c0_i32_0 : i32, i32
  }
  func.func @transform_3(%arg0: i32) -> (i32, i32) {
    %c0_i32 = arith.constant 0 : i32
    %c0_i32_0 = arith.constant 0 : i32
    %c0_i32_1 = arith.constant 0 : i32
    return %c0_i32, %c0_i32_0 : i32, i32
  }
  func.func @transform_4(%arg0: i32) -> (i32, i32, i32) {
    %c0_i32 = arith.constant 0 : i32
    %c0_i32_0 = arith.constant 0 : i32
    %c0_i32_1 = arith.constant 0 : i32
    return %arg0, %c0_i32, %c0_i32_0 : i32, i32, i32
  }
}

module attributes {stable_mosaic.version = 11 : i64} {
  func.func @_mm_bias_kernel(%arg0: i32, %arg1: memref<16x288xbf16, #tpu.memory_space<vmem>>, %arg2: memref<288x64xbf16, #tpu.memory_space<vmem>>, %arg3: memref<1x64xf32, #tpu.memory_space<vmem>>, %arg4: memref<16x64xbf16, #tpu.memory_space<vmem>>) attributes {dimension_semantics = [#tpu.dimension_semantics<parallel>], iteration_bounds = array<i64: 1>, scalar_prefetch = 0 : i64, scratch_operands = 0 : i64, tpu.core_type = #tpu.core_type<tc>, window_params = [{transform_indices = @transform_0, window_bounds = array<i64: 16, 288>}, {pipeline_mode = #tpu.pipeline_mode<synchronous>, transform_indices = @transform_1, window_bounds = array<i64: 288, 64>}, {pipeline_mode = #tpu.pipeline_mode<synchronous>, transform_indices = @transform_2, window_bounds = array<i64: 1, 64>}, {transform_indices = @transform_3, window_bounds = array<i64: 16, 64>}]} {
    %c0 = arith.constant 0 : index
    %c0_0 = arith.constant 0 : index
    %0 = vector.load %arg1[%c0, %c0_0] : memref<16x288xbf16, #tpu.memory_space<vmem>>, vector<16x288xbf16>
    %c0_1 = arith.constant 0 : index
    %c0_2 = arith.constant 0 : index
    %1 = vector.load %arg2[%c0_1, %c0_2] : memref<288x64xbf16, #tpu.memory_space<vmem>>, vector<288x64xbf16>
    %cst = arith.constant dense<0.000000e+00> : vector<16x64xf32>
    %2 = tpu.matmul %0, %1, %cst {dimension_numbers = #tpu.dot_dimension_numbers<[1], [0], [0], [1], [0, 0, 1, 1], [], []>} : vector<16x288xbf16>, vector<288x64xbf16>, vector<16x64xf32> -> vector<16x64xf32>
    %c0_3 = arith.constant 0 : index
    %c0_4 = arith.constant 0 : index
    %3 = vector.load %arg3[%c0_3, %c0_4] : memref<1x64xf32, #tpu.memory_space<vmem>>, vector<1x64xf32>
    %4 = vector.broadcast %3 : vector<1x64xf32> to vector<16x64xf32>
    %5 = arith.addf %2, %4 : vector<16x64xf32>
    %cst_5 = arith.constant 0.000000e+00 : f32
    %6 = vector.broadcast %cst_5 : f32 to vector<16x64xf32>
    %7 = arith.maximumf %5, %6 : vector<16x64xf32>
    %8 = arith.truncf %7 : vector<16x64xf32> to vector<16x64xbf16>
    %c0_6 = arith.constant 0 : index
    %c0_7 = arith.constant 0 : index
    %9 = vector.load %arg4[%c0_6, %c0_7] : memref<16x64xbf16, #tpu.memory_space<vmem>>, vector<16x64xbf16>
    tpu.vector_store %arg4[%c0_6, %c0_7], %8 {strides = array<i32>} : memref<16x64xbf16, #tpu.memory_space<vmem>>, vector<16x64xbf16>,
    return
  }
  func.func @transform_0(%arg0: i32) -> (i32, i32) {
    %c0_i32 = arith.constant 0 : i32
    %c0_i32_0 = arith.constant 0 : i32
    return %arg0, %c0_i32 : i32, i32
  }
  func.func @transform_1(%arg0: i32) -> (i32, i32) {
    %c0_i32 = arith.constant 0 : i32
    %c0_i32_0 = arith.constant 0 : i32
    %c0_i32_1 = arith.constant 0 : i32
    return %c0_i32, %c0_i32_0 : i32, i32
  }
  func.func @transform_2(%arg0: i32) -> (i32, i32) {
    %c0_i32 = arith.constant 0 : i32
    %c0_i32_0 = arith.constant 0 : i32
    %c0_i32_1 = arith.constant 0 : i32
    return %c0_i32, %c0_i32_0 : i32, i32
  }
  func.func @transform_3(%arg0: i32) -> (i32, i32) {
    %c0_i32 = arith.constant 0 : i32
    %c0_i32_0 = arith.constant 0 : i32
    return %arg0, %c0_i32 : i32, i32
  }
}

module attributes {stable_mosaic.version = 11 : i64} {
  func.func @_conv3x3_s1_kernel(%arg0: i32, %arg1: memref<1x24x64xbf16, #tpu.memory_space<vmem>>, %arg2: memref<9x64x64xbf16, #tpu.memory_space<vmem>>, %arg3: memref<1x64xf32, #tpu.memory_space<vmem>>, %arg4: memref<1x64xf32, #tpu.memory_space<vmem>>, %arg5: memref<1x8x64xbf16, #tpu.memory_space<vmem>>) attributes {dimension_semantics = [#tpu.dimension_semantics<parallel>], iteration_bounds = array<i64: 2>, scalar_prefetch = 0 : i64, scratch_operands = 0 : i64, tpu.core_type = #tpu.core_type<tc>, window_params = [{transform_indices = @transform_0, window_bounds = array<i64: 1, 24, 64>}, {pipeline_mode = #tpu.pipeline_mode<synchronous>, transform_indices = @transform_1, window_bounds = array<i64: 9, 64, 64>}, {pipeline_mode = #tpu.pipeline_mode<synchronous>, transform_indices = @transform_2, window_bounds = array<i64: 1, 64>}, {pipeline_mode = #tpu.pipeline_mode<synchronous>, transform_indices = @transform_3, window_bounds = array<i64: 1, 64>}, {transform_indices = @transform_4, window_bounds = array<i64: 1, 8, 64>}]} {
    %cst = arith.constant 0.000000e+00 : f32
    %0 = vector.broadcast %cst : f32 to vector<8x64xf32>
    %c0 = arith.constant 0 : index
    %c0_0 = arith.constant 0 : index
    %c0_1 = arith.constant 0 : index
    %1 = vector.load %arg1[%c0, %c0_0, %c0_1] : memref<1x24x64xbf16, #tpu.memory_space<vmem>>, vector<1x8x64xbf16>
    %2 = vector.shape_cast %1 : vector<1x8x64xbf16> to vector<8x64xbf16>
    %c0_2 = arith.constant 0 : index
    %c0_3 = arith.constant 0 : index
    %c0_4 = arith.constant 0 : index
    %3 = vector.load %arg2[%c0_2, %c0_3, %c0_4] : memref<9x64x64xbf16, #tpu.memory_space<vmem>>, vector<1x64x64xbf16>
    %4 = vector.shape_cast %3 : vector<1x64x64xbf16> to vector<64x64xbf16>
    %cst_5 = arith.constant dense<0.000000e+00> : vector<8x64xf32>
    %5 = tpu.matmul %2, %4, %cst_5 {dimension_numbers = #tpu.dot_dimension_numbers<[1], [0], [0], [1], [0, 0, 1, 1], [], []>} : vector<8x64xbf16>, vector<64x64xbf16>, vector<8x64xf32> -> vector<8x64xf32>
    %6 = arith.addf %0, %5 : vector<8x64xf32>
    %c0_6 = arith.constant 0 : index
    %c1 = arith.constant 1 : index
    %c0_7 = arith.constant 0 : index
    %7 = vector.load %arg1[%c0_6, %c1, %c0_7] : memref<1x24x64xbf16, #tpu.memory_space<vmem>>, vector<1x8x64xbf16>
    %8 = vector.shape_cast %7 : vector<1x8x64xbf16> to vector<8x64xbf16>
    %c1_8 = arith.constant 1 : index
    %c0_9 = arith.constant 0 : index
    %c0_10 = arith.constant 0 : index
    %9 = vector.load %arg2[%c1_8, %c0_9, %c0_10] : memref<9x64x64xbf16, #tpu.memory_space<vmem>>, vector<1x64x64xbf16>
    %10 = vector.shape_cast %9 : vector<1x64x64xbf16> to vector<64x64xbf16>
    %cst_11 = arith.constant dense<0.000000e+00> : vector<8x64xf32>
    %11 = tpu.matmul %8, %10, %cst_11 {dimension_numbers = #tpu.dot_dimension_numbers<[1], [0], [0], [1], [0, 0, 1, 1], [], []>} : vector<8x64xbf16>, vector<64x64xbf16>, vector<8x64xf32> -> vector<8x64xf32>
    %12 = arith.addf %6, %11 : vector<8x64xf32>
    %c0_12 = arith.constant 0 : index
    %c2 = arith.constant 2 : index
    %c0_13 = arith.constant 0 : index
    %13 = vector.load %arg1[%c0_12, %c2, %c0_13] : memref<1x24x64xbf16, #tpu.memory_space<vmem>>, vector<1x8x64xbf16>
    %14 = vector.shape_cast %13 : vector<1x8x64xbf16> to vector<8x64xbf16>
    %c2_14 = arith.constant 2 : index
    %c0_15 = arith.constant 0 : index
    %c0_16 = arith.constant 0 : index
    %15 = vector.load %arg2[%c2_14, %c0_15, %c0_16] : memref<9x64x64xbf16, #tpu.memory_space<vmem>>, vector<1x64x64xbf16>
    %16 = vector.shape_cast %15 : vector<1x64x64xbf16> to vector<64x64xbf16>
    %cst_17 = arith.constant dense<0.000000e+00> : vector<8x64xf32>
    %17 = tpu.matmul %14, %16, %cst_17 {dimension_numbers = #tpu.dot_dimension_numbers<[1], [0], [0], [1], [0, 0, 1, 1], [], []>} : vector<8x64xbf16>, vector<64x64xbf16>, vector<8x64xf32> -> vector<8x64xf32>
    %18 = arith.addf %12, %17 : vector<8x64xf32>
    %c0_18 = arith.constant 0 : index
    %c4 = arith.constant 4 : index
    %c0_19 = arith.constant 0 : index
    %19 = vector.load %arg1[%c0_18, %c4, %c0_19] : memref<1x24x64xbf16, #tpu.memory_space<vmem>>, vector<1x8x64xbf16>
    %20 = vector.shape_cast %19 : vector<1x8x64xbf16> to vector<8x64xbf16>
    %c3 = arith.constant 3 : index
    %c0_20 = arith.constant 0 : index
    %c0_21 = arith.constant 0 : index
    %21 = vector.load %arg2[%c3, %c0_20, %c0_21] : memref<9x64x64xbf16, #tpu.memory_space<vmem>>, vector<1x64x64xbf16>
    %22 = vector.shape_cast %21 : vector<1x64x64xbf16> to vector<64x64xbf16>
    %cst_22 = arith.constant dense<0.000000e+00> : vector<8x64xf32>
    %23 = tpu.matmul %20, %22, %cst_22 {dimension_numbers = #tpu.dot_dimension_numbers<[1], [0], [0], [1], [0, 0, 1, 1], [], []>} : vector<8x64xbf16>, vector<64x64xbf16>, vector<8x64xf32> -> vector<8x64xf32>
    %24 = arith.addf %18, %23 : vector<8x64xf32>
    %c0_23 = arith.constant 0 : index
    %c5 = arith.constant 5 : index
    %c0_24 = arith.constant 0 : index
    %25 = vector.load %arg1[%c0_23, %c5, %c0_24] : memref<1x24x64xbf16, #tpu.memory_space<vmem>>, vector<1x8x64xbf16>
    %26 = vector.shape_cast %25 : vector<1x8x64xbf16> to vector<8x64xbf16>
    %c4_25 = arith.constant 4 : index
    %c0_26 = arith.constant 0 : index
    %c0_27 = arith.constant 0 : index
    %27 = vector.load %arg2[%c4_25, %c0_26, %c0_27] : memref<9x64x64xbf16, #tpu.memory_space<vmem>>, vector<1x64x64xbf16>
    %28 = vector.shape_cast %27 : vector<1x64x64xbf16> to vector<64x64xbf16>
    %cst_28 = arith.constant dense<0.000000e+00> : vector<8x64xf32>
    %29 = tpu.matmul %26, %28, %cst_28 {dimension_numbers = #tpu.dot_dimension_numbers<[1], [0], [0], [1], [0, 0, 1, 1], [], []>} : vector<8x64xbf16>, vector<64x64xbf16>, vector<8x64xf32> -> vector<8x64xf32>
    %30 = arith.addf %24, %29 : vector<8x64xf32>
    %c0_29 = arith.constant 0 : index
    %c6 = arith.constant 6 : index
    %c0_30 = arith.constant 0 : index
    %31 = vector.load %arg1[%c0_29, %c6, %c0_30] : memref<1x24x64xbf16, #tpu.memory_space<vmem>>, vector<1x8x64xbf16>
    %32 = vector.shape_cast %31 : vector<1x8x64xbf16> to vector<8x64xbf16>
    %c5_31 = arith.constant 5 : index
    %c0_32 = arith.constant 0 : index
    %c0_33 = arith.constant 0 : index
    %33 = vector.load %arg2[%c5_31, %c0_32, %c0_33] : memref<9x64x64xbf16, #tpu.memory_space<vmem>>, vector<1x64x64xbf16>
    %34 = vector.shape_cast %33 : vector<1x64x64xbf16> to vector<64x64xbf16>
    %cst_34 = arith.constant dense<0.000000e+00> : vector<8x64xf32>
    %35 = tpu.matmul %32, %34, %cst_34 {dimension_numbers = #tpu.dot_dimension_numbers<[1], [0], [0], [1], [0, 0, 1, 1], [], []>} : vector<8x64xbf16>, vector<64x64xbf16>, vector<8x64xf32> -> vector<8x64xf32>
    %36 = arith.addf %30, %35 : vector<8x64xf32>
    %c0_35 = arith.constant 0 : index
    %c8 = arith.constant 8 : index
    %c0_36 = arith.constant 0 : index
    %37 = vector.load %arg1[%c0_35, %c8, %c0_36] : memref<1x24x64xbf16, #tpu.memory_space<vmem>>, vector<1x8x64xbf16>
    %38 = vector.shape_cast %37 : vector<1x8x64xbf16> to vector<8x64xbf16>
    %c6_37 = arith.constant 6 : index
    %c0_38 = arith.constant 0 : index
    %c0_39 = arith.constant 0 : index
    %39 = vector.load %arg2[%c6_37, %c0_38, %c0_39] : memref<9x64x64xbf16, #tpu.memory_space<vmem>>, vector<1x64x64xbf16>
    %40 = vector.shape_cast %39 : vector<1x64x64xbf16> to vector<64x64xbf16>
    %cst_40 = arith.constant dense<0.000000e+00> : vector<8x64xf32>
    %41 = tpu.matmul %38, %40, %cst_40 {dimension_numbers = #tpu.dot_dimension_numbers<[1], [0], [0], [1], [0, 0, 1, 1], [], []>} : vector<8x64xbf16>, vector<64x64xbf16>, vector<8x64xf32> -> vector<8x64xf32>
    %42 = arith.addf %36, %41 : vector<8x64xf32>
    %c0_41 = arith.constant 0 : index
    %c9 = arith.constant 9 : index
    %c0_42 = arith.constant 0 : index
    %43 = vector.load %arg1[%c0_41, %c9, %c0_42] : memref<1x24x64xbf16, #tpu.memory_space<vmem>>, vector<1x8x64xbf16>
    %44 = vector.shape_cast %43 : vector<1x8x64xbf16> to vector<8x64xbf16>
    %c7 = arith.constant 7 : index
    %c0_43 = arith.constant 0 : index
    %c0_44 = arith.constant 0 : index
    %45 = vector.load %arg2[%c7, %c0_43, %c0_44] : memref<9x64x64xbf16, #tpu.memory_space<vmem>>, vector<1x64x64xbf16>
    %46 = vector.shape_cast %45 : vector<1x64x64xbf16> to vector<64x64xbf16>
    %cst_45 = arith.constant dense<0.000000e+00> : vector<8x64xf32>
    %47 = tpu.matmul %44, %46, %cst_45 {dimension_numbers = #tpu.dot_dimension_numbers<[1], [0], [0], [1], [0, 0, 1, 1], [], []>} : vector<8x64xbf16>, vector<64x64xbf16>, vector<8x64xf32> -> vector<8x64xf32>
    %48 = arith.addf %42, %47 : vector<8x64xf32>
    %c0_46 = arith.constant 0 : index
    %c10 = arith.constant 10 : index
    %c0_47 = arith.constant 0 : index
    %49 = vector.load %arg1[%c0_46, %c10, %c0_47] : memref<1x24x64xbf16, #tpu.memory_space<vmem>>, vector<1x8x64xbf16>
    %50 = vector.shape_cast %49 : vector<1x8x64xbf16> to vector<8x64xbf16>
    %c8_48 = arith.constant 8 : index
    %c0_49 = arith.constant 0 : index
    %c0_50 = arith.constant 0 : index
    %51 = vector.load %arg2[%c8_48, %c0_49, %c0_50] : memref<9x64x64xbf16, #tpu.memory_space<vmem>>, vector<1x64x64xbf16>
    %52 = vector.shape_cast %51 : vector<1x64x64xbf16> to vector<64x64xbf16>
    %cst_51 = arith.constant dense<0.000000e+00> : vector<8x64xf32>
    %53 = tpu.matmul %50, %52, %cst_51 {dimension_numbers = #tpu.dot_dimension_numbers<[1], [0], [0], [1], [0, 0, 1, 1], [], []>} : vector<8x64xbf16>, vector<64x64xbf16>, vector<8x64xf32> -> vector<8x64xf32>
    %54 = arith.addf %48, %53 : vector<8x64xf32>
    %c0_52 = arith.constant 0 : index
    %c0_53 = arith.constant 0 : index
    %55 = vector.load %arg3[%c0_52, %c0_53] : memref<1x64xf32, #tpu.memory_space<vmem>>, vector<1x64xf32>
    %56 = vector.broadcast %55 : vector<1x64xf32> to vector<8x64xf32>
    %57 = arith.mulf %54, %56 : vector<8x64xf32>
    %c0_54 = arith.constant 0 : index
    %c0_55 = arith.constant 0 : index
    %58 = vector.load %arg4[%c0_54, %c0_55] : memref<1x64xf32, #tpu.memory_space<vmem>>, vector<1x64xf32>
    %59 = vector.broadcast %58 : vector<1x64xf32> to vector<8x64xf32>
    %60 = arith.addf %57, %59 : vector<8x64xf32>
    %cst_56 = arith.constant 0.000000e+00 : f32
    %61 = vector.broadcast %cst_56 : f32 to vector<8x64xf32>
    %62 = arith.maximumf %60, %61 : vector<8x64xf32>
    %63 = arith.truncf %62 : vector<8x64xf32> to vector<8x64xbf16>
    %c0_57 = arith.constant 0 : index
    %c0_58 = arith.constant 0 : index
    %c0_59 = arith.constant 0 : index
    %64 = vector.load %arg5[%c0_57, %c0_58, %c0_59] : memref<1x8x64xbf16, #tpu.memory_space<vmem>>, vector<1x8x64xbf16>
    %65 = vector.shape_cast %64 : vector<1x8x64xbf16> to vector<8x64xbf16>
    %66 = vector.shape_cast %63 : vector<8x64xbf16> to vector<1x8x64xbf16>
    tpu.vector_store %arg5[%c0_57, %c0_58, %c0_59], %66 {strides = array<i32>} : memref<1x8x64xbf16, #tpu.memory_space<vmem>>, vector<1x8x64xbf16>,
    return
  }
  func.func @transform_0(%arg0: i32) -> (i32, i32, i32) {
    %c0_i32 = arith.constant 0 : i32
    %c0_i32_0 = arith.constant 0 : i32
    %c0_i32_1 = arith.constant 0 : i32
    return %arg0, %c0_i32, %c0_i32_0 : i32, i32, i32
  }
  func.func @transform_1(%arg0: i32) -> (i32, i32, i32) {
    %c0_i32 = arith.constant 0 : i32
    %c0_i32_0 = arith.constant 0 : i32
    %c0_i32_1 = arith.constant 0 : i32
    %c0_i32_2 = arith.constant 0 : i32
    return %c0_i32, %c0_i32_0, %c0_i32_1 : i32, i32, i32
  }
  func.func @transform_2(%arg0: i32) -> (i32, i32) {
    %c0_i32 = arith.constant 0 : i32
    %c0_i32_0 = arith.constant 0 : i32
    %c0_i32_1 = arith.constant 0 : i32
    return %c0_i32, %c0_i32_0 : i32, i32
  }
  func.func @transform_3(%arg0: i32) -> (i32, i32) {
    %c0_i32 = arith.constant 0 : i32
    %c0_i32_0 = arith.constant 0 : i32
    %c0_i32_1 = arith.constant 0 : i32
    return %c0_i32, %c0_i32_0 : i32, i32
  }
  func.func @transform_4(%arg0: i32) -> (i32, i32, i32) {
    %c0_i32 = arith.constant 0 : i32
    %c0_i32_0 = arith.constant 0 : i32
    %c0_i32_1 = arith.constant 0 : i32
    return %arg0, %c0_i32, %c0_i32_0 : i32, i32, i32
  }
}

module attributes {stable_mosaic.version = 11 : i64} {
  func.func @_mm_bias_kernel(%arg0: i32, %arg1: memref<16x576xbf16, #tpu.memory_space<vmem>>, %arg2: memref<576x128xbf16, #tpu.memory_space<vmem>>, %arg3: memref<1x128xf32, #tpu.memory_space<vmem>>, %arg4: memref<16x128xbf16, #tpu.memory_space<vmem>>) attributes {dimension_semantics = [#tpu.dimension_semantics<parallel>], iteration_bounds = array<i64: 1>, scalar_prefetch = 0 : i64, scratch_operands = 0 : i64, tpu.core_type = #tpu.core_type<tc>, window_params = [{transform_indices = @transform_0, window_bounds = array<i64: 16, 576>}, {pipeline_mode = #tpu.pipeline_mode<synchronous>, transform_indices = @transform_1, window_bounds = array<i64: 576, 128>}, {pipeline_mode = #tpu.pipeline_mode<synchronous>, transform_indices = @transform_2, window_bounds = array<i64: 1, 128>}, {transform_indices = @transform_3, window_bounds = array<i64: 16, 128>}]} {
    %c0 = arith.constant 0 : index
    %c0_0 = arith.constant 0 : index
    %0 = vector.load %arg1[%c0, %c0_0] : memref<16x576xbf16, #tpu.memory_space<vmem>>, vector<16x576xbf16>
    %c0_1 = arith.constant 0 : index
    %c0_2 = arith.constant 0 : index
    %1 = vector.load %arg2[%c0_1, %c0_2] : memref<576x128xbf16, #tpu.memory_space<vmem>>, vector<576x128xbf16>
    %cst = arith.constant dense<0.000000e+00> : vector<16x128xf32>
    %2 = tpu.matmul %0, %1, %cst {dimension_numbers = #tpu.dot_dimension_numbers<[1], [0], [0], [1], [0, 0, 1, 1], [], []>} : vector<16x576xbf16>, vector<576x128xbf16>, vector<16x128xf32> -> vector<16x128xf32>
    %c0_3 = arith.constant 0 : index
    %c0_4 = arith.constant 0 : index
    %3 = vector.load %arg3[%c0_3, %c0_4] : memref<1x128xf32, #tpu.memory_space<vmem>>, vector<1x128xf32>
    %4 = vector.broadcast %3 : vector<1x128xf32> to vector<16x128xf32>
    %5 = arith.addf %2, %4 : vector<16x128xf32>
    %cst_5 = arith.constant 0.000000e+00 : f32
    %6 = vector.broadcast %cst_5 : f32 to vector<16x128xf32>
    %7 = arith.maximumf %5, %6 : vector<16x128xf32>
    %8 = arith.truncf %7 : vector<16x128xf32> to vector<16x128xbf16>
    %c0_6 = arith.constant 0 : index
    %c0_7 = arith.constant 0 : index
    %9 = vector.load %arg4[%c0_6, %c0_7] : memref<16x128xbf16, #tpu.memory_space<vmem>>, vector<16x128xbf16>
    tpu.vector_store %arg4[%c0_6, %c0_7], %8 {strides = array<i32>} : memref<16x128xbf16, #tpu.memory_space<vmem>>, vector<16x128xbf16>,
    return
  }
  func.func @transform_0(%arg0: i32) -> (i32, i32) {
    %c0_i32 = arith.constant 0 : i32
    %c0_i32_0 = arith.constant 0 : i32
    return %arg0, %c0_i32 : i32, i32
  }
  func.func @transform_1(%arg0: i32) -> (i32, i32) {
    %c0_i32 = arith.constant 0 : i32
    %c0_i32_0 = arith.constant 0 : i32
    %c0_i32_1 = arith.constant 0 : i32
    return %c0_i32, %c0_i32_0 : i32, i32
  }
  func.func @transform_2(%arg0: i32) -> (i32, i32) {
    %c0_i32 = arith.constant 0 : i32
    %c0_i32_0 = arith.constant 0 : i32
    %c0_i32_1 = arith.constant 0 : i32
    return %c0_i32, %c0_i32_0 : i32, i32
  }
  func.func @transform_3(%arg0: i32) -> (i32, i32) {
    %c0_i32 = arith.constant 0 : i32
    %c0_i32_0 = arith.constant 0 : i32
    return %arg0, %c0_i32 : i32, i32
  }
}

module attributes {stable_mosaic.version = 11 : i64} {
  func.func @_conv3x3_s1_kernel(%arg0: i32, %arg1: memref<1x16x128xbf16, #tpu.memory_space<vmem>>, %arg2: memref<9x128x128xbf16, #tpu.memory_space<vmem>>, %arg3: memref<1x128xf32, #tpu.memory_space<vmem>>, %arg4: memref<1x128xf32, #tpu.memory_space<vmem>>, %arg5: memref<1x3x128xbf16, #tpu.memory_space<vmem>>) attributes {dimension_semantics = [#tpu.dimension_semantics<parallel>], iteration_bounds = array<i64: 2>, scalar_prefetch = 0 : i64, scratch_operands = 0 : i64, tpu.core_type = #tpu.core_type<tc>, window_params = [{transform_indices = @transform_0, window_bounds = array<i64: 1, 16, 128>}, {pipeline_mode = #tpu.pipeline_mode<synchronous>, transform_indices = @transform_1, window_bounds = array<i64: 9, 128, 128>}, {pipeline_mode = #tpu.pipeline_mode<synchronous>, transform_indices = @transform_2, window_bounds = array<i64: 1, 128>}, {pipeline_mode = #tpu.pipeline_mode<synchronous>, transform_indices = @transform_3, window_bounds = array<i64: 1, 128>}, {transform_indices = @transform_4, window_bounds = array<i64: 1, 3, 128>}]} {
    %cst = arith.constant 0.000000e+00 : f32
    %0 = vector.broadcast %cst : f32 to vector<3x128xf32>
    %c0 = arith.constant 0 : index
    %c0_0 = arith.constant 0 : index
    %c0_1 = arith.constant 0 : index
    %1 = vector.load %arg1[%c0, %c0_0, %c0_1] : memref<1x16x128xbf16, #tpu.memory_space<vmem>>, vector<1x3x128xbf16>
    %2 = vector.shape_cast %1 : vector<1x3x128xbf16> to vector<3x128xbf16>
    %c0_2 = arith.constant 0 : index
    %c0_3 = arith.constant 0 : index
    %c0_4 = arith.constant 0 : index
    %3 = vector.load %arg2[%c0_2, %c0_3, %c0_4] : memref<9x128x128xbf16, #tpu.memory_space<vmem>>, vector<1x128x128xbf16>
    %4 = vector.shape_cast %3 : vector<1x128x128xbf16> to vector<128x128xbf16>
    %cst_5 = arith.constant dense<0.000000e+00> : vector<3x128xf32>
    %5 = tpu.matmul %2, %4, %cst_5 {dimension_numbers = #tpu.dot_dimension_numbers<[1], [0], [0], [1], [0, 0, 1, 1], [], []>} : vector<3x128xbf16>, vector<128x128xbf16>, vector<3x128xf32> -> vector<3x128xf32>
    %6 = arith.addf %0, %5 : vector<3x128xf32>
    %c0_6 = arith.constant 0 : index
    %c1 = arith.constant 1 : index
    %c0_7 = arith.constant 0 : index
    %7 = vector.load %arg1[%c0_6, %c1, %c0_7] : memref<1x16x128xbf16, #tpu.memory_space<vmem>>, vector<1x3x128xbf16>
    %8 = vector.shape_cast %7 : vector<1x3x128xbf16> to vector<3x128xbf16>
    %c1_8 = arith.constant 1 : index
    %c0_9 = arith.constant 0 : index
    %c0_10 = arith.constant 0 : index
    %9 = vector.load %arg2[%c1_8, %c0_9, %c0_10] : memref<9x128x128xbf16, #tpu.memory_space<vmem>>, vector<1x128x128xbf16>
    %10 = vector.shape_cast %9 : vector<1x128x128xbf16> to vector<128x128xbf16>
    %cst_11 = arith.constant dense<0.000000e+00> : vector<3x128xf32>
    %11 = tpu.matmul %8, %10, %cst_11 {dimension_numbers = #tpu.dot_dimension_numbers<[1], [0], [0], [1], [0, 0, 1, 1], [], []>} : vector<3x128xbf16>, vector<128x128xbf16>, vector<3x128xf32> -> vector<3x128xf32>
    %12 = arith.addf %6, %11 : vector<3x128xf32>
    %c0_12 = arith.constant 0 : index
    %c2 = arith.constant 2 : index
    %c0_13 = arith.constant 0 : index
    %13 = vector.load %arg1[%c0_12, %c2, %c0_13] : memref<1x16x128xbf16, #tpu.memory_space<vmem>>, vector<1x3x128xbf16>
    %14 = vector.shape_cast %13 : vector<1x3x128xbf16> to vector<3x128xbf16>
    %c2_14 = arith.constant 2 : index
    %c0_15 = arith.constant 0 : index
    %c0_16 = arith.constant 0 : index
    %15 = vector.load %arg2[%c2_14, %c0_15, %c0_16] : memref<9x128x128xbf16, #tpu.memory_space<vmem>>, vector<1x128x128xbf16>
    %16 = vector.shape_cast %15 : vector<1x128x128xbf16> to vector<128x128xbf16>
    %cst_17 = arith.constant dense<0.000000e+00> : vector<3x128xf32>
    %17 = tpu.matmul %14, %16, %cst_17 {dimension_numbers = #tpu.dot_dimension_numbers<[1], [0], [0], [1], [0, 0, 1, 1], [], []>} : vector<3x128xbf16>, vector<128x128xbf16>, vector<3x128xf32> -> vector<3x128xf32>
    %18 = arith.addf %12, %17 : vector<3x128xf32>
    %c0_18 = arith.constant 0 : index
    %c3 = arith.constant 3 : index
    %c0_19 = arith.constant 0 : index
    %19 = vector.load %arg1[%c0_18, %c3, %c0_19] : memref<1x16x128xbf16, #tpu.memory_space<vmem>>, vector<1x3x128xbf16>
    %20 = vector.shape_cast %19 : vector<1x3x128xbf16> to vector<3x128xbf16>
    %c3_20 = arith.constant 3 : index
    %c0_21 = arith.constant 0 : index
    %c0_22 = arith.constant 0 : index
    %21 = vector.load %arg2[%c3_20, %c0_21, %c0_22] : memref<9x128x128xbf16, #tpu.memory_space<vmem>>, vector<1x128x128xbf16>
    %22 = vector.shape_cast %21 : vector<1x128x128xbf16> to vector<128x128xbf16>
    %cst_23 = arith.constant dense<0.000000e+00> : vector<3x128xf32>
    %23 = tpu.matmul %20, %22, %cst_23 {dimension_numbers = #tpu.dot_dimension_numbers<[1], [0], [0], [1], [0, 0, 1, 1], [], []>} : vector<3x128xbf16>, vector<128x128xbf16>, vector<3x128xf32> -> vector<3x128xf32>
    %24 = arith.addf %18, %23 : vector<3x128xf32>
    %c0_24 = arith.constant 0 : index
    %c4 = arith.constant 4 : index
    %c0_25 = arith.constant 0 : index
    %25 = vector.load %arg1[%c0_24, %c4, %c0_25] : memref<1x16x128xbf16, #tpu.memory_space<vmem>>, vector<1x3x128xbf16>
    %26 = vector.shape_cast %25 : vector<1x3x128xbf16> to vector<3x128xbf16>
    %c4_26 = arith.constant 4 : index
    %c0_27 = arith.constant 0 : index
    %c0_28 = arith.constant 0 : index
    %27 = vector.load %arg2[%c4_26, %c0_27, %c0_28] : memref<9x128x128xbf16, #tpu.memory_space<vmem>>, vector<1x128x128xbf16>
    %28 = vector.shape_cast %27 : vector<1x128x128xbf16> to vector<128x128xbf16>
    %cst_29 = arith.constant dense<0.000000e+00> : vector<3x128xf32>
    %29 = tpu.matmul %26, %28, %cst_29 {dimension_numbers = #tpu.dot_dimension_numbers<[1], [0], [0], [1], [0, 0, 1, 1], [], []>} : vector<3x128xbf16>, vector<128x128xbf16>, vector<3x128xf32> -> vector<3x128xf32>
    %30 = arith.addf %24, %29 : vector<3x128xf32>
    %c0_30 = arith.constant 0 : index
    %c5 = arith.constant 5 : index
    %c0_31 = arith.constant 0 : index
    %31 = vector.load %arg1[%c0_30, %c5, %c0_31] : memref<1x16x128xbf16, #tpu.memory_space<vmem>>, vector<1x3x128xbf16>
    %32 = vector.shape_cast %31 : vector<1x3x128xbf16> to vector<3x128xbf16>
    %c5_32 = arith.constant 5 : index
    %c0_33 = arith.constant 0 : index
    %c0_34 = arith.constant 0 : index
    %33 = vector.load %arg2[%c5_32, %c0_33, %c0_34] : memref<9x128x128xbf16, #tpu.memory_space<vmem>>, vector<1x128x128xbf16>
    %34 = vector.shape_cast %33 : vector<1x128x128xbf16> to vector<128x128xbf16>
    %cst_35 = arith.constant dense<0.000000e+00> : vector<3x128xf32>
    %35 = tpu.matmul %32, %34, %cst_35 {dimension_numbers = #tpu.dot_dimension_numbers<[1], [0], [0], [1], [0, 0, 1, 1], [], []>} : vector<3x128xbf16>, vector<128x128xbf16>, vector<3x128xf32> -> vector<3x128xf32>
    %36 = arith.addf %30, %35 : vector<3x128xf32>
    %c0_36 = arith.constant 0 : index
    %c6 = arith.constant 6 : index
    %c0_37 = arith.constant 0 : index
    %37 = vector.load %arg1[%c0_36, %c6, %c0_37] : memref<1x16x128xbf16, #tpu.memory_space<vmem>>, vector<1x3x128xbf16>
    %38 = vector.shape_cast %37 : vector<1x3x128xbf16> to vector<3x128xbf16>
    %c6_38 = arith.constant 6 : index
    %c0_39 = arith.constant 0 : index
    %c0_40 = arith.constant 0 : index
    %39 = vector.load %arg2[%c6_38, %c0_39, %c0_40] : memref<9x128x128xbf16, #tpu.memory_space<vmem>>, vector<1x128x128xbf16>
    %40 = vector.shape_cast %39 : vector<1x128x128xbf16> to vector<128x128xbf16>
    %cst_41 = arith.constant dense<0.000000e+00> : vector<3x128xf32>
    %41 = tpu.matmul %38, %40, %cst_41 {dimension_numbers = #tpu.dot_dimension_numbers<[1], [0], [0], [1], [0, 0, 1, 1], [], []>} : vector<3x128xbf16>, vector<128x128xbf16>, vector<3x128xf32> -> vector<3x128xf32>
    %42 = arith.addf %36, %41 : vector<3x128xf32>
    %c0_42 = arith.constant 0 : index
    %c7 = arith.constant 7 : index
    %c0_43 = arith.constant 0 : index
    %43 = vector.load %arg1[%c0_42, %c7, %c0_43] : memref<1x16x128xbf16, #tpu.memory_space<vmem>>, vector<1x3x128xbf16>
    %44 = vector.shape_cast %43 : vector<1x3x128xbf16> to vector<3x128xbf16>
    %c7_44 = arith.constant 7 : index
    %c0_45 = arith.constant 0 : index
    %c0_46 = arith.constant 0 : index
    %45 = vector.load %arg2[%c7_44, %c0_45, %c0_46] : memref<9x128x128xbf16, #tpu.memory_space<vmem>>, vector<1x128x128xbf16>
    %46 = vector.shape_cast %45 : vector<1x128x128xbf16> to vector<128x128xbf16>
    %cst_47 = arith.constant dense<0.000000e+00> : vector<3x128xf32>
    %47 = tpu.matmul %44, %46, %cst_47 {dimension_numbers = #tpu.dot_dimension_numbers<[1], [0], [0], [1], [0, 0, 1, 1], [], []>} : vector<3x128xbf16>, vector<128x128xbf16>, vector<3x128xf32> -> vector<3x128xf32>
    %48 = arith.addf %42, %47 : vector<3x128xf32>
    %c0_48 = arith.constant 0 : index
    %c8 = arith.constant 8 : index
    %c0_49 = arith.constant 0 : index
    %49 = vector.load %arg1[%c0_48, %c8, %c0_49] : memref<1x16x128xbf16, #tpu.memory_space<vmem>>, vector<1x3x128xbf16>
    %50 = vector.shape_cast %49 : vector<1x3x128xbf16> to vector<3x128xbf16>
    %c8_50 = arith.constant 8 : index
    %c0_51 = arith.constant 0 : index
    %c0_52 = arith.constant 0 : index
    %51 = vector.load %arg2[%c8_50, %c0_51, %c0_52] : memref<9x128x128xbf16, #tpu.memory_space<vmem>>, vector<1x128x128xbf16>
    %52 = vector.shape_cast %51 : vector<1x128x128xbf16> to vector<128x128xbf16>
    %cst_53 = arith.constant dense<0.000000e+00> : vector<3x128xf32>
    %53 = tpu.matmul %50, %52, %cst_53 {dimension_numbers = #tpu.dot_dimension_numbers<[1], [0], [0], [1], [0, 0, 1, 1], [], []>} : vector<3x128xbf16>, vector<128x128xbf16>, vector<3x128xf32> -> vector<3x128xf32>
    %54 = arith.addf %48, %53 : vector<3x128xf32>
    %c0_54 = arith.constant 0 : index
    %c0_55 = arith.constant 0 : index
    %55 = vector.load %arg3[%c0_54, %c0_55] : memref<1x128xf32, #tpu.memory_space<vmem>>, vector<1x128xf32>
    %56 = vector.broadcast %55 : vector<1x128xf32> to vector<3x128xf32>
    %57 = arith.mulf %54, %56 : vector<3x128xf32>
    %c0_56 = arith.constant 0 : index
    %c0_57 = arith.constant 0 : index
    %58 = vector.load %arg4[%c0_56, %c0_57] : memref<1x128xf32, #tpu.memory_space<vmem>>, vector<1x128xf32>
    %59 = vector.broadcast %58 : vector<1x128xf32> to vector<3x128xf32>
    %60 = arith.addf %57, %59 : vector<3x128xf32>
    %cst_58 = arith.constant 0.000000e+00 : f32
    %61 = vector.broadcast %cst_58 : f32 to vector<3x128xf32>
    %62 = arith.maximumf %60, %61 : vector<3x128xf32>
    %63 = arith.truncf %62 : vector<3x128xf32> to vector<3x128xbf16>
    %c0_59 = arith.constant 0 : index
    %c0_60 = arith.constant 0 : index
    %c0_61 = arith.constant 0 : index
    %64 = vector.load %arg5[%c0_59, %c0_60, %c0_61] : memref<1x3x128xbf16, #tpu.memory_space<vmem>>, vector<1x3x128xbf16>
    %65 = vector.shape_cast %64 : vector<1x3x128xbf16> to vector<3x128xbf16>
    %66 = vector.shape_cast %63 : vector<3x128xbf16> to vector<1x3x128xbf16>
    tpu.vector_store %arg5[%c0_59, %c0_60, %c0_61], %66 {strides = array<i32>} : memref<1x3x128xbf16, #tpu.memory_space<vmem>>, vector<1x3x128xbf16>,
    return
  }
  func.func @transform_0(%arg0: i32) -> (i32, i32, i32) {
    %c0_i32 = arith.constant 0 : i32
    %c0_i32_0 = arith.constant 0 : i32
    %c0_i32_1 = arith.constant 0 : i32
    return %arg0, %c0_i32, %c0_i32_0 : i32, i32, i32
  }
  func.func @transform_1(%arg0: i32) -> (i32, i32, i32) {
    %c0_i32 = arith.constant 0 : i32
    %c0_i32_0 = arith.constant 0 : i32
    %c0_i32_1 = arith.constant 0 : i32
    %c0_i32_2 = arith.constant 0 : i32
    return %c0_i32, %c0_i32_0, %c0_i32_1 : i32, i32, i32
  }
  func.func @transform_2(%arg0: i32) -> (i32, i32) {
    %c0_i32 = arith.constant 0 : i32
    %c0_i32_0 = arith.constant 0 : i32
    %c0_i32_1 = arith.constant 0 : i32
    return %c0_i32, %c0_i32_0 : i32, i32
  }
  func.func @transform_3(%arg0: i32) -> (i32, i32) {
    %c0_i32 = arith.constant 0 : i32
    %c0_i32_0 = arith.constant 0 : i32
    %c0_i32_1 = arith.constant 0 : i32
    return %c0_i32, %c0_i32_0 : i32, i32
  }
  func.func @transform_4(%arg0: i32) -> (i32, i32, i32) {
    %c0_i32 = arith.constant 0 : i32
    %c0_i32_0 = arith.constant 0 : i32
    %c0_i32_1 = arith.constant 0 : i32
    return %arg0, %c0_i32, %c0_i32_0 : i32, i32, i32
  }
}

module attributes {stable_mosaic.version = 11 : i64} {
  func.func @_gap_fc_kernel(%arg0: i32, %arg1: memref<2x1x128xbf16, #tpu.memory_space<vmem>>, %arg2: memref<128x3xbf16, #tpu.memory_space<vmem>>, %arg3: memref<1x3xf32, #tpu.memory_space<vmem>>, %arg4: memref<2x3xf32, #tpu.memory_space<vmem>>) attributes {dimension_semantics = [#tpu.dimension_semantics<arbitrary>], iteration_bounds = array<i64: 1>, scalar_prefetch = 0 : i64, scratch_operands = 0 : i64, tpu.core_type = #tpu.core_type<tc>, window_params = [{pipeline_mode = #tpu.pipeline_mode<synchronous>, transform_indices = @transform_0, window_bounds = array<i64: 2, 1, 128>}, {pipeline_mode = #tpu.pipeline_mode<synchronous>, transform_indices = @transform_1, window_bounds = array<i64: 128, 3>}, {pipeline_mode = #tpu.pipeline_mode<synchronous>, transform_indices = @transform_2, window_bounds = array<i64: 1, 3>}, {pipeline_mode = #tpu.pipeline_mode<synchronous>, transform_indices = @transform_3, window_bounds = array<i64: 2, 3>}]} {
    %c0 = arith.constant 0 : index
    %c0_0 = arith.constant 0 : index
    %c0_1 = arith.constant 0 : index
    %0 = vector.load %arg1[%c0, %c0_0, %c0_1] : memref<2x1x128xbf16, #tpu.memory_space<vmem>>, vector<2x1x128xbf16>
    %1 = arith.extf %0 : vector<2x1x128xbf16> to vector<2x1x128xf32>
    %cst = arith.constant dense<0.000000e+00> : vector<2x128xf32>
    %2 = vector.multi_reduction <add>, %1, %cst [1] : vector<2x1x128xf32> to vector<2x128xf32>
    %cst_2 = arith.constant 1.000000e+00 : f32
    %3 = vector.broadcast %cst_2 : f32 to vector<2x128xf32>
    %4 = arith.mulf %2, %3 : vector<2x128xf32>
    %5 = arith.truncf %4 : vector<2x128xf32> to vector<2x128xbf16>
    %c0_3 = arith.constant 0 : index
    %c0_4 = arith.constant 0 : index
    %6 = vector.load %arg2[%c0_3, %c0_4] : memref<128x3xbf16, #tpu.memory_space<vmem>>, vector<128x3xbf16>
    %cst_5 = arith.constant dense<0.000000e+00> : vector<2x3xf32>
    %7 = tpu.matmul %5, %6, %cst_5 {dimension_numbers = #tpu.dot_dimension_numbers<[1], [0], [0], [1], [0, 0, 1, 1], [], []>} : vector<2x128xbf16>, vector<128x3xbf16>, vector<2x3xf32> -> vector<2x3xf32>
    %c0_6 = arith.constant 0 : index
    %c0_7 = arith.constant 0 : index
    %8 = vector.load %arg3[%c0_6, %c0_7] : memref<1x3xf32, #tpu.memory_space<vmem>>, vector<1x3xf32>
    %9 = vector.broadcast %8 : vector<1x3xf32> to vector<2x3xf32>
    %10 = arith.addf %7, %9 : vector<2x3xf32>
    %c0_8 = arith.constant 0 : index
    %c0_9 = arith.constant 0 : index
    %11 = vector.load %arg4[%c0_8, %c0_9] : memref<2x3xf32, #tpu.memory_space<vmem>>, vector<2x3xf32>
    tpu.vector_store %arg4[%c0_8, %c0_9], %10 {strides = array<i32>} : memref<2x3xf32, #tpu.memory_space<vmem>>, vector<2x3xf32>,
    return
  }
  func.func @transform_0(%arg0: i32) -> (i32, i32, i32) {
    %c0_i32 = arith.constant 0 : i32
    %c0_i32_0 = arith.constant 0 : i32
    %c0_i32_1 = arith.constant 0 : i32
    %c0_i32_2 = arith.constant 0 : i32
    return %c0_i32, %c0_i32_0, %c0_i32_1 : i32, i32, i32
  }
  func.func @transform_1(%arg0: i32) -> (i32, i32) {
    %c0_i32 = arith.constant 0 : i32
    %c0_i32_0 = arith.constant 0 : i32
    %c0_i32_1 = arith.constant 0 : i32
    return %c0_i32, %c0_i32_0 : i32, i32
  }
  func.func @transform_2(%arg0: i32) -> (i32, i32) {
    %c0_i32 = arith.constant 0 : i32
    %c0_i32_0 = arith.constant 0 : i32
    %c0_i32_1 = arith.constant 0 : i32
    return %c0_i32, %c0_i32_0 : i32, i32
  }
  func.func @transform_3(%arg0: i32) -> (i32, i32) {
    %c0_i32 = arith.constant 0 : i32
    %c0_i32_0 = arith.constant 0 : i32
    %c0_i32_1 = arith.constant 0 : i32
    return %c0_i32, %c0_i32_0 : i32, i32
  }
}

</mosaic_0001>

<llo_original>
// kernel: convo_classifier_forward.9
$region0: #{convo_classifier_forward.9}
  #allocation0 [shape = 'u32[]', space=smem, size = 0x4, offset = 0x4, fixed_abs, tag = 'smem constant byte address 0x4 - core index']
  #allocation1 [shape = 'u32[72,128]{1,0:T(1,128)}', space=vmem, size = 0x9000, scoped, tag = 'internal scratch']
  %s0 = inlined_call_operand.vmem [shape: bf16[512,147], index: 0, kind: input, shape index: {}]
  %s1 = inlined_call_operand.vmem [shape: bf16[147,32], index: 1, kind: input, shape index: {}]
  %s2 = inlined_call_operand.vmem [shape: f32[1,32], index: 2, kind: input, shape index: {}]
  %s3 = inlined_call_operand.vmem [shape: bf16[512,32], index: 3, kind: output, shape index: {}]
  %s4 = sld [smem:[#allocation0]]
  $region45: #{convo_classifier_forward.9} parent=0
    _
  %s6 = ssub.s32 1, %s4
  %s7 = scalar_select 0, %s6, %s4
  loop: start=0, step=1, limit=6
  $region2: #{convo_classifier_forward.9} parent=0 // loop_pre_header
    _
  $region3: #{convo_classifier_forward.9} parent=0 // loop_header
    %s9 = sphi 0, %s13
    %p10 = scmp.ge.s32.totalorder %s9, 6
    %s19 = sphi 0, %s21
    %s22 = sphi 0, %s19
    %s23 = sphi 0, %s22
    %s39 = sphi 0, %s23
    %s43 = sphi 0, %s43
    %s45 = sphi 0, %s43
    %s46 = sphi 0, %s45
    %s60 = sphi 0, %s46
    %s64 = sphi 0, %s64
    %s66 = sphi 0, %s64
    %s67 = sphi 0, %s66
    %s81 = sphi 0, %s67
    %s87 = sphi 0, %s89
    %s90 = sphi 0, %s87
    %s91 = sphi 0, %s90
    %s107 = sphi 0, %s91
  $region4: #{convo_classifier_forward.9} parent=0 // loop_header_branch
    %12 = sbr.rel (%p10) target = $region8
  $region5: #{convo_classifier_forward.9} parent=0 // loop_body
    %s14 = ssub.s32 %s9, 1
    %s15 = ssub.s32 %s9, 2
    %s16 = sadd.s32 %s9, 1
    %s17 = ssub.s32 %s9, %s16
    %p18 = scmp.eq.s32.totalorder %s17, 0
    %s20 = sadd.s32 %s19, 1
    %s21 = scalar_select %p18, %s19, %s20
    %p24 = pneg %p18
    %p25 = scmp.eq.s32.totalorder %s9, 3
    %p26 = por %p24, %p25
    %p27 = scmp.ne.s32.totalorder %s19, %s22
    %p28 = scmp.eq.s32.totalorder %s9, 0
    %p29 = por %p27, %p28
    %p30 = scmp.ne.s32.totalorder %s19, %s22
    %p31 = scmp.eq.s32.totalorder %s14, 3
    %p32 = por %p30, %p31
    %p33 = scmp.ne.s32.totalorder %s22, %s23
    %p34 = scmp.eq.s32.totalorder %s14, 0
    %p35 = por %p33, %p34
    %p36 = scmp.ne.s32.totalorder %s22, %s23
    %p37 = scmp.eq.s32.totalorder %s15, 3
    %p38 = por %p36, %p37
    %p40 = scmp.ne.s32.totalorder %s23, %s39
    %p41 = scmp.eq.s32.totalorder %s15, 0
    %p42 = por %p40, %p41
    %s44 = sadd.s32 %s43, 1
    %p47 = scmp.eq.s32.totalorder %s9, 3
    %p48 = scmp.ne.s32.totalorder %s43, %s45
    %p49 = scmp.eq.s32.totalorder %s9, 0
    %p50 = por %p48, %p49
    %p51 = scmp.ne.s32.totalorder %s43, %s45
    %p52 = scmp.eq.s32.totalorder %s14, 3
    %p53 = por %p51, %p52
    %p54 = scmp.ne.s32.totalorder %s45, %s46
    %p55 = scmp.eq.s32.totalorder %s14, 0
    %p56 = por %p54, %p55
    %p57 = scmp.ne.s32.totalorder %s45, %s46
    %p58 = scmp.eq.s32.totalorder %s15, 3
    %p59 = por %p57, %p58
    %p61 = scmp.ne.s32.totalorder %s46, %s60
    %p62 = scmp.eq.s32.totalorder %s15, 0
    %p63 = por %p61, %p62
    %s65 = sadd.s32 %s64, 1
    %p68 = scmp.eq.s32.totalorder %s9, 3
    %p69 = scmp.ne.s32.totalorder %s64, %s66
    %p70 = scmp.eq.s32.totalorder %s9, 0
    %p71 = por %p69, %p70
    %p72 = scmp.ne.s32.totalorder %s64, %s66
    %p73 = scmp.eq.s32.totalorder %s14, 3
    %p74 = por %p72, %p73
    %p75 = scmp.ne.s32.totalorder %s66, %s67
    %p76 = scmp.eq.s32.totalorder %s14, 0
    %p77 = por %p75, %p76
    %p78 = scmp.ne.s32.totalorder %s66, %s67
    %p79 = scmp.eq.s32.totalorder %s15, 3
    %p80 = por %p78, %p79
    %p82 = scmp.ne.s32.totalorder %s67, %s81
    %p83 = scmp.eq.s32.totalorder %s15, 0
    %p84 = por %p82, %p83
    %s85 = ssub.s32 %s9, %s16
    %p86 = scmp.eq.s32.totalorder %s85, 0
    %s88 = sadd.s32 %s87, 1
    %s89 = scalar_select %p86, %s87, %s88
    %p92 = pneg %p86
    %p93 = scmp.eq.s32.totalorder %s9, 3
    %p94 = por %p92, %p93
    %p95 = scmp.ne.s32.totalorder %s87, %s90
    %p96 = scmp.eq.s32.totalorder %s9, 0
    %p97 = por %p95, %p96
    %p98 = scmp.ne.s32.totalorder %s87, %s90
    %p99 = scmp.eq.s32.totalorder %s14, 3
    %p100 = por %p98, %p99
    %p101 = scmp.ne.s32.totalorder %s90, %s91
    %p102 = scmp.eq.s32.totalorder %s14, 0
    %p103 = por %p101, %p102
    %p104 = scmp.ne.s32.totalorder %s90, %s91
    %p105 = scmp.eq.s32.totalorder %s15, 3
    %p106 = por %p104, %p105
    %p108 = scmp.ne.s32.totalorder %s91, %s107
    %p109 = scmp.eq.s32.totalorder %s15, 0
    %p110 = por %p108, %p109
    %p111 = scmp.le.s32.totalorder 1, %s9
    %p112 = scmp.lt.s32.totalorder %s9, 5
    %p113 = pnand %p111, %p112
    %p114 = pneg %p113
    // Predicated region
    $region9: #{convo_classifier_forward.9} parent=5 // pred_check
      _
    $region10: #{convo_classifier_forward.9} parent=5 // pred_check_branch
      %116 = sbr.rel (%p113) target = $region12
    $region11: #{convo_classifier_forward.9} parent=5 // pred_region
      %s117 = ssub.s32 %s9, 1
      // Predicated region
      $region13: #{convo_classifier_forward.9} parent=11 // pred_check
        %p118 = pneg %p56
      $region14: #{convo_classifier_forward.9} parent=11 // pred_check_branch
        %120 = sbr.rel (%p118) target = $region16
      $region15: #{convo_classifier_forward.9} parent=11 // pred_region
        _
      $region16: #{convo_classifier_forward.9} parent=11 // pred_fallthru
        _
      // Predicated region
      $region17: #{convo_classifier_forward.9} parent=11 // pred_check
        %p121 = pneg %p77
      $region18: #{convo_classifier_forward.9} parent=11 // pred_check_branch
        %123 = sbr.rel (%p121) target = $region20
      $region19: #{convo_classifier_forward.9} parent=11 // pred_region
        _
      $region20: #{convo_classifier_forward.9} parent=11 // pred_fallthru
        _
    $region12: #{convo_classifier_forward.9} parent=5 // pred_fallthru
      _
    %p124 = scmp.lt.s32.totalorder %s9, 4
    // Predicated region
    $region21: #{convo_classifier_forward.9} parent=5 // pred_check
      %p125 = pneg %p124
    $region22: #{convo_classifier_forward.9} parent=5 // pred_check_branch
      %127 = sbr.rel (%p125) target = $region24
    $region23: #{convo_classifier_forward.9} parent=5 // pred_region
      // Predicated region
      $region25: #{convo_classifier_forward.9} parent=23 // pred_check
        %p128 = pneg %p29
      $region26: #{convo_classifier_forward.9} parent=23 // pred_check_branch
        %130 = sbr.rel (%p128) target = $region28
      $region27: #{convo_classifier_forward.9} parent=23 // pred_region
        %s131 = smul.u32 16, %s9
        %p132 = scmp.lt.s32.totalorder %s131, 63
        %s133 = scalar_select %p132, %s131, 63
        %s134 = smul.addr %s133, 2
        %s135 = smul.addr %s134, 4
        %s136 = scalar_lea.vmem %s0, %s135
        %s137 = smul.u32 16, %s9
      $region28: #{convo_classifier_forward.9} parent=23 // pred_fallthru
        _
    $region24: #{convo_classifier_forward.9} parent=5 // pred_fallthru
      _
    %p138 = scmp.le.s32.totalorder 1, %s9
    %p139 = scmp.lt.s32.totalorder %s9, 5
    %p140 = pnand %p138, %p139
    %p141 = pneg %p140
    // Predicated region
    $region29: #{convo_classifier_forward.9} parent=5 // pred_check
      _
    $region30: #{convo_classifier_forward.9} parent=5 // pred_check_branch
      %143 = sbr.rel (%p140) target = $region32
    $region31: #{convo_classifier_forward.9} parent=5 // pred_region
      %s144 = ssub.s32 %s9, 1
      %s145 = smul.u32 16, %s14
      %p146 = scmp.lt.s32.totalorder %s145, 63
      %s147 = scalar_select %p146, %s145, 63
      %s148 = smul.addr %s147, 2
      %s149 = smul.addr %s148, 4
      %s150 = scalar_lea.vmem %s0, %s149
      %p151 = pneg %p35
      %p152 = pneg %p32
      %p153 = pneg %p56
      %p154 = pneg %p53
      %p155 = pneg %p77
      %p156 = pneg %p74
      %p157 = pneg %p103
      %p158 = pneg %p100
      %s159 = smul.u32 16, %s14
      %p160 = scmp.lt.s32.totalorder %s159, 63
      %s161 = scalar_select %p160, %s159, 63
      %s162 = smul.addr %s161, 4
      %s163 = scalar_lea.vmem %s3, %s162
      %s164 = smul.u32 16, %s14
      %p165 = scmp.lt.s32.totalorder %s164, 63
      %s166 = scalar_select %p165, %s164, 63
      %s167 = smul.addr %s166, 2
      %s168 = smul.addr %s167, 4
      %s169 = scalar_lea.vmem %s0, %s168
      %s170 = smul.u32 16, %s14
      %s171 = smul.u32 16, %s14
      %p172 = scmp.lt.s32.totalorder %s171, 63
      %s173 = scalar_select %p172, %s171, 63
      %s174 = smul.addr %s173, 4
      %s175 = scalar_lea.vmem %s3, %s174
      %s176 = smul.u32 16, %s14
      %v178 = vld [vmem:[%s169] sm:$0xff]
      %v179 = vld [vmem:[%s169 + $0x8] sm:$0xff]
      %v180 = vld [vmem:[%s169 + $0x10] sm:$0xff]
      %v181 = vld [vmem:[%s169 + $0x18] sm:$0xff]
      %v182 = vld [vmem:[%s169 + $0x20] sm:$0xff]
      %v183 = vld [vmem:[%s169 + $0x28] sm:$0xff]
      %v184 = vld [vmem:[%s169 + $0x30] sm:$0xff]
      %v185 = vld [vmem:[%s169 + $0x38] sm:$0xff]
      %v186 = vld [vmem:[%s169 + $0x40] sm:$0xff]
      %v187 = vld [vmem:[%s169 + $0x48] sm:$0xff]
      %v188 = vld [vmem:[%s169 + $0x50] sm:$0xff]
      %v189 = vld [vmem:[%s169 + $0x58] sm:$0xff]
      %v190 = vld [vmem:[%s169 + $0x60] sm:$0xff]
      %v191 = vld [vmem:[%s169 + $0x68] sm:$0xff]
      %v192 = vld [vmem:[%s169 + $0x70] sm:$0xff]
      %v193 = vld [vmem:[%s169 + $0x78] sm:$0xff]
      %v194 = vld [vmem:[%s1] sm:$0xf]
      %v195 = vld [vmem:[%s1 + $0x4] sm:$0xf]
      %v196 = vld [vmem:[%s1 + $0x8] sm:$0xf]
      %v197 = vld [vmem:[%s1 + $0xc] sm:$0xf]
      %v198 = vld [vmem:[%s1 + $0x10] sm:$0xf]
      %v199 = vld [vmem:[%s1 + $0x14] sm:$0xf]
      %v200 = vld [vmem:[%s1 + $0x18] sm:$0xf]
      %v201 = vld [vmem:[%s1 + $0x1c] sm:$0xf]
      %v202 = vld [vmem:[%s1 + $0x20] sm:$0xf]
      %v203 = vld [vmem:[%s1 + $0x24] sm:$0xf]
      %v204 = vld [vmem:[%s1 + $0x28] sm:$0xf]
      %v205 = vld [vmem:[%s1 + $0x2c] sm:$0xf]
      %v206 = vld [vmem:[%s1 + $0x30] sm:$0xf]
      %v207 = vld [vmem:[%s1 + $0x34] sm:$0xf]
      %v208 = vld [vmem:[%s1 + $0x38] sm:$0xf]
      %v209 = vld [vmem:[%s1 + $0x3c] sm:$0xf]
      %v210 = vld [vmem:[%s1 + $0x40] sm:$0xf]
      %v211 = vld [vmem:[%s1 + $0x44] sm:$0xf]
      %v212 = vld [vmem:[%s1 + $0x48] sm:$0x3]
      %v213 = vld [vmem:[%s2] sm:$0x1]
      %v215 = vperm.slane %v213, 0
      %v233 = vunpack.c.l.b16 %v178
      %v234 = vunpack.c.h.b16 %v178
      %v235 = vunpack.c.l.b16 %v179
      %v236 = vunpack.c.h.b16 %v179
      %v237 = vunpack.c.l.b16 %v180
      %v238 = vunpack.c.h.b16 %v180
      %v239 = vunpack.c.l.b16 %v181
      %v240 = vunpack.c.h.b16 %v181
      %v241 = vunpack.c.l.b16 %v182
      %v242 = vunpack.c.h.b16 %v182
      %v243 = vunpack.c.l.b16 %v183
      %v244 = vunpack.c.h.b16 %v183
      %v245 = vunpack.c.l.b16 %v184
      %v246 = vunpack.c.h.b16 %v184
      %v247 = vunpack.c.l.b16 %v185
      %v248 = vunpack.c.h.b16 %v185
      %v249 = vunpack.c.l.b16 %v186
      %v250 = vunpack.c.h.b16 %v186
      %v251 = vunpack.c.l.b16 %v187
      %v252 = vunpack.c.h.b16 %v187
      %v253 = vunpack.c.l.b16 %v188
      %v254 = vunpack.c.h.b16 %v188
      %v255 = vunpack.c.l.b16 %v189
      %v256 = vunpack.c.h.b16 %v189
      %v257 = vunpack.c.l.b16 %v190
      %v258 = vunpack.c.h.b16 %v190
      %v259 = vunpack.c.l.b16 %v191
      %v260 = vunpack.c.h.b16 %v191
      %v261 = vunpack.c.l.b16 %v192
      %v262 = vunpack.c.h.b16 %v192
      %v263 = vunpack.c.l.b16 %v193
      %v264 = vunpack.c.h.b16 %v193
      %v265 = vpack.c.b16 %v235, %v233
      %v266 = vpack.c.b16 %v236, %v234
      %v267 = vpack.c.b16 %v239, %v237
      %v268 = vpack.c.b16 %v240, %v238
      %v269 = vpack.c.b16 %v243, %v241
      %v270 = vpack.c.b16 %v244, %v242
      %v271 = vpack.c.b16 %v247, %v245
      %v272 = vpack.c.b16 %v248, %v246
      %v273 = vpack.c.b16 %v251, %v249
      %v274 = vpack.c.b16 %v252, %v250
      %v275 = vpack.c.b16 %v255, %v253
      %v276 = vpack.c.b16 %v256, %v254
      %v277 = vpack.c.b16 %v259, %v257
      %v278 = vpack.c.b16 %v260, %v258
      %v279 = vpack.c.b16 %v263, %v261
      %v280 = vpack.c.b16 %v264, %v262
      %v308 = vunpack.c.l.b16 %v194
      %v309 = vunpack.c.l.b16 %v195
      %v310 = vunpack.c.l.b16 %v196
      %v311 = vunpack.c.l.b16 %v197
      %v312 = vunpack.c.l.b16 %v198
      %v313 = vunpack.c.l.b16 %v199
      %v314 = vunpack.c.l.b16 %v200
      %v315 = vunpack.c.l.b16 %v201
      %v316 = vunpack.c.l.b16 %v202
      %v317 = vunpack.c.l.b16 %v203
      %v318 = vunpack.c.l.b16 %v204
      %v319 = vunpack.c.l.b16 %v205
      %v320 = vunpack.c.l.b16 %v206
      %v321 = vunpack.c.l.b16 %v207
      %v322 = vunpack.c.l.b16 %v208
      %v323 = vunpack.c.l.b16 %v209
      %v324 = vunpack.c.l.b16 %v210
      %v325 = vunpack.c.l.b16 %v211
      %v326 = vunpack.c.l.b16 %v212
      %v327 = vpack.c.b16 %v309, %v308
      %v328 = vpack.c.b16 %v311, %v310
      %v329 = vpack.c.b16 %v313, %v312
      %v330 = vpack.c.b16 %v315, %v314
      %v331 = vpack.c.b16 %v317, %v316
      %v332 = vpack.c.b16 %v319, %v318
      %v333 = vpack.c.b16 %v321, %v320
      %v334 = vpack.c.b16 %v323, %v322
      %v335 = vpack.c.b16 %v325, %v324
      %v336 = vpack.c.b16 %v326, %v326
      %vm346 = vcmask 154624
      %v348 = vsel %vm346, %v266, 0
      %v351 = vsel %vm346, %v268, 0
      %v354 = vsel %vm346, %v270, 0
      %v357 = vsel %vm346, %v272, 0
      %v360 = vsel %vm346, %v274, 0
      %v363 = vsel %vm346, %v276, 0
      %v366 = vsel %vm346, %v278, 0
      %v369 = vsel %vm346, %v280, 0
      %vm371 = vcmask 1040384
      %vm372 = vcmask 1041408
      %v373 = vsel %vm371, 4294967295, 65535
      %v374 = vsel %vm372, %v373, 0
      %v376 = vand.u32 %v336, %v374
      %378 = vmatpush.bf16.msra.mxu0 %v334
      %379 = vmatpush.bf16.msra.mxu0 %v333
      %380 = vmatpush.bf16.msra.mxu0 %v332
      %381 = vmatpush.bf16.msra.mxu0 %v331
      %382 = vmatpush.bf16.msra.mxu0 %v330
      %383 = vmatpush.bf16.msra.mxu0 %v329
      %384 = vmatpush.bf16.msra.mxu0 %v328
      %385 = vmatpush.bf16.msra.mxu0 %v327
      %386 = vmatmul.bf16.gmra.mxu0 %v265
      %v387 = vpop.f32.mrf.mxu0
      %v388 = vadd.f32 %v215, %v387
      %v389 = vpop.f32.mrf.mxu0
      %v390 = vadd.f32 %v215, %v389
      %391 = vmatmul.bf16.gmra.mxu0 %v267
      %v392 = vpop.f32.mrf.mxu0
      %v393 = vadd.f32 %v215, %v392
      %v394 = vpop.f32.mrf.mxu0
      %v395 = vadd.f32 %v215, %v394
      %396 = vmatmul.bf16.gmra.mxu0 %v269
      %v397 = vpop.f32.mrf.mxu0
      %v398 = vadd.f32 %v215, %v397
      %v399 = vpop.f32.mrf.mxu0
      %v400 = vadd.f32 %v215, %v399
      %401 = vmatmul.bf16.gmra.mxu0 %v271
      %v402 = vpop.f32.mrf.mxu0
      %v403 = vadd.f32 %v215, %v402
      %v404 = vpop.f32.mrf.mxu0
      %v405 = vadd.f32 %v215, %v404
      %406 = vmatmul.bf16.gmra.mxu0 %v273
      %v407 = vpop.f32.mrf.mxu0
      %v408 = vadd.f32 %v215, %v407
      %v409 = vpop.f32.mrf.mxu0
      %v410 = vadd.f32 %v215, %v409
      %411 = vmatmul.bf16.gmra.mxu0 %v275
      %v412 = vpop.f32.mrf.mxu0
      %v413 = vadd.f32 %v215, %v412
      %v414 = vpop.f32.mrf.mxu0
      %v415 = vadd.f32 %v215, %v414
      %416 = vmatmul.bf16.gmra.mxu0 %v277
      %v417 = vpop.f32.mrf.mxu0
      %v418 = vadd.f32 %v215, %v417
      %v419 = vpop.f32.mrf.mxu0
      %v420 = vadd.f32 %v215, %v419
      %421 = vmatmul.bf16.gmra.mxu0 %v279
      %v422 = vpop.f32.mrf.mxu0
      %v423 = vadd.f32 %v215, %v422
      %v424 = vpop.f32.mrf.mxu0
      %v425 = vadd.f32 %v215, %v424
      %426 = vdwg.mxu0
      %427 = vmatpush.bf16.msra.mxu0 0
      %428 = vmatpush.bf16.msra.mxu0 0
      %429 = vmatpush.bf16.msra.mxu0 0
      %430 = vmatpush.bf16.msra.mxu0 0
      %431 = vmatpush.bf16.msra.mxu0 0
      %432 = vmatpush.bf16.msra.mxu0 0
      %433 = vmatpush.bf16.msra.mxu0 %v376
      %434 = vmatpush.bf16.msra.mxu0 %v335
      %435 = vmatmul.bf16.gmra.mxu0 %v348
      %v436 = vpop.f32.mrf.mxu0
      %v437 = vadd.f32 %v388, %v436
      %v438 = vpop.f32.mrf.mxu0
      %v439 = vadd.f32 %v390, %v438
      %440 = vmatmul.bf16.gmra.mxu0 %v351
      %v441 = vpop.f32.mrf.mxu0
      %v442 = vadd.f32 %v393, %v441
      %v443 = vpop.f32.mrf.mxu0
      %v444 = vadd.f32 %v395, %v443
      %445 = vmatmul.bf16.gmra.mxu0 %v354
      %v446 = vpop.f32.mrf.mxu0
      %v447 = vadd.f32 %v398, %v446
      %v448 = vpop.f32.mrf.mxu0
      %v449 = vadd.f32 %v400, %v448
      %450 = vmatmul.bf16.gmra.mxu0 %v357
      %v451 = vpop.f32.mrf.mxu0
      %v452 = vadd.f32 %v403, %v451
      %v453 = vpop.f32.mrf.mxu0
      %v454 = vadd.f32 %v405, %v453
      %455 = vmatmul.bf16.gmra.mxu0 %v360
      %v456 = vpop.f32.mrf.mxu0
      %v457 = vadd.f32 %v408, %v456
      %v458 = vpop.f32.mrf.mxu0
      %v459 = vadd.f32 %v410, %v458
      %460 = vmatmul.bf16.gmra.mxu0 %v363
      %v461 = vpop.f32.mrf.mxu0
      %v462 = vadd.f32 %v413, %v461
      %v463 = vpop.f32.mrf.mxu0
      %v464 = vadd.f32 %v415, %v463
      %465 = vmatmul.bf16.gmra.mxu0 %v366
      %v466 = vpop.f32.mrf.mxu0
      %v467 = vadd.f32 %v418, %v466
      %v468 = vpop.f32.mrf.mxu0
      %v469 = vadd.f32 %v420, %v468
      %470 = vmatmul.bf16.gmra.mxu0 %v369
      %v471 = vpop.f32.mrf.mxu0
      %v472 = vadd.f32 %v423, %v471
      %v473 = vpop.f32.mrf.mxu0
      %v474 = vadd.f32 %v425, %v473
      %475 = vdwg.mxu0
      %v476 = vmax.f32 %v437, 0.0
      %v477 = vmax.f32 %v439, 0.0
      %v478 = vmax.f32 %v442, 0.0
      %v479 = vmax.f32 %v444, 0.0
      %v480 = vmax.f32 %v447, 0.0
      %v481 = vmax.f32 %v449, 0.0
      %v482 = vmax.f32 %v452, 0.0
      %v483 = vmax.f32 %v454, 0.0
      %v484 = vmax.f32 %v457, 0.0
      %v485 = vmax.f32 %v459, 0.0
      %v486 = vmax.f32 %v462, 0.0
      %v487 = vmax.f32 %v464, 0.0
      %v488 = vmax.f32 %v467, 0.0
      %v489 = vmax.f32 %v469, 0.0
      %v490 = vmax.f32 %v472, 0.0
      %v491 = vmax.f32 %v474, 0.0
      %v492 = vpack.c.bf16 %v476, %v476
      %v493 = vpack.c.bf16 %v477, %v477
      %v494 = vpack.c.bf16 %v478, %v478
      %v495 = vpack.c.bf16 %v479, %v479
      %v496 = vpack.c.bf16 %v480, %v480
      %v497 = vpack.c.bf16 %v481, %v481
      %v498 = vpack.c.bf16 %v482, %v482
      %v499 = vpack.c.bf16 %v483, %v483
      %v500 = vpack.c.bf16 %v484, %v484
      %v501 = vpack.c.bf16 %v485, %v485
      %v502 = vpack.c.bf16 %v486, %v486
      %v503 = vpack.c.bf16 %v487, %v487
      %v504 = vpack.c.bf16 %v488, %v488
      %v505 = vpack.c.bf16 %v489, %v489
      %v506 = vpack.c.bf16 %v490, %v490
      %v507 = vpack.c.bf16 %v491, %v491
      %vm508 = vcmask 257024
      %509 = vst.msk [vmem:[%s175] sm:$0xf] %vm508, %v492
      %510 = vst.msk [vmem:[%s175 + $0x4] sm:$0xf] %vm508, %v493
      %511 = vst.msk [vmem:[%s175 + $0x8] sm:$0xf] %vm508, %v494
      %512 = vst.msk [vmem:[%s175 + $0xc] sm:$0xf] %vm508, %v495
      %513 = vst.msk [vmem:[%s175 + $0x10] sm:$0xf] %vm508, %v496
      %514 = vst.msk [vmem:[%s175 + $0x14] sm:$0xf] %vm508, %v497
      %515 = vst.msk [vmem:[%s175 + $0x18] sm:$0xf] %vm508, %v498
      %516 = vst.msk [vmem:[%s175 + $0x1c] sm:$0xf] %vm508, %v499
      %517 = vst.msk [vmem:[%s175 + $0x20] sm:$0xf] %vm508, %v500
      %518 = vst.msk [vmem:[%s175 + $0x24] sm:$0xf] %vm508, %v501
      %519 = vst.msk [vmem:[%s175 + $0x28] sm:$0xf] %vm508, %v502
      %520 = vst.msk [vmem:[%s175 + $0x2c] sm:$0xf] %vm508, %v503
      %521 = vst.msk [vmem:[%s175 + $0x30] sm:$0xf] %vm508, %v504
      %522 = vst.msk [vmem:[%s175 + $0x34] sm:$0xf] %vm508, %v505
      %523 = vst.msk [vmem:[%s175 + $0x38] sm:$0xf] %vm508, %v506
      %524 = vst.msk [vmem:[%s175 + $0x3c] sm:$0xf] %vm508, %v507
      %s525 = smul.u32 16, %s14
      %p526 = scmp.lt.s32.totalorder %s525, 63
      %s527 = scalar_select %p526, %s525, 63
      %s528 = smul.addr %s527, 4
      %s529 = scalar_lea.vmem %s3, %s528
      // Predicated region
      $region33: #{convo_classifier_forward.9} parent=31 // pred_check
        %p530 = pneg %p100
      $region34: #{convo_classifier_forward.9} parent=31 // pred_check_branch
        %532 = sbr.rel (%p530) target = $region36
      $region35: #{convo_classifier_forward.9} parent=31 // pred_region
        %s533 = smul.u32 16, %s14
      $region36: #{convo_classifier_forward.9} parent=31 // pred_fallthru
        _
    $region32: #{convo_classifier_forward.9} parent=5 // pred_fallthru
      _
    %p534 = scmp.le.s32.totalorder 2, %s9
    // Predicated region
    $region37: #{convo_classifier_forward.9} parent=5 // pred_check
      %p535 = pneg %p534
    $region38: #{convo_classifier_forward.9} parent=5 // pred_check_branch
      %537 = sbr.rel (%p535) target = $region40
    $region39: #{convo_classifier_forward.9} parent=5 // pred_region
      %s538 = ssub.s32 %s9, 2
      // Predicated region
      $region41: #{convo_classifier_forward.9} parent=39 // pred_check
        %p539 = pneg %p106
      $region42: #{convo_classifier_forward.9} parent=39 // pred_check_branch
        %541 = sbr.rel (%p539) target = $region44
      $region43: #{convo_classifier_forward.9} parent=39 // pred_region
        %s542 = smul.u32 16, %s15
        %p543 = scmp.lt.s32.totalorder %s542, 63
        %s544 = scalar_select %p543, %s542, 63
        %s545 = smul.addr %s544, 4
        %s546 = scalar_lea.vmem %s3, %s545
      $region44: #{convo_classifier_forward.9} parent=39 // pred_fallthru
        _
    $region40: #{convo_classifier_forward.9} parent=5 // pred_fallthru
      _
  $region6: #{convo_classifier_forward.9} parent=0 // loop_footer
    %s13 = sadd.s32 1, %s9
  $region7: #{convo_classifier_forward.9} parent=0 // loop_footer_branch
    %8 = sbr.rel target = $region3
  $region8: #{convo_classifier_forward.9} parent=0 // loop_exit
    _

// kernel: convo_classifier_forward.10
$region0: #{convo_classifier_forward.10}
  #allocation0 [shape = 'u32[]', space=smem, size = 0x4, offset = 0x4, fixed_abs, tag = 'smem constant byte address 0x4 - core index']
  #allocation1 [shape = 'u32[72,128]{1,0:T(1,128)}', space=vmem, size = 0x9000, scoped, tag = 'internal scratch']
  %s0 = inlined_call_operand.vmem [shape: bf16[2,168,32], index: 0, kind: input, shape index: {}]
  %s1 = inlined_call_operand.vmem [shape: bf16[2,168,32], index: 1, kind: input, shape index: {}]
  %s2 = inlined_call_operand.vmem [shape: bf16[2,144,32], index: 2, kind: output, shape index: {}]
  %s3 = sld [smem:[#allocation0]]
  $region41: #{convo_classifier_forward.10} parent=0
    _
  %s5 = ssub.s32 1, %s3
  %s6 = scalar_select 0, %s5, %s3
  loop: start=0, step=1, limit=4
  $region2: #{convo_classifier_forward.10} parent=0 // loop_pre_header
    _
  $region3: #{convo_classifier_forward.10} parent=0 // loop_header
    %s8 = sphi 0, %s12
    %p9 = scmp.ge.s32.totalorder %s8, 4
    %s18 = sphi 0, %s20
    %s21 = sphi 0, %s18
    %s22 = sphi 0, %s21
    %s38 = sphi 0, %s22
    %s44 = sphi 0, %s46
    %s47 = sphi 0, %s44
    %s48 = sphi 0, %s47
    %s64 = sphi 0, %s48
    %s70 = sphi 0, %s72
    %s73 = sphi 0, %s70
    %s74 = sphi 0, %s73
    %s90 = sphi 0, %s74
  $region4: #{convo_classifier_forward.10} parent=0 // loop_header_branch
    %11 = sbr.rel (%p9) target = $region8
  $region5: #{convo_classifier_forward.10} parent=0 // loop_body
    %s13 = ssub.s32 %s8, 1
    %s14 = ssub.s32 %s8, 2
    %s15 = sadd.s32 %s8, 1
    %s16 = ssub.s32 %s8, %s15
    %p17 = scmp.eq.s32.totalorder %s16, 0
    %s19 = sadd.s32 %s18, 1
    %s20 = scalar_select %p17, %s18, %s19
    %p23 = pneg %p17
    %p24 = scmp.eq.s32.totalorder %s8, 1
    %p25 = por %p23, %p24
    %p26 = scmp.ne.s32.totalorder %s18, %s21
    %p27 = scmp.eq.s32.totalorder %s8, 0
    %p28 = por %p26, %p27
    %p29 = scmp.ne.s32.totalorder %s18, %s21
    %p30 = scmp.eq.s32.totalorder %s13, 1
    %p31 = por %p29, %p30
    %p32 = scmp.ne.s32.totalorder %s21, %s22
    %p33 = scmp.eq.s32.totalorder %s13, 0
    %p34 = por %p32, %p33
    %p35 = scmp.ne.s32.totalorder %s21, %s22
    %p36 = scmp.eq.s32.totalorder %s14, 1
    %p37 = por %p35, %p36
    %p39 = scmp.ne.s32.totalorder %s22, %s38
    %p40 = scmp.eq.s32.totalorder %s14, 0
    %p41 = por %p39, %p40
    %s42 = ssub.s32 %s8, %s15
    %p43 = scmp.eq.s32.totalorder %s42, 0
    %s45 = sadd.s32 %s44, 1
    %s46 = scalar_select %p43, %s44, %s45
    %p49 = pneg %p43
    %p50 = scmp.eq.s32.totalorder %s8, 1
    %p51 = por %p49, %p50
    %p52 = scmp.ne.s32.totalorder %s44, %s47
    %p53 = scmp.eq.s32.totalorder %s8, 0
    %p54 = por %p52, %p53
    %p55 = scmp.ne.s32.totalorder %s44, %s47
    %p56 = scmp.eq.s32.totalorder %s13, 1
    %p57 = por %p55, %p56
    %p58 = scmp.ne.s32.totalorder %s47, %s48
    %p59 = scmp.eq.s32.totalorder %s13, 0
    %p60 = por %p58, %p59
    %p61 = scmp.ne.s32.totalorder %s47, %s48
    %p62 = scmp.eq.s32.totalorder %s14, 1
    %p63 = por %p61, %p62
    %p65 = scmp.ne.s32.totalorder %s48, %s64
    %p66 = scmp.eq.s32.totalorder %s14, 0
    %p67 = por %p65, %p66
    %s68 = ssub.s32 %s8, %s15
    %p69 = scmp.eq.s32.totalorder %s68, 0
    %s71 = sadd.s32 %s70, 1
    %s72 = scalar_select %p69, %s70, %s71
    %p75 = pneg %p69
    %p76 = scmp.eq.s32.totalorder %s8, 1
    %p77 = por %p75, %p76
    %p78 = scmp.ne.s32.totalorder %s70, %s73
    %p79 = scmp.eq.s32.totalorder %s8, 0
    %p80 = por %p78, %p79
    %p81 = scmp.ne.s32.totalorder %s70, %s73
    %p82 = scmp.eq.s32.totalorder %s13, 1
    %p83 = por %p81, %p82
    %p84 = scmp.ne.s32.totalorder %s73, %s74
    %p85 = scmp.eq.s32.totalorder %s13, 0
    %p86 = por %p84, %p85
    %p87 = scmp.ne.s32.totalorder %s73, %s74
    %p88 = scmp.eq.s32.totalorder %s14, 1
    %p89 = por %p87, %p88
    %p91 = scmp.ne.s32.totalorder %s74, %s90
    %p92 = scmp.eq.s32.totalorder %s14, 0
    %p93 = por %p91, %p92
    %p94 = scmp.le.s32.totalorder 1, %s8
    %p95 = scmp.lt.s32.totalorder %s8, 3
    %p96 = pnand %p94, %p95
    %p97 = pneg %p96
    // Predicated region
    $region9: #{convo_classifier_forward.10} parent=5 // pred_check
      _
    $region10: #{convo_classifier_forward.10} parent=5 // pred_check_branch
      %99 = sbr.rel (%p96) target = $region12
    $region11: #{convo_classifier_forward.10} parent=5 // pred_region
      %s100 = ssub.s32 %s8, 1
    $region12: #{convo_classifier_forward.10} parent=5 // pred_fallthru
      _
    %p101 = scmp.lt.s32.totalorder %s8, 2
    // Predicated region
    $region13: #{convo_classifier_forward.10} parent=5 // pred_check
      %p102 = pneg %p101
    $region14: #{convo_classifier_forward.10} parent=5 // pred_check_branch
      %104 = sbr.rel (%p102) target = $region16
    $region15: #{convo_classifier_forward.10} parent=5 // pred_region
      // Predicated region
      $region17: #{convo_classifier_forward.10} parent=15 // pred_check
        %p105 = pneg %p28
      $region18: #{convo_classifier_forward.10} parent=15 // pred_check_branch
        %107 = sbr.rel (%p105) target = $region20
      $region19: #{convo_classifier_forward.10} parent=15 // pred_region
        %p108 = scmp.lt.s32.totalorder %s8, 1
        %s109 = scalar_select %p108, %s8, 1
        %s110 = smul.addr %s109, 21
        %s111 = smul.addr %s110, 4
        %s112 = scalar_lea.vmem %s0, %s111
      $region20: #{convo_classifier_forward.10} parent=15 // pred_fallthru
        _
      // Predicated region
      $region21: #{convo_classifier_forward.10} parent=15 // pred_check
        %p113 = pneg %p54
      $region22: #{convo_classifier_forward.10} parent=15 // pred_check_branch
        %115 = sbr.rel (%p113) target = $region24
      $region23: #{convo_classifier_forward.10} parent=15 // pred_region
        %p116 = scmp.lt.s32.totalorder %s8, 1
        %s117 = scalar_select %p116, %s8, 1
        %s118 = smul.addr %s117, 21
        %s119 = smul.addr %s118, 4
        %s120 = scalar_lea.vmem %s1, %s119
      $region24: #{convo_classifier_forward.10} parent=15 // pred_fallthru
        _
    $region16: #{convo_classifier_forward.10} parent=5 // pred_fallthru
      _
    %p121 = scmp.le.s32.totalorder 1, %s8
    %p122 = scmp.lt.s32.totalorder %s8, 3
    %p123 = pnand %p121, %p122
    %p124 = pneg %p123
    // Predicated region
    $region25: #{convo_classifier_forward.10} parent=5 // pred_check
      _
    $region26: #{convo_classifier_forward.10} parent=5 // pred_check_branch
      %126 = sbr.rel (%p123) target = $region28
    $region27: #{convo_classifier_forward.10} parent=5 // pred_region
      %s127 = ssub.s32 %s8, 1
      %p128 = scmp.lt.s32.totalorder %s13, 1
      %s129 = scalar_select %p128, %s13, 1
      %s130 = smul.addr %s129, 21
      %s131 = smul.addr %s130, 4
      %s132 = scalar_lea.vmem %s0, %s131
      %p133 = pneg %p34
      %p134 = pneg %p31
      %p135 = scmp.lt.s32.totalorder %s13, 1
      %s136 = scalar_select %p135, %s13, 1
      %s137 = smul.addr %s136, 21
      %s138 = smul.addr %s137, 4
      %s139 = scalar_lea.vmem %s1, %s138
      %p140 = pneg %p60
      %p141 = pneg %p57
      %p142 = pneg %p86
      %p143 = pneg %p83
      %p144 = scmp.lt.s32.totalorder %s13, 1
      %s145 = scalar_select %p144, %s13, 1
      %s146 = smul.addr %s145, 18
      %s147 = smul.addr %s146, 4
      %s148 = scalar_lea.vmem %s2, %s147
      %p149 = scmp.lt.s32.totalorder %s13, 1
      %s150 = scalar_select %p149, %s13, 1
      %s151 = smul.addr %s150, 21
      %s152 = smul.addr %s151, 4
      %s153 = scalar_lea.vmem %s0, %s152
      %p154 = scmp.lt.s32.totalorder %s13, 1
      %s155 = scalar_select %p154, %s13, 1
      %s156 = smul.addr %s155, 21
      %s157 = smul.addr %s156, 4
      %s158 = scalar_lea.vmem %s1, %s157
      %p159 = scmp.lt.s32.totalorder %s13, 1
      %s160 = scalar_select %p159, %s13, 1
      %s161 = smul.addr %s160, 18
      %s162 = smul.addr %s161, 4
      %s163 = scalar_lea.vmem %s2, %s162
      %v164 = vld [vmem:[%s153] sm:$0xf]
      %v165 = vld [vmem:[%s153 + $0x4] sm:$0xf]
      %v166 = vld [vmem:[%s153 + $0x8] sm:$0xf]
      %v167 = vld [vmem:[%s153 + $0xc] sm:$0xf]
      %v168 = vld [vmem:[%s153 + $0x10] sm:$0xf]
      %v169 = vld [vmem:[%s153 + $0x14] sm:$0xf]
      %v170 = vld [vmem:[%s153 + $0x18] sm:$0xf]
      %v171 = vld [vmem:[%s153 + $0x1c] sm:$0xf]
      %v172 = vld [vmem:[%s153 + $0x20] sm:$0xf]
      %v173 = vld [vmem:[%s153 + $0x24] sm:$0xf]
      %v174 = vld [vmem:[%s153 + $0x28] sm:$0xf]
      %v175 = vld [vmem:[%s153 + $0x2c] sm:$0xf]
      %v176 = vld [vmem:[%s153 + $0x30] sm:$0xf]
      %v177 = vld [vmem:[%s153 + $0x34] sm:$0xf]
      %v178 = vld [vmem:[%s153 + $0x38] sm:$0xf]
      %v179 = vld [vmem:[%s153 + $0x3c] sm:$0xf]
      %v180 = vld [vmem:[%s153 + $0x40] sm:$0xf]
      %v181 = vld [vmem:[%s153 + $0x44] sm:$0xf]
      %v182 = vld [vmem:[%s158] sm:$0xf]
      %v183 = vld [vmem:[%s158 + $0x4] sm:$0xf]
      %v184 = vld [vmem:[%s158 + $0x8] sm:$0xf]
      %v185 = vld [vmem:[%s158 + $0xc] sm:$0xf]
      %v186 = vld [vmem:[%s158 + $0x10] sm:$0xf]
      %v187 = vld [vmem:[%s158 + $0x14] sm:$0xf]
      %v188 = vld [vmem:[%s158 + $0x18] sm:$0xf]
      %v189 = vld [vmem:[%s158 + $0x1c] sm:$0xf]
      %v190 = vld [vmem:[%s158 + $0x20] sm:$0xf]
      %v191 = vld [vmem:[%s158 + $0x24] sm:$0xf]
      %v192 = vld [vmem:[%s158 + $0x28] sm:$0xf]
      %v193 = vld [vmem:[%s158 + $0x2c] sm:$0xf]
      %v194 = vld [vmem:[%s158 + $0x30] sm:$0xf]
      %v195 = vld [vmem:[%s158 + $0x34] sm:$0xf]
      %v196 = vld [vmem:[%s158 + $0x38] sm:$0xf]
      %v197 = vld [vmem:[%s158 + $0x3c] sm:$0xf]
      %v198 = vld [vmem:[%s158 + $0x40] sm:$0xf]
      %v199 = vld [vmem:[%s158 + $0x44] sm:$0xf]
      %v200 = vunpack.c.l.bf16 %v164
      %v201 = vunpack.c.l.bf16 %v165
      %v202 = vunpack.c.l.bf16 %v166
      %v203 = vunpack.c.l.bf16 %v167
      %v204 = vunpack.c.l.bf16 %v168
      %v205 = vunpack.c.l.bf16 %v169
      %v206 = vunpack.c.l.bf16 %v170
      %v207 = vunpack.c.l.bf16 %v171
      %v208 = vunpack.c.l.bf16 %v172
      %v209 = vunpack.c.l.bf16 %v173
      %v210 = vunpack.c.l.bf16 %v174
      %v211 = vunpack.c.l.bf16 %v175
      %v212 = vunpack.c.l.bf16 %v176
      %v213 = vunpack.c.l.bf16 %v177
      %v214 = vunpack.c.l.bf16 %v178
      %v215 = vunpack.c.l.bf16 %v179
      %v216 = vunpack.c.l.bf16 %v180
      %v217 = vunpack.c.l.bf16 %v181
      %v218 = vunpack.c.l.bf16 %v182
      %v219 = vunpack.c.l.bf16 %v183
      %v220 = vunpack.c.l.bf16 %v184
      %v221 = vunpack.c.l.bf16 %v185
      %v222 = vunpack.c.l.bf16 %v186
      %v223 = vunpack.c.l.bf16 %v187
      %v224 = vunpack.c.l.bf16 %v188
      %v225 = vunpack.c.l.bf16 %v189
      %v226 = vunpack.c.l.bf16 %v190
      %v227 = vunpack.c.l.bf16 %v191
      %v228 = vunpack.c.l.bf16 %v192
      %v229 = vunpack.c.l.bf16 %v193
      %v230 = vunpack.c.l.bf16 %v194
      %v231 = vunpack.c.l.bf16 %v195
      %v232 = vunpack.c.l.bf16 %v196
      %v233 = vunpack.c.l.bf16 %v197
      %v234 = vunpack.c.l.bf16 %v198
      %v235 = vunpack.c.l.bf16 %v199
      %v236 = vmax.f32 %v200, %v218
      %v237 = vmax.f32 %v201, %v219
      %v238 = vmax.f32 %v202, %v220
      %v239 = vmax.f32 %v203, %v221
      %v240 = vmax.f32 %v204, %v222
      %v241 = vmax.f32 %v205, %v223
      %v242 = vmax.f32 %v206, %v224
      %v243 = vmax.f32 %v207, %v225
      %v244 = vmax.f32 %v208, %v226
      %v245 = vmax.f32 %v209, %v227
      %v246 = vmax.f32 %v210, %v228
      %v247 = vmax.f32 %v211, %v229
      %v248 = vmax.f32 %v212, %v230
      %v249 = vmax.f32 %v213, %v231
      %v250 = vmax.f32 %v214, %v232
      %v251 = vmax.f32 %v215, %v233
      %v252 = vmax.f32 %v216, %v234
      %v253 = vmax.f32 %v217, %v235
      %v254 = vpack.c.bf16 %v236, %v236
      %v255 = vpack.c.bf16 %v237, %v237
      %v256 = vpack.c.bf16 %v238, %v238
      %v257 = vpack.c.bf16 %v239, %v239
      %v258 = vpack.c.bf16 %v240, %v240
      %v259 = vpack.c.bf16 %v241, %v241
      %v260 = vpack.c.bf16 %v242, %v242
      %v261 = vpack.c.bf16 %v243, %v243
      %v262 = vpack.c.bf16 %v244, %v244
      %v263 = vpack.c.bf16 %v245, %v245
      %v264 = vpack.c.bf16 %v246, %v246
      %v265 = vpack.c.bf16 %v247, %v247
      %v266 = vpack.c.bf16 %v248, %v248
      %v267 = vpack.c.bf16 %v249, %v249
      %v268 = vpack.c.bf16 %v250, %v250
      %v269 = vpack.c.bf16 %v251, %v251
      %v270 = vpack.c.bf16 %v252, %v252
      %v271 = vpack.c.bf16 %v253, %v253
      %v272 = vld [vmem:[%s153 + $0x48] sm:$0x1]
      %v273 = vunpack.c.l.bf16 %v254
      %v274 = vunpack.c.l.bf16 %v255
      %v275 = vunpack.c.l.bf16 %v256
      %v276 = vunpack.c.l.bf16 %v257
      %v277 = vunpack.c.l.bf16 %v258
      %v278 = vunpack.c.l.bf16 %v259
      %v279 = vunpack.c.l.bf16 %v260
      %v280 = vunpack.c.l.bf16 %v261
      %v281 = vunpack.c.l.bf16 %v262
      %v282 = vunpack.c.l.bf16 %v263
      %v283 = vunpack.c.l.bf16 %v264
      %v284 = vunpack.c.l.bf16 %v265
      %v285 = vunpack.c.l.bf16 %v266
      %v286 = vunpack.c.l.bf16 %v267
      %v287 = vunpack.c.l.bf16 %v268
      %v288 = vunpack.c.l.bf16 %v269
      %v289 = vunpack.c.l.bf16 %v270
      %v290 = vunpack.c.l.bf16 %v271
      %v291 = vunpack.c.l.bf16 %v272
      %vm311 = vcmask 1046528
      %v312 = vrot.slane %v200, 1
      %v313 = vrot.slane %v201, 1
      %v314 = vsel %vm311, %v312, %v313
      %v315 = vrot.slane %v202, 1
      %v316 = vsel %vm311, %v313, %v315
      %v317 = vrot.slane %v203, 1
      %v318 = vsel %vm311, %v315, %v317
      %v319 = vrot.slane %v204, 1
      %v320 = vsel %vm311, %v317, %v319
      %v321 = vrot.slane %v205, 1
      %v322 = vsel %vm311, %v319, %v321
      %v323 = vrot.slane %v206, 1
      %v324 = vsel %vm311, %v321, %v323
      %v325 = vrot.slane %v207, 1
      %v326 = vsel %vm311, %v323, %v325
      %v327 = vrot.slane %v208, 1
      %v328 = vsel %vm311, %v325, %v327
      %v329 = vrot.slane %v209, 1
      %v330 = vsel %vm311, %v327, %v329
      %v331 = vrot.slane %v210, 1
      %v332 = vsel %vm311, %v329, %v331
      %v333 = vrot.slane %v211, 1
      %v334 = vsel %vm311, %v331, %v333
      %v335 = vrot.slane %v212, 1
      %v336 = vsel %vm311, %v333, %v335
      %v337 = vrot.slane %v213, 1
      %v338 = vsel %vm311, %v335, %v337
      %v339 = vrot.slane %v214, 1
      %v340 = vsel %vm311, %v337, %v339
      %v341 = vrot.slane %v215, 1
      %v342 = vsel %vm311, %v339, %v341
      %v343 = vrot.slane %v216, 1
      %v344 = vsel %vm311, %v341, %v343
      %v345 = vrot.slane %v217, 1
      %v346 = vsel %vm311, %v343, %v345
      %v347 = vrot.slane %v291, 1
      %v348 = vsel %vm311, %v345, %v347
      %v367 = vmax.f32 %v273, %v314
      %v368 = vmax.f32 %v274, %v316
      %v369 = vmax.f32 %v275, %v318
      %v370 = vmax.f32 %v276, %v320
      %v371 = vmax.f32 %v277, %v322
      %v372 = vmax.f32 %v278, %v324
      %v373 = vmax.f32 %v279, %v326
      %v374 = vmax.f32 %v280, %v328
      %v375 = vmax.f32 %v281, %v330
      %v376 = vmax.f32 %v282, %v332
      %v377 = vmax.f32 %v283, %v334
      %v378 = vmax.f32 %v284, %v336
      %v379 = vmax.f32 %v285, %v338
      %v380 = vmax.f32 %v286, %v340
      %v381 = vmax.f32 %v287, %v342
      %v382 = vmax.f32 %v288, %v344
      %v383 = vmax.f32 %v289, %v346
      %v384 = vmax.f32 %v290, %v348
      %v385 = vpack.c.bf16 %v367, %v367
      %v386 = vpack.c.bf16 %v368, %v368
      %v387 = vpack.c.bf16 %v369, %v369
      %v388 = vpack.c.bf16 %v370, %v370
      %v389 = vpack.c.bf16 %v371, %v371
      %v390 = vpack.c.bf16 %v372, %v372
      %v391 = vpack.c.bf16 %v373, %v373
      %v392 = vpack.c.bf16 %v374, %v374
      %v393 = vpack.c.bf16 %v375, %v375
      %v394 = vpack.c.bf16 %v376, %v376
      %v395 = vpack.c.bf16 %v377, %v377
      %v396 = vpack.c.bf16 %v378, %v378
      %v397 = vpack.c.bf16 %v379, %v379
      %v398 = vpack.c.bf16 %v380, %v380
      %v399 = vpack.c.bf16 %v381, %v381
      %v400 = vpack.c.bf16 %v382, %v382
      %v401 = vpack.c.bf16 %v383, %v383
      %v402 = vpack.c.bf16 %v384, %v384
      %v403 = vld [vmem:[%s153 + $0x48] sm:$0xf]
      %v404 = vld [vmem:[%s153 + $0x4c] sm:$0x1]
      %v405 = vunpack.c.l.bf16 %v385
      %v406 = vunpack.c.l.bf16 %v386
      %v407 = vunpack.c.l.bf16 %v387
      %v408 = vunpack.c.l.bf16 %v388
      %v409 = vunpack.c.l.bf16 %v389
      %v410 = vunpack.c.l.bf16 %v390
      %v411 = vunpack.c.l.bf16 %v391
      %v412 = vunpack.c.l.bf16 %v392
      %v413 = vunpack.c.l.bf16 %v393
      %v414 = vunpack.c.l.bf16 %v394
      %v415 = vunpack.c.l.bf16 %v395
      %v416 = vunpack.c.l.bf16 %v396
      %v417 = vunpack.c.l.bf16 %v397
      %v418 = vunpack.c.l.bf16 %v398
      %v419 = vunpack.c.l.bf16 %v399
      %v420 = vunpack.c.l.bf16 %v400
      %v421 = vunpack.c.l.bf16 %v401
      %v422 = vunpack.c.l.bf16 %v402
      %v423 = vunpack.c.l.bf16 %v403
      %v424 = vunpack.c.l.bf16 %v404
      %v427 = vrot.slane %v423, 1
      %v428 = vsel %vm311, %v345, %v427
      %v429 = vrot.slane %v424, 1
      %v430 = vsel %vm311, %v427, %v429
      %v433 = vmax.f32 %v405, %v316
      %v434 = vmax.f32 %v406, %v318
      %v435 = vmax.f32 %v407, %v320
      %v436 = vmax.f32 %v408, %v322
      %v437 = vmax.f32 %v409, %v324
      %v438 = vmax.f32 %v410, %v326
      %v439 = vmax.f32 %v411, %v328
      %v440 = vmax.f32 %v412, %v330
      %v441 = vmax.f32 %v413, %v332
      %v442 = vmax.f32 %v414, %v334
      %v443 = vmax.f32 %v415, %v336
      %v444 = vmax.f32 %v416, %v338
      %v445 = vmax.f32 %v417, %v340
      %v446 = vmax.f32 %v418, %v342
      %v447 = vmax.f32 %v419, %v344
      %v448 = vmax.f32 %v420, %v346
      %v449 = vmax.f32 %v421, %v428
      %v450 = vmax.f32 %v422, %v430
      %v451 = vpack.c.bf16 %v433, %v433
      %v452 = vpack.c.bf16 %v434, %v434
      %v453 = vpack.c.bf16 %v435, %v435
      %v454 = vpack.c.bf16 %v436, %v436
      %v455 = vpack.c.bf16 %v437, %v437
      %v456 = vpack.c.bf16 %v438, %v438
      %v457 = vpack.c.bf16 %v439, %v439
      %v458 = vpack.c.bf16 %v440, %v440
      %v459 = vpack.c.bf16 %v441, %v441
      %v460 = vpack.c.bf16 %v442, %v442
      %v461 = vpack.c.bf16 %v443, %v443
      %v462 = vpack.c.bf16 %v444, %v444
      %v463 = vpack.c.bf16 %v445, %v445
      %v464 = vpack.c.bf16 %v446, %v446
      %v465 = vpack.c.bf16 %v447, %v447
      %v466 = vpack.c.bf16 %v448, %v448
      %v467 = vpack.c.bf16 %v449, %v449
      %v468 = vpack.c.bf16 %v450, %v450
      %v469 = vld [vmem:[%s158 + $0x48] sm:$0xf]
      %v470 = vld [vmem:[%s158 + $0x4c] sm:$0x1]
      %v471 = vunpack.c.l.bf16 %v451
      %v472 = vunpack.c.l.bf16 %v452
      %v473 = vunpack.c.l.bf16 %v453
      %v474 = vunpack.c.l.bf16 %v454
      %v475 = vunpack.c.l.bf16 %v455
      %v476 = vunpack.c.l.bf16 %v456
      %v477 = vunpack.c.l.bf16 %v457
      %v478 = vunpack.c.l.bf16 %v458
      %v479 = vunpack.c.l.bf16 %v459
      %v480 = vunpack.c.l.bf16 %v460
      %v481 = vunpack.c.l.bf16 %v461
      %v482 = vunpack.c.l.bf16 %v462
      %v483 = vunpack.c.l.bf16 %v463
      %v484 = vunpack.c.l.bf16 %v464
      %v485 = vunpack.c.l.bf16 %v465
      %v486 = vunpack.c.l.bf16 %v466
      %v487 = vunpack.c.l.bf16 %v467
      %v488 = vunpack.c.l.bf16 %v468
      %v489 = vunpack.c.l.bf16 %v469
      %v490 = vunpack.c.l.bf16 %v470
      %v510 = vrot.slane %v219, 1
      %v511 = vrot.slane %v220, 1
      %v512 = vsel %vm311, %v510, %v511
      %v513 = vrot.slane %v221, 1
      %v514 = vsel %vm311, %v511, %v513
      %v515 = vrot.slane %v222, 1
      %v516 = vsel %vm311, %v513, %v515
      %v517 = vrot.slane %v223, 1
      %v518 = vsel %vm311, %v515, %v517
      %v519 = vrot.slane %v224, 1
      %v520 = vsel %vm311, %v517, %v519
      %v521 = vrot.slane %v225, 1
      %v522 = vsel %vm311, %v519, %v521
      %v523 = vrot.slane %v226, 1
      %v524 = vsel %vm311, %v521, %v523
      %v525 = vrot.slane %v227, 1
      %v526 = vsel %vm311, %v523, %v525
      %v527 = vrot.slane %v228, 1
      %v528 = vsel %vm311, %v525, %v527
      %v529 = vrot.slane %v229, 1
      %v530 = vsel %vm311, %v527, %v529
      %v531 = vrot.slane %v230, 1
      %v532 = vsel %vm311, %v529, %v531
      %v533 = vrot.slane %v231, 1
      %v534 = vsel %vm311, %v531, %v533
      %v535 = vrot.slane %v232, 1
      %v536 = vsel %vm311, %v533, %v535
      %v537 = vrot.slane %v233, 1
      %v538 = vsel %vm311, %v535, %v537
      %v539 = vrot.slane %v234, 1
      %v540 = vsel %vm311, %v537, %v539
      %v541 = vrot.slane %v235, 1
      %v542 = vsel %vm311, %v539, %v541
      %v543 = vrot.slane %v489, 1
      %v544 = vsel %vm311, %v541, %v543
      %v545 = vrot.slane %v490, 1
      %v546 = vsel %vm311, %v543, %v545
      %v565 = vmax.f32 %v471, %v512
      %v566 = vmax.f32 %v472, %v514
      %v567 = vmax.f32 %v473, %v516
      %v568 = vmax.f32 %v474, %v518
      %v569 = vmax.f32 %v475, %v520
      %v570 = vmax.f32 %v476, %v522
      %v571 = vmax.f32 %v477, %v524
      %v572 = vmax.f32 %v478, %v526
      %v573 = vmax.f32 %v479, %v528
      %v574 = vmax.f32 %v480, %v530
      %v575 = vmax.f32 %v481, %v532
      %v576 = vmax.f32 %v482, %v534
      %v577 = vmax.f32 %v483, %v536
      %v578 = vmax.f32 %v484, %v538
      %v579 = vmax.f32 %v485, %v540
      %v580 = vmax.f32 %v486, %v542
      %v581 = vmax.f32 %v487, %v544
      %v582 = vmax.f32 %v488, %v546
      %v583 = vpack.c.bf16 %v565, %v565
      %v584 = vpack.c.bf16 %v566, %v566
      %v585 = vpack.c.bf16 %v567, %v567
      %v586 = vpack.c.bf16 %v568, %v568
      %v587 = vpack.c.bf16 %v569, %v569
      %v588 = vpack.c.bf16 %v570, %v570
      %v589 = vpack.c.bf16 %v571, %v571
      %v590 = vpack.c.bf16 %v572, %v572
      %v591 = vpack.c.bf16 %v573, %v573
      %v592 = vpack.c.bf16 %v574, %v574
      %v593 = vpack.c.bf16 %v575, %v575
      %v594 = vpack.c.bf16 %v576, %v576
      %v595 = vpack.c.bf16 %v577, %v577
      %v596 = vpack.c.bf16 %v578, %v578
      %v597 = vpack.c.bf16 %v579, %v579
      %v598 = vpack.c.bf16 %v580, %v580
      %v599 = vpack.c.bf16 %v581, %v581
      %v600 = vpack.c.bf16 %v582, %v582
      %v601 = vld [vmem:[%s153 + $0x4] sm:$0xe]
      %v602 = vunpack.c.l.bf16 %v583
      %v603 = vunpack.c.l.bf16 %v584
      %v604 = vunpack.c.l.bf16 %v585
      %v605 = vunpack.c.l.bf16 %v586
      %v606 = vunpack.c.l.bf16 %v587
      %v607 = vunpack.c.l.bf16 %v588
      %v608 = vunpack.c.l.bf16 %v589
      %v609 = vunpack.c.l.bf16 %v590
      %v610 = vunpack.c.l.bf16 %v591
      %v611 = vunpack.c.l.bf16 %v592
      %v612 = vunpack.c.l.bf16 %v593
      %v613 = vunpack.c.l.bf16 %v594
      %v614 = vunpack.c.l.bf16 %v595
      %v615 = vunpack.c.l.bf16 %v596
      %v616 = vunpack.c.l.bf16 %v597
      %v617 = vunpack.c.l.bf16 %v598
      %v618 = vunpack.c.l.bf16 %v599
      %v619 = vunpack.c.l.bf16 %v600
      %v620 = vunpack.c.l.bf16 %v601
      %vm622 = vcmask 1045504
      %v623 = vrot.slane %v620, 2
      %v624 = vrot.slane %v202, 2
      %v625 = vsel %vm622, %v623, %v624
      %v626 = vrot.slane %v203, 2
      %v627 = vsel %vm622, %v624, %v626
      %v628 = vrot.slane %v204, 2
      %v629 = vsel %vm622, %v626, %v628
      %v630 = vrot.slane %v205, 2
      %v631 = vsel %vm622, %v628, %v630
      %v632 = vrot.slane %v206, 2
      %v633 = vsel %vm622, %v630, %v632
      %v634 = vrot.slane %v207, 2
      %v635 = vsel %vm622, %v632, %v634
      %v636 = vrot.slane %v208, 2
      %v637 = vsel %vm622, %v634, %v636
      %v638 = vrot.slane %v209, 2
      %v639 = vsel %vm622, %v636, %v638
      %v640 = vrot.slane %v210, 2
      %v641 = vsel %vm622, %v638, %v640
      %v642 = vrot.slane %v211, 2
      %v643 = vsel %vm622, %v640, %v642
      %v644 = vrot.slane %v212, 2
      %v645 = vsel %vm622, %v642, %v644
      %v646 = vrot.slane %v213, 2
      %v647 = vsel %vm622, %v644, %v646
      %v648 = vrot.slane %v214, 2
      %v649 = vsel %vm622, %v646, %v648
      %v650 = vrot.slane %v215, 2
      %v651 = vsel %vm622, %v648, %v650
      %v652 = vrot.slane %v216, 2
      %v653 = vsel %vm622, %v650, %v652
      %v654 = vrot.slane %v217, 2
      %v655 = vsel %vm622, %v652, %v654
      %v656 = vrot.slane %v423, 2
      %v657 = vsel %vm622, %v654, %v656
      %v658 = vrot.slane %v424, 2
      %v659 = vsel %vm622, %v656, %v658
      %v678 = vmax.f32 %v602, %v625
      %v679 = vmax.f32 %v603, %v627
      %v680 = vmax.f32 %v604, %v629
      %v681 = vmax.f32 %v605, %v631
      %v682 = vmax.f32 %v606, %v633
      %v683 = vmax.f32 %v607, %v635
      %v684 = vmax.f32 %v608, %v637
      %v685 = vmax.f32 %v609, %v639
      %v686 = vmax.f32 %v610, %v641
      %v687 = vmax.f32 %v611, %v643
      %v688 = vmax.f32 %v612, %v645
      %v689 = vmax.f32 %v613, %v647
      %v690 = vmax.f32 %v614, %v649
      %v691 = vmax.f32 %v615, %v651
      %v692 = vmax.f32 %v616, %v653
      %v693 = vmax.f32 %v617, %v655
      %v694 = vmax.f32 %v618, %v657
      %v695 = vmax.f32 %v619, %v659
      %v696 = vpack.c.bf16 %v678, %v678
      %v697 = vpack.c.bf16 %v679, %v679
      %v698 = vpack.c.bf16 %v680, %v680
      %v699 = vpack.c.bf16 %v681, %v681
      %v700 = vpack.c.bf16 %v682, %v682
      %v701 = vpack.c.bf16 %v683, %v683
      %v702 = vpack.c.bf16 %v684, %v684
      %v703 = vpack.c.bf16 %v685, %v685
      %v704 = vpack.c.bf16 %v686, %v686
      %v705 = vpack.c.bf16 %v687, %v687
      %v706 = vpack.c.bf16 %v688, %v688
      %v707 = vpack.c.bf16 %v689, %v689
      %v708 = vpack.c.bf16 %v690, %v690
      %v709 = vpack.c.bf16 %v691, %v691
      %v710 = vpack.c.bf16 %v692, %v692
      %v711 = vpack.c.bf16 %v693, %v693
      %v712 = vpack.c.bf16 %v694, %v694
      %v713 = vpack.c.bf16 %v695, %v695
      %v714 = vld [vmem:[%s153 + $0x8] sm:$0xe]
      %v715 = vld [vmem:[%s153 + $0x4c] sm:$0xf]
      %v716 = vld [vmem:[%s153 + $0x50] sm:$0x1]
      %v717 = vunpack.c.l.bf16 %v696
      %v718 = vunpack.c.l.bf16 %v697
      %v719 = vunpack.c.l.bf16 %v698
      %v720 = vunpack.c.l.bf16 %v699
      %v721 = vunpack.c.l.bf16 %v700
      %v722 = vunpack.c.l.bf16 %v701
      %v723 = vunpack.c.l.bf16 %v702
      %v724 = vunpack.c.l.bf16 %v703
      %v725 = vunpack.c.l.bf16 %v704
      %v726 = vunpack.c.l.bf16 %v705
      %v727 = vunpack.c.l.bf16 %v706
      %v728 = vunpack.c.l.bf16 %v707
      %v729 = vunpack.c.l.bf16 %v708
      %v730 = vunpack.c.l.bf16 %v709
      %v731 = vunpack.c.l.bf16 %v710
      %v732 = vunpack.c.l.bf16 %v711
      %v733 = vunpack.c.l.bf16 %v712
      %v734 = vunpack.c.l.bf16 %v713
      %v735 = vunpack.c.l.bf16 %v714
      %v736 = vunpack.c.l.bf16 %v715
      %v737 = vunpack.c.l.bf16 %v716
      %v741 = vrot.slane %v735, 2
      %v742 = vsel %vm622, %v741, %v626
      %v743 = vrot.slane %v736, 2
      %v744 = vsel %vm622, %v656, %v743
      %v745 = vrot.slane %v737, 2
      %v746 = vsel %vm622, %v743, %v745
      %v750 = vmax.f32 %v717, %v742
      %v751 = vmax.f32 %v718, %v629
      %v752 = vmax.f32 %v719, %v631
      %v753 = vmax.f32 %v720, %v633
      %v754 = vmax.f32 %v721, %v635
      %v755 = vmax.f32 %v722, %v637
      %v756 = vmax.f32 %v723, %v639
      %v757 = vmax.f32 %v724, %v641
      %v758 = vmax.f32 %v725, %v643
      %v759 = vmax.f32 %v726, %v645
      %v760 = vmax.f32 %v727, %v647
      %v761 = vmax.f32 %v728, %v649
      %v762 = vmax.f32 %v729, %v651
      %v763 = vmax.f32 %v730, %v653
      %v764 = vmax.f32 %v731, %v655
      %v765 = vmax.f32 %v732, %v657
      %v766 = vmax.f32 %v733, %v744
      %v767 = vmax.f32 %v734, %v746
      %v768 = vpack.c.bf16 %v750, %v750
      %v769 = vpack.c.bf16 %v751, %v751
      %v770 = vpack.c.bf16 %v752, %v752
      %v771 = vpack.c.bf16 %v753, %v753
      %v772 = vpack.c.bf16 %v754, %v754
      %v773 = vpack.c.bf16 %v755, %v755
      %v774 = vpack.c.bf16 %v756, %v756
      %v775 = vpack.c.bf16 %v757, %v757
      %v776 = vpack.c.bf16 %v758, %v758
      %v777 = vpack.c.bf16 %v759, %v759
      %v778 = vpack.c.bf16 %v760, %v760
      %v779 = vpack.c.bf16 %v761, %v761
      %v780 = vpack.c.bf16 %v762, %v762
      %v781 = vpack.c.bf16 %v763, %v763
      %v782 = vpack.c.bf16 %v764, %v764
      %v783 = vpack.c.bf16 %v765, %v765
      %v784 = vpack.c.bf16 %v766, %v766
      %v785 = vpack.c.bf16 %v767, %v767
      %v786 = vld [vmem:[%s158 + $0x8] sm:$0xe]
      %v787 = vld [vmem:[%s158 + $0x4c] sm:$0xf]
      %v788 = vld [vmem:[%s158 + $0x50] sm:$0x1]
      %v789 = vunpack.c.l.bf16 %v768
      %v790 = vunpack.c.l.bf16 %v769
      %v791 = vunpack.c.l.bf16 %v770
      %v792 = vunpack.c.l.bf16 %v771
      %v793 = vunpack.c.l.bf16 %v772
      %v794 = vunpack.c.l.bf16 %v773
      %v795 = vunpack.c.l.bf16 %v774
      %v796 = vunpack.c.l.bf16 %v775
      %v797 = vunpack.c.l.bf16 %v776
      %v798 = vunpack.c.l.bf16 %v777
      %v799 = vunpack.c.l.bf16 %v778
      %v800 = vunpack.c.l.bf16 %v779
      %v801 = vunpack.c.l.bf16 %v780
      %v802 = vunpack.c.l.bf16 %v781
      %v803 = vunpack.c.l.bf16 %v782
      %v804 = vunpack.c.l.bf16 %v783
      %v805 = vunpack.c.l.bf16 %v784
      %v806 = vunpack.c.l.bf16 %v785
      %v807 = vunpack.c.l.bf16 %v786
      %v808 = vunpack.c.l.bf16 %v787
      %v809 = vunpack.c.l.bf16 %v788
      %v813 = vrot.slane %v807, 2
      %v814 = vrot.slane %v221, 2
      %v815 = vsel %vm622, %v813, %v814
      %v816 = vrot.slane %v222, 2
      %v817 = vsel %vm622, %v814, %v816
      %v818 = vrot.slane %v223, 2
      %v819 = vsel %vm622, %v816, %v818
      %v820 = vrot.slane %v224, 2
      %v821 = vsel %vm622, %v818, %v820
      %v822 = vrot.slane %v225, 2
      %v823 = vsel %vm622, %v820, %v822
      %v824 = vrot.slane %v226, 2
      %v825 = vsel %vm622, %v822, %v824
      %v826 = vrot.slane %v227, 2
      %v827 = vsel %vm622, %v824, %v826
      %v828 = vrot.slane %v228, 2
      %v829 = vsel %vm622, %v826, %v828
      %v830 = vrot.slane %v229, 2
      %v831 = vsel %vm622, %v828, %v830
      %v832 = vrot.slane %v230, 2
      %v833 = vsel %vm622, %v830, %v832
      %v834 = vrot.slane %v231, 2
      %v835 = vsel %vm622, %v832, %v834
      %v836 = vrot.slane %v232, 2
      %v837 = vsel %vm622, %v834, %v836
      %v838 = vrot.slane %v233, 2
      %v839 = vsel %vm622, %v836, %v838
      %v840 = vrot.slane %v234, 2
      %v841 = vsel %vm622, %v838, %v840
      %v842 = vrot.slane %v235, 2
      %v843 = vsel %vm622, %v840, %v842
      %v844 = vrot.slane %v489, 2
      %v845 = vsel %vm622, %v842, %v844
      %v846 = vrot.slane %v808, 2
      %v847 = vsel %vm622, %v844, %v846
      %v848 = vrot.slane %v809, 2
      %v849 = vsel %vm622, %v846, %v848
      %v868 = vmax.f32 %v789, %v815
      %v869 = vmax.f32 %v790, %v817
      %v870 = vmax.f32 %v791, %v819
      %v871 = vmax.f32 %v792, %v821
      %v872 = vmax.f32 %v793, %v823
      %v873 = vmax.f32 %v794, %v825
      %v874 = vmax.f32 %v795, %v827
      %v875 = vmax.f32 %v796, %v829
      %v876 = vmax.f32 %v797, %v831
      %v877 = vmax.f32 %v798, %v833
      %v878 = vmax.f32 %v799, %v835
      %v879 = vmax.f32 %v800, %v837
      %v880 = vmax.f32 %v801, %v839
      %v881 = vmax.f32 %v802, %v841
      %v882 = vmax.f32 %v803, %v843
      %v883 = vmax.f32 %v804, %v845
      %v884 = vmax.f32 %v805, %v847
      %v885 = vmax.f32 %v806, %v849
      %v886 = vpack.c.bf16 %v868, %v868
      %v887 = vpack.c.bf16 %v869, %v869
      %v888 = vpack.c.bf16 %v870, %v870
      %v889 = vpack.c.bf16 %v871, %v871
      %v890 = vpack.c.bf16 %v872, %v872
      %v891 = vpack.c.bf16 %v873, %v873
      %v892 = vpack.c.bf16 %v874, %v874
      %v893 = vpack.c.bf16 %v875, %v875
      %v894 = vpack.c.bf16 %v876, %v876
      %v895 = vpack.c.bf16 %v877, %v877
      %v896 = vpack.c.bf16 %v878, %v878
      %v897 = vpack.c.bf16 %v879, %v879
      %v898 = vpack.c.bf16 %v880, %v880
      %v899 = vpack.c.bf16 %v881, %v881
      %v900 = vpack.c.bf16 %v882, %v882
      %v901 = vpack.c.bf16 %v883, %v883
      %v902 = vpack.c.bf16 %v884, %v884
      %v903 = vpack.c.bf16 %v885, %v885
      %v904 = vld [vmem:[%s153 + $0x50] sm:$0x3]
      %v905 = vunpack.c.l.bf16 %v886
      %v906 = vunpack.c.l.bf16 %v887
      %v907 = vunpack.c.l.bf16 %v888
      %v908 = vunpack.c.l.bf16 %v889
      %v909 = vunpack.c.l.bf16 %v890
      %v910 = vunpack.c.l.bf16 %v891
      %v911 = vunpack.c.l.bf16 %v892
      %v912 = vunpack.c.l.bf16 %v893
      %v913 = vunpack.c.l.bf16 %v894
      %v914 = vunpack.c.l.bf16 %v895
      %v915 = vunpack.c.l.bf16 %v896
      %v916 = vunpack.c.l.bf16 %v897
      %v917 = vunpack.c.l.bf16 %v898
      %v918 = vunpack.c.l.bf16 %v899
      %v919 = vunpack.c.l.bf16 %v900
      %v920 = vunpack.c.l.bf16 %v901
      %v921 = vunpack.c.l.bf16 %v902
      %v922 = vunpack.c.l.bf16 %v903
      %v923 = vunpack.c.l.bf16 %v904
      %vm925 = vcmask 1044480
      %v926 = vrot.slane %v735, 3
      %v927 = vrot.slane %v203, 3
      %v928 = vsel %vm925, %v926, %v927
      %v929 = vrot.slane %v204, 3
      %v930 = vsel %vm925, %v927, %v929
      %v931 = vrot.slane %v205, 3
      %v932 = vsel %vm925, %v929, %v931
      %v933 = vrot.slane %v206, 3
      %v934 = vsel %vm925, %v931, %v933
      %v935 = vrot.slane %v207, 3
      %v936 = vsel %vm925, %v933, %v935
      %v937 = vrot.slane %v208, 3
      %v938 = vsel %vm925, %v935, %v937
      %v939 = vrot.slane %v209, 3
      %v940 = vsel %vm925, %v937, %v939
      %v941 = vrot.slane %v210, 3
      %v942 = vsel %vm925, %v939, %v941
      %v943 = vrot.slane %v211, 3
      %v944 = vsel %vm925, %v941, %v943
      %v945 = vrot.slane %v212, 3
      %v946 = vsel %vm925, %v943, %v945
      %v947 = vrot.slane %v213, 3
      %v948 = vsel %vm925, %v945, %v947
      %v949 = vrot.slane %v214, 3
      %v950 = vsel %vm925, %v947, %v949
      %v951 = vrot.slane %v215, 3
      %v952 = vsel %vm925, %v949, %v951
      %v953 = vrot.slane %v216, 3
      %v954 = vsel %vm925, %v951, %v953
      %v955 = vrot.slane %v217, 3
      %v956 = vsel %vm925, %v953, %v955
      %v957 = vrot.slane %v423, 3
      %v958 = vsel %vm925, %v955, %v957
      %v959 = vrot.slane %v736, 3
      %v960 = vsel %vm925, %v957, %v959
      %v961 = vrot.slane %v923, 3
      %v962 = vsel %vm925, %v959, %v961
      %v981 = vmax.f32 %v905, %v928
      %v982 = vmax.f32 %v906, %v930
      %v983 = vmax.f32 %v907, %v932
      %v984 = vmax.f32 %v908, %v934
      %v985 = vmax.f32 %v909, %v936
      %v986 = vmax.f32 %v910, %v938
      %v987 = vmax.f32 %v911, %v940
      %v988 = vmax.f32 %v912, %v942
      %v989 = vmax.f32 %v913, %v944
      %v990 = vmax.f32 %v914, %v946
      %v991 = vmax.f32 %v915, %v948
      %v992 = vmax.f32 %v916, %v950
      %v993 = vmax.f32 %v917, %v952
      %v994 = vmax.f32 %v918, %v954
      %v995 = vmax.f32 %v919, %v956
      %v996 = vmax.f32 %v920, %v958
      %v997 = vmax.f32 %v921, %v960
      %v998 = vmax.f32 %v922, %v962
      %v999 = vpack.c.bf16 %v981, %v981
      %v1000 = vpack.c.bf16 %v982, %v982
      %v1001 = vpack.c.bf16 %v983, %v983
      %v1002 = vpack.c.bf16 %v984, %v984
      %v1003 = vpack.c.bf16 %v985, %v985
      %v1004 = vpack.c.bf16 %v986, %v986
      %v1005 = vpack.c.bf16 %v987, %v987
      %v1006 = vpack.c.bf16 %v988, %v988
      %v1007 = vpack.c.bf16 %v989, %v989
      %v1008 = vpack.c.bf16 %v990, %v990
      %v1009 = vpack.c.bf16 %v991, %v991
      %v1010 = vpack.c.bf16 %v992, %v992
      %v1011 = vpack.c.bf16 %v993, %v993
      %v1012 = vpack.c.bf16 %v994, %v994
      %v1013 = vpack.c.bf16 %v995, %v995
      %v1014 = vpack.c.bf16 %v996, %v996
      %v1015 = vpack.c.bf16 %v997, %v997
      %v1016 = vpack.c.bf16 %v998, %v998
      %vm1017 = vcmask 257024
      %1018 = vst.msk [vmem:[%s163] sm:$0xf] %vm1017, %v999
      %1019 = vst.msk [vmem:[%s163 + $0x4] sm:$0xf] %vm1017, %v1000
      %1020 = vst.msk [vmem:[%s163 + $0x8] sm:$0xf] %vm1017, %v1001
      %1021 = vst.msk [vmem:[%s163 + $0xc] sm:$0xf] %vm1017, %v1002
      %1022 = vst.msk [vmem:[%s163 + $0x10] sm:$0xf] %vm1017, %v1003
      %1023 = vst.msk [vmem:[%s163 + $0x14] sm:$0xf] %vm1017, %v1004
      %1024 = vst.msk [vmem:[%s163 + $0x18] sm:$0xf] %vm1017, %v1005
      %1025 = vst.msk [vmem:[%s163 + $0x1c] sm:$0xf] %vm1017, %v1006
      %1026 = vst.msk [vmem:[%s163 + $0x20] sm:$0xf] %vm1017, %v1007
      %1027 = vst.msk [vmem:[%s163 + $0x24] sm:$0xf] %vm1017, %v1008
      %1028 = vst.msk [vmem:[%s163 + $0x28] sm:$0xf] %vm1017, %v1009
      %1029 = vst.msk [vmem:[%s163 + $0x2c] sm:$0xf] %vm1017, %v1010
      %1030 = vst.msk [vmem:[%s163 + $0x30] sm:$0xf] %vm1017, %v1011
      %1031 = vst.msk [vmem:[%s163 + $0x34] sm:$0xf] %vm1017, %v1012
      %1032 = vst.msk [vmem:[%s163 + $0x38] sm:$0xf] %vm1017, %v1013
      %1033 = vst.msk [vmem:[%s163 + $0x3c] sm:$0xf] %vm1017, %v1014
      %1034 = vst.msk [vmem:[%s163 + $0x40] sm:$0xf] %vm1017, %v1015
      %1035 = vst.msk [vmem:[%s163 + $0x44] sm:$0xf] %vm1017, %v1016
      %p1036 = scmp.lt.s32.totalorder %s13, 1
      %s1037 = scalar_select %p1036, %s13, 1
      %s1038 = smul.addr %s1037, 18
      %s1039 = smul.addr %s1038, 4
      %s1040 = scalar_lea.vmem %s2, %s1039
      // Predicated region
      $region29: #{convo_classifier_forward.10} parent=27 // pred_check
        %p1041 = pneg %p83
      $region30: #{convo_classifier_forward.10} parent=27 // pred_check_branch
        %1043 = sbr.rel (%p1041) target = $region32
      $region31: #{convo_classifier_forward.10} parent=27 // pred_region
        _
      $region32: #{convo_classifier_forward.10} parent=27 // pred_fallthru
        _
    $region28: #{convo_classifier_forward.10} parent=5 // pred_fallthru
      _
    %p1044 = scmp.le.s32.totalorder 2, %s8
    // Predicated region
    $region33: #{convo_classifier_forward.10} parent=5 // pred_check
      %p1045 = pneg %p1044
    $region34: #{convo_classifier_forward.10} parent=5 // pred_check_branch
      %1047 = sbr.rel (%p1045) target = $region36
    $region35: #{convo_classifier_forward.10} parent=5 // pred_region
      %s1048 = ssub.s32 %s8, 2
      // Predicated region
      $region37: #{convo_classifier_forward.10} parent=35 // pred_check
        %p1049 = pneg %p89
      $region38: #{convo_classifier_forward.10} parent=35 // pred_check_branch
        %1051 = sbr.rel (%p1049) target = $region40
      $region39: #{convo_classifier_forward.10} parent=35 // pred_region
        %p1052 = scmp.lt.s32.totalorder %s14, 1
        %s1053 = scalar_select %p1052, %s14, 1
        %s1054 = smul.addr %s1053, 18
        %s1055 = smul.addr %s1054, 4
        %s1056 = scalar_lea.vmem %s2, %s1055
      $region40: #{convo_classifier_forward.10} parent=35 // pred_fallthru
        _
    $region36: #{convo_classifier_forward.10} parent=5 // pred_fallthru
      _
  $region6: #{convo_classifier_forward.10} parent=0 // loop_footer
    %s12 = sadd.s32 1, %s8
  $region7: #{convo_classifier_forward.10} parent=0 // loop_footer_branch
    %7 = sbr.rel target = $region3
  $region8: #{convo_classifier_forward.10} parent=0 // loop_exit
    _

// kernel: convo_classifier_forward.11
$region0: #{convo_classifier_forward.11}
  #allocation0 [shape = 'u32[]', space=smem, size = 0x4, offset = 0x4, fixed_abs, tag = 'smem constant byte address 0x4 - core index']
  #allocation1 [shape = 'u32[72,128]{1,0:T(1,128)}', space=vmem, size = 0x9000, scoped, tag = 'internal scratch']
  %s0 = inlined_call_operand.vmem [shape: bf16[32,288], index: 0, kind: input, shape index: {}]
  %s1 = inlined_call_operand.vmem [shape: bf16[288,32], index: 1, kind: input, shape index: {}]
  %s2 = inlined_call_operand.vmem [shape: f32[1,32], index: 2, kind: input, shape index: {}]
  %s3 = inlined_call_operand.vmem [shape: bf16[32,32], index: 3, kind: output, shape index: {}]
  %s4 = sld [smem:[#allocation0]]
  $region22: #{convo_classifier_forward.11} parent=0
    _
  %s6 = ssub.s32 1, %s4
  %s7 = scalar_select 0, %s6, %s4
  // Predicated region
  $region2: #{convo_classifier_forward.11} parent=0 // pred_check
    _
  $region3: #{convo_classifier_forward.11} parent=0 // pred_check_branch
    %9 = sbr.rel (0) target = $region5
  $region4: #{convo_classifier_forward.11} parent=0 // pred_region
    _
  $region5: #{convo_classifier_forward.11} parent=0 // pred_fallthru
    _
  // Predicated region
  $region6: #{convo_classifier_forward.11} parent=0 // pred_check
    _
  $region7: #{convo_classifier_forward.11} parent=0 // pred_check_branch
    %11 = sbr.rel (0) target = $region9
  $region8: #{convo_classifier_forward.11} parent=0 // pred_region
    _
  $region9: #{convo_classifier_forward.11} parent=0 // pred_fallthru
    _
  // Predicated region
  $region10: #{convo_classifier_forward.11} parent=0 // pred_check
    _
  $region11: #{convo_classifier_forward.11} parent=0 // pred_check_branch
    %13 = sbr.rel (0) target = $region13
  $region12: #{convo_classifier_forward.11} parent=0 // pred_region
    _
  $region13: #{convo_classifier_forward.11} parent=0 // pred_fallthru
    _
  %v15 = vld [vmem:[%s0] sm:$0xff]
  %v16 = vld [vmem:[%s0 + $0x8] sm:$0xf]
  %v17 = vld [vmem:[%s0 + $0xc] sm:$0xff]
  %v18 = vld [vmem:[%s0 + $0x14] sm:$0xf]
  %v19 = vld [vmem:[%s0 + $0x18] sm:$0xff]
  %v20 = vld [vmem:[%s0 + $0x20] sm:$0xf]
  %v21 = vld [vmem:[%s0 + $0x24] sm:$0xff]
  %v22 = vld [vmem:[%s0 + $0x2c] sm:$0xf]
  %v23 = vld [vmem:[%s1] sm:$0xf]
  %v24 = vld [vmem:[%s1 + $0x4] sm:$0xf]
  %v25 = vld [vmem:[%s1 + $0x8] sm:$0xf]
  %v26 = vld [vmem:[%s1 + $0xc] sm:$0xf]
  %v27 = vld [vmem:[%s1 + $0x10] sm:$0xf]
  %v28 = vld [vmem:[%s1 + $0x14] sm:$0xf]
  %v29 = vld [vmem:[%s1 + $0x18] sm:$0xf]
  %v30 = vld [vmem:[%s1 + $0x1c] sm:$0xf]
  %v31 = vld [vmem:[%s1 + $0x20] sm:$0xf]
  %v32 = vld [vmem:[%s1 + $0x24] sm:$0xf]
  %v33 = vld [vmem:[%s1 + $0x28] sm:$0xf]
  %v34 = vld [vmem:[%s1 + $0x2c] sm:$0xf]
  %v35 = vld [vmem:[%s1 + $0x30] sm:$0xf]
  %v36 = vld [vmem:[%s1 + $0x34] sm:$0xf]
  %v37 = vld [vmem:[%s1 + $0x38] sm:$0xf]
  %v38 = vld [vmem:[%s1 + $0x3c] sm:$0xf]
  %v39 = vld [vmem:[%s1 + $0x40] sm:$0xf]
  %v40 = vld [vmem:[%s1 + $0x44] sm:$0xf]
  %v41 = vld [vmem:[%s1 + $0x48] sm:$0xf]
  %v42 = vld [vmem:[%s1 + $0x4c] sm:$0xf]
  %v43 = vld [vmem:[%s1 + $0x50] sm:$0xf]
  %v44 = vld [vmem:[%s1 + $0x54] sm:$0xf]
  %v45 = vld [vmem:[%s1 + $0x58] sm:$0xf]
  %v46 = vld [vmem:[%s1 + $0x5c] sm:$0xf]
  %v47 = vld [vmem:[%s1 + $0x60] sm:$0xf]
  %v48 = vld [vmem:[%s1 + $0x64] sm:$0xf]
  %v49 = vld [vmem:[%s1 + $0x68] sm:$0xf]
  %v50 = vld [vmem:[%s1 + $0x6c] sm:$0xf]
  %v51 = vld [vmem:[%s1 + $0x70] sm:$0xf]
  %v52 = vld [vmem:[%s1 + $0x74] sm:$0xf]
  %v53 = vld [vmem:[%s1 + $0x78] sm:$0xf]
  %v54 = vld [vmem:[%s1 + $0x7c] sm:$0xf]
  %v55 = vld [vmem:[%s1 + $0x80] sm:$0xf]
  %v56 = vld [vmem:[%s1 + $0x84] sm:$0xf]
  %v57 = vld [vmem:[%s1 + $0x88] sm:$0xf]
  %v58 = vld [vmem:[%s1 + $0x8c] sm:$0xf]
  %v59 = vld [vmem:[%s2] sm:$0x1]
  %v61 = vperm.slane %v59, 0
  %v71 = vunpack.c.l.b16 %v15
  %v72 = vunpack.c.h.b16 %v15
  %v73 = vunpack.c.l.b16 %v16
  %v74 = vunpack.c.l.b16 %v17
  %v75 = vunpack.c.h.b16 %v17
  %v76 = vunpack.c.l.b16 %v18
  %v77 = vunpack.c.l.b16 %v19
  %v78 = vunpack.c.h.b16 %v19
  %v79 = vunpack.c.l.b16 %v20
  %v80 = vunpack.c.l.b16 %v21
  %v81 = vunpack.c.h.b16 %v21
  %v82 = vunpack.c.l.b16 %v22
  %v83 = vpack.c.b16 %v74, %v71
  %v84 = vpack.c.b16 %v75, %v72
  %v85 = vpack.c.b16 %v76, %v73
  %v86 = vpack.c.b16 %v80, %v77
  %v87 = vpack.c.b16 %v81, %v78
  %v88 = vpack.c.b16 %v82, %v79
  %v129 = vunpack.c.l.b16 %v23
  %v130 = vunpack.c.l.b16 %v24
  %v131 = vunpack.c.l.b16 %v25
  %v132 = vunpack.c.l.b16 %v26
  %v133 = vunpack.c.l.b16 %v27
  %v134 = vunpack.c.l.b16 %v28
  %v135 = vunpack.c.l.b16 %v29
  %v136 = vunpack.c.l.b16 %v30
  %v137 = vunpack.c.l.b16 %v31
  %v138 = vunpack.c.l.b16 %v32
  %v139 = vunpack.c.l.b16 %v33
  %v140 = vunpack.c.l.b16 %v34
  %v141 = vunpack.c.l.b16 %v35
  %v142 = vunpack.c.l.b16 %v36
  %v143 = vunpack.c.l.b16 %v37
  %v144 = vunpack.c.l.b16 %v38
  %v145 = vunpack.c.l.b16 %v39
  %v146 = vunpack.c.l.b16 %v40
  %v147 = vunpack.c.l.b16 %v41
  %v148 = vunpack.c.l.b16 %v42
  %v149 = vunpack.c.l.b16 %v43
  %v150 = vunpack.c.l.b16 %v44
  %v151 = vunpack.c.l.b16 %v45
  %v152 = vunpack.c.l.b16 %v46
  %v153 = vunpack.c.l.b16 %v47
  %v154 = vunpack.c.l.b16 %v48
  %v155 = vunpack.c.l.b16 %v49
  %v156 = vunpack.c.l.b16 %v50
  %v157 = vunpack.c.l.b16 %v51
  %v158 = vunpack.c.l.b16 %v52
  %v159 = vunpack.c.l.b16 %v53
  %v160 = vunpack.c.l.b16 %v54
  %v161 = vunpack.c.l.b16 %v55
  %v162 = vunpack.c.l.b16 %v56
  %v163 = vunpack.c.l.b16 %v57
  %v164 = vunpack.c.l.b16 %v58
  %v165 = vpack.c.b16 %v130, %v129
  %v166 = vpack.c.b16 %v132, %v131
  %v167 = vpack.c.b16 %v134, %v133
  %v168 = vpack.c.b16 %v136, %v135
  %v169 = vpack.c.b16 %v138, %v137
  %v170 = vpack.c.b16 %v140, %v139
  %v171 = vpack.c.b16 %v142, %v141
  %v172 = vpack.c.b16 %v144, %v143
  %v173 = vpack.c.b16 %v146, %v145
  %v174 = vpack.c.b16 %v148, %v147
  %v175 = vpack.c.b16 %v150, %v149
  %v176 = vpack.c.b16 %v152, %v151
  %v177 = vpack.c.b16 %v154, %v153
  %v178 = vpack.c.b16 %v156, %v155
  %v179 = vpack.c.b16 %v158, %v157
  %v180 = vpack.c.b16 %v160, %v159
  %v181 = vpack.c.b16 %v162, %v161
  %v182 = vpack.c.b16 %v164, %v163
  %vm201 = vcmask 261120
  %v203 = vsel %vm201, %v85, 0
  %v206 = vsel %vm201, %v88, 0
  %208 = vmatpush.bf16.msra.mxu0 %v172
  %209 = vmatpush.bf16.msra.mxu0 %v171
  %210 = vmatpush.bf16.msra.mxu0 %v170
  %211 = vmatpush.bf16.msra.mxu0 %v169
  %212 = vmatpush.bf16.msra.mxu0 %v168
  %213 = vmatpush.bf16.msra.mxu0 %v167
  %214 = vmatpush.bf16.msra.mxu0 %v166
  %215 = vmatpush.bf16.msra.mxu0 %v165
  %216 = vmatmul.bf16.gmra.mxu0 %v83
  %v217 = vpop.f32.mrf.mxu0
  %v218 = vadd.f32 %v61, %v217
  %v219 = vpop.f32.mrf.mxu0
  %v220 = vadd.f32 %v61, %v219
  %221 = vmatmul.bf16.gmra.mxu0 %v86
  %v222 = vpop.f32.mrf.mxu0
  %v223 = vadd.f32 %v61, %v222
  %v224 = vpop.f32.mrf.mxu0
  %v225 = vadd.f32 %v61, %v224
  %226 = vdwg.mxu0
  %227 = vmatpush.bf16.msra.mxu0 %v180
  %228 = vmatpush.bf16.msra.mxu0 %v179
  %229 = vmatpush.bf16.msra.mxu0 %v178
  %230 = vmatpush.bf16.msra.mxu0 %v177
  %231 = vmatpush.bf16.msra.mxu0 %v176
  %232 = vmatpush.bf16.msra.mxu0 %v175
  %233 = vmatpush.bf16.msra.mxu0 %v174
  %234 = vmatpush.bf16.msra.mxu0 %v173
  %235 = vmatmul.bf16.gmra.mxu0 %v84
  %v236 = vpop.f32.mrf.mxu0
  %v237 = vadd.f32 %v218, %v236
  %v238 = vpop.f32.mrf.mxu0
  %v239 = vadd.f32 %v220, %v238
  %240 = vmatmul.bf16.gmra.mxu0 %v87
  %v241 = vpop.f32.mrf.mxu0
  %v242 = vadd.f32 %v223, %v241
  %v243 = vpop.f32.mrf.mxu0
  %v244 = vadd.f32 %v225, %v243
  %245 = vdwg.mxu0
  %246 = vmatpush.bf16.msra.mxu0 0
  %247 = vmatpush.bf16.msra.mxu0 0
  %248 = vmatpush.bf16.msra.mxu0 0
  %249 = vmatpush.bf16.msra.mxu0 0
  %250 = vmatpush.bf16.msra.mxu0 0
  %251 = vmatpush.bf16.msra.mxu0 0
  %252 = vmatpush.bf16.msra.mxu0 %v182
  %253 = vmatpush.bf16.msra.mxu0 %v181
  %254 = vmatmul.bf16.gmra.mxu0 %v203
  %v255 = vpop.f32.mrf.mxu0
  %v256 = vadd.f32 %v237, %v255
  %v257 = vpop.f32.mrf.mxu0
  %v258 = vadd.f32 %v239, %v257
  %259 = vmatmul.bf16.gmra.mxu0 %v206
  %v260 = vpop.f32.mrf.mxu0
  %v261 = vadd.f32 %v242, %v260
  %v262 = vpop.f32.mrf.mxu0
  %v263 = vadd.f32 %v244, %v262
  %264 = vdwg.mxu0
  %v265 = vmax.f32 %v256, 0.0
  %v266 = vmax.f32 %v258, 0.0
  %v267 = vmax.f32 %v261, 0.0
  %v268 = vmax.f32 %v263, 0.0
  %v269 = vpack.c.bf16 %v265, %v265
  %v270 = vpack.c.bf16 %v266, %v266
  %v271 = vpack.c.bf16 %v267, %v267
  %v272 = vpack.c.bf16 %v268, %v268
  %vm273 = vcmask 257024
  %274 = vst.msk [vmem:[%s3] sm:$0xf] %vm273, %v269
  %275 = vst.msk [vmem:[%s3 + $0x4] sm:$0xf] %vm273, %v270
  %276 = vst.msk [vmem:[%s3 + $0x8] sm:$0xf] %vm273, %v271
  %277 = vst.msk [vmem:[%s3 + $0xc] sm:$0xf] %vm273, %v272
  // Predicated region
  $region14: #{convo_classifier_forward.11} parent=0 // pred_check
    _
  $region15: #{convo_classifier_forward.11} parent=0 // pred_check_branch
    %279 = sbr.rel (0) target = $region17
  $region16: #{convo_classifier_forward.11} parent=0 // pred_region
    _
  $region17: #{convo_classifier_forward.11} parent=0 // pred_fallthru
    _
  // Predicated region
  $region18: #{convo_classifier_forward.11} parent=0 // pred_check
    _
  $region19: #{convo_classifier_forward.11} parent=0 // pred_check_branch
    %281 = sbr.rel (0) target = $region21
  $region20: #{convo_classifier_forward.11} parent=0 // pred_region
    _
  $region21: #{convo_classifier_forward.11} parent=0 // pred_fallthru
    _

// kernel: convo_classifier_forward.12
$region0: #{convo_classifier_forward.12}
  #allocation0 [shape = 'u32[]', space=smem, size = 0x4, offset = 0x4, fixed_abs, tag = 'smem constant byte address 0x4 - core index']
  #allocation1 [shape = 'u32[72,128]{1,0:T(1,128)}', space=vmem, size = 0x9000, scoped, tag = 'internal scratch']
  %s0 = inlined_call_operand.vmem [shape: bf16[2,40,32], index: 0, kind: input, shape index: {}]
  %s1 = inlined_call_operand.vmem [shape: bf16[9,32,32], index: 1, kind: input, shape index: {}]
  %s2 = inlined_call_operand.vmem [shape: f32[1,32], index: 2, kind: input, shape index: {}]
  %s3 = inlined_call_operand.vmem [shape: f32[1,32], index: 3, kind: input, shape index: {}]
  %s4 = inlined_call_operand.vmem [shape: bf16[2,24,32], index: 4, kind: output, shape index: {}]
  %s5 = sld [smem:[#allocation0]]
  $region49: #{convo_classifier_forward.12} parent=0
    _
  %s7 = ssub.s32 1, %s5
  %s8 = scalar_select 0, %s7, %s5
  loop: start=0, step=1, limit=4
  $region2: #{convo_classifier_forward.12} parent=0 // loop_pre_header
    _
  $region3: #{convo_classifier_forward.12} parent=0 // loop_header
    %s10 = sphi 0, %s14
    %p11 = scmp.ge.s32.totalorder %s10, 4
    %s20 = sphi 0, %s22
    %s23 = sphi 0, %s20
    %s24 = sphi 0, %s23
    %s40 = sphi 0, %s24
    %s44 = sphi 0, %s44
    %s46 = sphi 0, %s44
    %s47 = sphi 0, %s46
    %s61 = sphi 0, %s47
    %s65 = sphi 0, %s65
    %s67 = sphi 0, %s65
    %s68 = sphi 0, %s67
    %s82 = sphi 0, %s68
    %s86 = sphi 0, %s86
    %s88 = sphi 0, %s86
    %s89 = sphi 0, %s88
    %s103 = sphi 0, %s89
    %s109 = sphi 0, %s111
    %s112 = sphi 0, %s109
    %s113 = sphi 0, %s112
    %s129 = sphi 0, %s113
  $region4: #{convo_classifier_forward.12} parent=0 // loop_header_branch
    %13 = sbr.rel (%p11) target = $region8
  $region5: #{convo_classifier_forward.12} parent=0 // loop_body
    %s15 = ssub.s32 %s10, 1
    %s16 = ssub.s32 %s10, 2
    %s17 = sadd.s32 %s10, 1
    %s18 = ssub.s32 %s10, %s17
    %p19 = scmp.eq.s32.totalorder %s18, 0
    %s21 = sadd.s32 %s20, 1
    %s22 = scalar_select %p19, %s20, %s21
    %p25 = pneg %p19
    %p26 = scmp.eq.s32.totalorder %s10, 1
    %p27 = por %p25, %p26
    %p28 = scmp.ne.s32.totalorder %s20, %s23
    %p29 = scmp.eq.s32.totalorder %s10, 0
    %p30 = por %p28, %p29
    %p31 = scmp.ne.s32.totalorder %s20, %s23
    %p32 = scmp.eq.s32.totalorder %s15, 1
    %p33 = por %p31, %p32
    %p34 = scmp.ne.s32.totalorder %s23, %s24
    %p35 = scmp.eq.s32.totalorder %s15, 0
    %p36 = por %p34, %p35
    %p37 = scmp.ne.s32.totalorder %s23, %s24
    %p38 = scmp.eq.s32.totalorder %s16, 1
    %p39 = por %p37, %p38
    %p41 = scmp.ne.s32.totalorder %s24, %s40
    %p42 = scmp.eq.s32.totalorder %s16, 0
    %p43 = por %p41, %p42
    %s45 = sadd.s32 %s44, 1
    %p48 = scmp.eq.s32.totalorder %s10, 1
    %p49 = scmp.ne.s32.totalorder %s44, %s46
    %p50 = scmp.eq.s32.totalorder %s10, 0
    %p51 = por %p49, %p50
    %p52 = scmp.ne.s32.totalorder %s44, %s46
    %p53 = scmp.eq.s32.totalorder %s15, 1
    %p54 = por %p52, %p53
    %p55 = scmp.ne.s32.totalorder %s46, %s47
    %p56 = scmp.eq.s32.totalorder %s15, 0
    %p57 = por %p55, %p56
    %p58 = scmp.ne.s32.totalorder %s46, %s47
    %p59 = scmp.eq.s32.totalorder %s16, 1
    %p60 = por %p58, %p59
    %p62 = scmp.ne.s32.totalorder %s47, %s61
    %p63 = scmp.eq.s32.totalorder %s16, 0
    %p64 = por %p62, %p63
    %s66 = sadd.s32 %s65, 1
    %p69 = scmp.eq.s32.totalorder %s10, 1
    %p70 = scmp.ne.s32.totalorder %s65, %s67
    %p71 = scmp.eq.s32.totalorder %s10, 0
    %p72 = por %p70, %p71
    %p73 = scmp.ne.s32.totalorder %s65, %s67
    %p74 = scmp.eq.s32.totalorder %s15, 1
    %p75 = por %p73, %p74
    %p76 = scmp.ne.s32.totalorder %s67, %s68
    %p77 = scmp.eq.s32.totalorder %s15, 0
    %p78 = por %p76, %p77
    %p79 = scmp.ne.s32.totalorder %s67, %s68
    %p80 = scmp.eq.s32.totalorder %s16, 1
    %p81 = por %p79, %p80
    %p83 = scmp.ne.s32.totalorder %s68, %s82
    %p84 = scmp.eq.s32.totalorder %s16, 0
    %p85 = por %p83, %p84
    %s87 = sadd.s32 %s86, 1
    %p90 = scmp.eq.s32.totalorder %s10, 1
    %p91 = scmp.ne.s32.totalorder %s86, %s88
    %p92 = scmp.eq.s32.totalorder %s10, 0
    %p93 = por %p91, %p92
    %p94 = scmp.ne.s32.totalorder %s86, %s88
    %p95 = scmp.eq.s32.totalorder %s15, 1
    %p96 = por %p94, %p95
    %p97 = scmp.ne.s32.totalorder %s88, %s89
    %p98 = scmp.eq.s32.totalorder %s15, 0
    %p99 = por %p97, %p98
    %p100 = scmp.ne.s32.totalorder %s88, %s89
    %p101 = scmp.eq.s32.totalorder %s16, 1
    %p102 = por %p100, %p101
    %p104 = scmp.ne.s32.totalorder %s89, %s103
    %p105 = scmp.eq.s32.totalorder %s16, 0
    %p106 = por %p104, %p105
    %s107 = ssub.s32 %s10, %s17
    %p108 = scmp.eq.s32.totalorder %s107, 0
    %s110 = sadd.s32 %s109, 1
    %s111 = scalar_select %p108, %s109, %s110
    %p114 = pneg %p108
    %p115 = scmp.eq.s32.totalorder %s10, 1
    %p116 = por %p114, %p115
    %p117 = scmp.ne.s32.totalorder %s109, %s112
    %p118 = scmp.eq.s32.totalorder %s10, 0
    %p119 = por %p117, %p118
    %p120 = scmp.ne.s32.totalorder %s109, %s112
    %p121 = scmp.eq.s32.totalorder %s15, 1
    %p122 = por %p120, %p121
    %p123 = scmp.ne.s32.totalorder %s112, %s113
    %p124 = scmp.eq.s32.totalorder %s15, 0
    %p125 = por %p123, %p124
    %p126 = scmp.ne.s32.totalorder %s112, %s113
    %p127 = scmp.eq.s32.totalorder %s16, 1
    %p128 = por %p126, %p127
    %p130 = scmp.ne.s32.totalorder %s113, %s129
    %p131 = scmp.eq.s32.totalorder %s16, 0
    %p132 = por %p130, %p131
    %p133 = scmp.le.s32.totalorder 1, %s10
    %p134 = scmp.lt.s32.totalorder %s10, 3
    %p135 = pnand %p133, %p134
    %p136 = pneg %p135
    // Predicated region
    $region9: #{convo_classifier_forward.12} parent=5 // pred_check
      _
    $region10: #{convo_classifier_forward.12} parent=5 // pred_check_branch
      %138 = sbr.rel (%p135) target = $region12
    $region11: #{convo_classifier_forward.12} parent=5 // pred_region
      %s139 = ssub.s32 %s10, 1
      // Predicated region
      $region13: #{convo_classifier_forward.12} parent=11 // pred_check
        %p140 = pneg %p57
      $region14: #{convo_classifier_forward.12} parent=11 // pred_check_branch
        %142 = sbr.rel (%p140) target = $region16
      $region15: #{convo_classifier_forward.12} parent=11 // pred_region
        _
      $region16: #{convo_classifier_forward.12} parent=11 // pred_fallthru
        _
      // Predicated region
      $region17: #{convo_classifier_forward.12} parent=11 // pred_check
        %p143 = pneg %p78
      $region18: #{convo_classifier_forward.12} parent=11 // pred_check_branch
        %145 = sbr.rel (%p143) target = $region20
      $region19: #{convo_classifier_forward.12} parent=11 // pred_region
        _
      $region20: #{convo_classifier_forward.12} parent=11 // pred_fallthru
        _
      // Predicated region
      $region21: #{convo_classifier_forward.12} parent=11 // pred_check
        %p146 = pneg %p99
      $region22: #{convo_classifier_forward.12} parent=11 // pred_check_branch
        %148 = sbr.rel (%p146) target = $region24
      $region23: #{convo_classifier_forward.12} parent=11 // pred_region
        _
      $region24: #{convo_classifier_forward.12} parent=11 // pred_fallthru
        _
    $region12: #{convo_classifier_forward.12} parent=5 // pred_fallthru
      _
    %p149 = scmp.lt.s32.totalorder %s10, 2
    // Predicated region
    $region25: #{convo_classifier_forward.12} parent=5 // pred_check
      %p150 = pneg %p149
    $region26: #{convo_classifier_forward.12} parent=5 // pred_check_branch
      %152 = sbr.rel (%p150) target = $region28
    $region27: #{convo_classifier_forward.12} parent=5 // pred_region
      // Predicated region
      $region29: #{convo_classifier_forward.12} parent=27 // pred_check
        %p153 = pneg %p30
      $region30: #{convo_classifier_forward.12} parent=27 // pred_check_branch
        %155 = sbr.rel (%p153) target = $region32
      $region31: #{convo_classifier_forward.12} parent=27 // pred_region
        %p156 = scmp.lt.s32.totalorder %s10, 1
        %s157 = scalar_select %p156, %s10, 1
        %s158 = smul.addr %s157, 5
        %s159 = smul.addr %s158, 4
        %s160 = scalar_lea.vmem %s0, %s159
      $region32: #{convo_classifier_forward.12} parent=27 // pred_fallthru
        _
    $region28: #{convo_classifier_forward.12} parent=5 // pred_fallthru
      _
    %p161 = scmp.le.s32.totalorder 1, %s10
    %p162 = scmp.lt.s32.totalorder %s10, 3
    %p163 = pnand %p161, %p162
    %p164 = pneg %p163
    // Predicated region
    $region33: #{convo_classifier_forward.12} parent=5 // pred_check
      _
    $region34: #{convo_classifier_forward.12} parent=5 // pred_check_branch
      %166 = sbr.rel (%p163) target = $region36
    $region35: #{convo_classifier_forward.12} parent=5 // pred_region
      %s167 = ssub.s32 %s10, 1
      %p168 = scmp.lt.s32.totalorder %s15, 1
      %s169 = scalar_select %p168, %s15, 1
      %s170 = smul.addr %s169, 5
      %s171 = smul.addr %s170, 4
      %s172 = scalar_lea.vmem %s0, %s171
      %p173 = pneg %p36
      %p174 = pneg %p33
      %p175 = pneg %p57
      %p176 = pneg %p54
      %p177 = pneg %p78
      %p178 = pneg %p75
      %p179 = pneg %p99
      %p180 = pneg %p96
      %p181 = pneg %p125
      %p182 = pneg %p122
      %p183 = scmp.lt.s32.totalorder %s15, 1
      %s184 = scalar_select %p183, %s15, 1
      %s185 = smul.addr %s184, 3
      %s186 = smul.addr %s185, 4
      %s187 = scalar_lea.vmem %s4, %s186
      %p188 = scmp.lt.s32.totalorder %s15, 1
      %s189 = scalar_select %p188, %s15, 1
      %s190 = smul.addr %s189, 5
      %s191 = smul.addr %s190, 4
      %s192 = scalar_lea.vmem %s0, %s191
      %p193 = scmp.lt.s32.totalorder %s15, 1
      %s194 = scalar_select %p193, %s15, 1
      %s195 = smul.addr %s194, 3
      %s196 = smul.addr %s195, 4
      %s197 = scalar_lea.vmem %s4, %s196
      %v199 = vld [vmem:[%s192] sm:$0xf]
      %v200 = vld [vmem:[%s192 + $0x4] sm:$0xf]
      %v201 = vld [vmem:[%s192 + $0x8] sm:$0xf]
      %v202 = vld [vmem:[%s1] sm:$0xf]
      %v203 = vld [vmem:[%s1 + $0x4] sm:$0xf]
      %v204 = vld [vmem:[%s1 + $0x8] sm:$0xf]
      %v205 = vld [vmem:[%s1 + $0xc] sm:$0xf]
      %v206 = vld [vmem:[%s192 + $0xc] sm:$0x1]
      %s207 = scalar_lea.vmem %s1, 16
      %v208 = vld [vmem:[%s207] sm:$0xf]
      %v209 = vld [vmem:[%s207 + $0x4] sm:$0xf]
      %v210 = vld [vmem:[%s207 + $0x8] sm:$0xf]
      %v211 = vld [vmem:[%s207 + $0xc] sm:$0xf]
      %v216 = vunpack.c.l.b16 %v199
      %v217 = vunpack.c.l.b16 %v200
      %v218 = vunpack.c.l.b16 %v201
      %v219 = vunpack.c.l.b16 %v206
      %v220 = vpack.c.b16 %v217, %v216
      %v221 = vpack.c.b16 %v219, %v218
      %vm222 = vsmask.f32 7424
      %v224 = vshrl.u32 %v220, 16
      %v226 = vshll.u32 %v220, 16
      %v228 = vrot.slane %v226, 1
      %v229 = vor.u32 %v224, %v228
      %v231 = vshll.u32 %v221, 16
      %v233 = vrot.slane %v231, 1
      %v234 = vsel %vm222, %v229, %v233
      %v235 = vshrl.u32 %v221, 16
      %v237 = vor.u32 %v235, %v233
      %v242 = vunpack.c.l.b16 %v208
      %v243 = vunpack.c.l.b16 %v209
      %v244 = vunpack.c.l.b16 %v210
      %v245 = vunpack.c.l.b16 %v211
      %v246 = vpack.c.b16 %v243, %v242
      %v247 = vpack.c.b16 %v245, %v244
      %vm250 = vcmask 261120
      %v252 = vsel %vm250, %v234, 0
      %v255 = vsel %vm250, %v237, 0
      %257 = vmatpush.bf16.msra.mxu0 0
      %258 = vmatpush.bf16.msra.mxu0 0
      %259 = vmatpush.bf16.msra.mxu0 0
      %260 = vmatpush.bf16.msra.mxu0 0
      %261 = vmatpush.bf16.msra.mxu0 0
      %262 = vmatpush.bf16.msra.mxu0 0
      %263 = vmatpush.bf16.msra.mxu0 %v247
      %264 = vmatpush.bf16.msra.mxu0 %v246
      %265 = vmatmul.bf16.gmra.mxu0 %v252
      %v266 = vpop.f32.mrf.mxu0
      %v267 = vadd.f32 0.0, %v266
      %v268 = vpop.f32.mrf.mxu0
      %v269 = vadd.f32 0.0, %v268
      %270 = vmatmul.bf16.gmra.mxu0 %v255
      %v271 = vpop.f32.mrf.mxu0
      %v272 = vadd.f32 0.0, %v271
      %v273 = vpop.f32.mrf.mxu0
      %274 = vdwg.mxu0
      %v275 = vpack.c.b16 %v218, %v218
      %v280 = vunpack.c.l.b16 %v202
      %v281 = vunpack.c.l.b16 %v203
      %v282 = vunpack.c.l.b16 %v204
      %v283 = vunpack.c.l.b16 %v205
      %v284 = vpack.c.b16 %v281, %v280
      %v285 = vpack.c.b16 %v283, %v282
      %v288 = vsel %vm250, %v220, 0
      %v291 = vsel %vm250, %v275, 0
      %293 = vmatpush.bf16.msra.mxu0 0
      %294 = vmatpush.bf16.msra.mxu0 0
      %295 = vmatpush.bf16.msra.mxu0 0
      %296 = vmatpush.bf16.msra.mxu0 0
      %297 = vmatpush.bf16.msra.mxu0 0
      %298 = vmatpush.bf16.msra.mxu0 0
      %299 = vmatpush.bf16.msra.mxu0 %v285
      %300 = vmatpush.bf16.msra.mxu0 %v284
      %301 = vmatmul.bf16.gmra.mxu0 %v288
      %v302 = vpop.f32.mrf.mxu0
      %v303 = vadd.f32 %v267, %v302
      %v304 = vpop.f32.mrf.mxu0
      %v305 = vadd.f32 %v269, %v304
      %306 = vmatmul.bf16.gmra.mxu0 %v291
      %v307 = vpop.f32.mrf.mxu0
      %v308 = vadd.f32 %v272, %v307
      %v309 = vpop.f32.mrf.mxu0
      %310 = vdwg.mxu0
      %v311 = vld [vmem:[%s192] sm:$0xe]
      %s312 = scalar_lea.vmem %s1, 32
      %v313 = vld [vmem:[%s312] sm:$0xf]
      %v314 = vld [vmem:[%s312 + $0x4] sm:$0xf]
      %v315 = vld [vmem:[%s312 + $0x8] sm:$0xf]
      %v316 = vld [vmem:[%s312 + $0xc] sm:$0xf]
      %v318 = vunpack.c.l.b16 %v311
      %v319 = vpack.c.b16 %v217, %v318
      %vm320 = vcmask 1046528
      %v321 = vrot.slane %v319, 1
      %v322 = vrot.slane %v221, 1
      %v323 = vsel %vm320, %v321, %v322
      %v328 = vunpack.c.l.b16 %v313
      %v329 = vunpack.c.l.b16 %v314
      %v330 = vunpack.c.l.b16 %v315
      %v331 = vunpack.c.l.b16 %v316
      %v332 = vpack.c.b16 %v329, %v328
      %v333 = vpack.c.b16 %v331, %v330
      %v337 = vsel %vm250, %v323, 0
      %v340 = vsel %vm250, %v322, 0
      %342 = vmatpush.bf16.msra.mxu0 0
      %343 = vmatpush.bf16.msra.mxu0 0
      %344 = vmatpush.bf16.msra.mxu0 0
      %345 = vmatpush.bf16.msra.mxu0 0
      %346 = vmatpush.bf16.msra.mxu0 0
      %347 = vmatpush.bf16.msra.mxu0 0
      %348 = vmatpush.bf16.msra.mxu0 %v333
      %349 = vmatpush.bf16.msra.mxu0 %v332
      %350 = vmatmul.bf16.gmra.mxu0 %v337
      %v351 = vpop.f32.mrf.mxu0
      %v352 = vadd.f32 0.0, %v351
      %v353 = vpop.f32.mrf.mxu0
      %v354 = vadd.f32 0.0, %v353
      %355 = vmatmul.bf16.gmra.mxu0 %v340
      %v356 = vpop.f32.mrf.mxu0
      %v357 = vadd.f32 0.0, %v356
      %v358 = vpop.f32.mrf.mxu0
      %359 = vdwg.mxu0
      %v360 = vadd.f32 %v303, %v352
      %v361 = vadd.f32 %v305, %v354
      %v362 = vadd.f32 %v308, %v357
      %v363 = vld [vmem:[%s192] sm:$0x8]
      %v364 = vld [vmem:[%s192 + $0xc] sm:$0x7]
      %s365 = scalar_lea.vmem %s1, 48
      %v366 = vld [vmem:[%s365] sm:$0xf]
      %v367 = vld [vmem:[%s365 + $0x4] sm:$0xf]
      %v368 = vld [vmem:[%s365 + $0x8] sm:$0xf]
      %v369 = vld [vmem:[%s365 + $0xc] sm:$0xf]
      %v372 = vunpack.c.l.b16 %v363
      %v373 = vunpack.c.l.b16 %v364
      %v374 = vpack.c.b16 %v217, %v372
      %v375 = vpack.c.b16 %v373, %v218
      %vm376 = vcmask 1044480
      %v377 = vrot.slane %v374, 3
      %v378 = vrot.slane %v375, 3
      %v379 = vsel %vm376, %v377, %v378
      %v384 = vunpack.c.l.b16 %v366
      %v385 = vunpack.c.l.b16 %v367
      %v386 = vunpack.c.l.b16 %v368
      %v387 = vunpack.c.l.b16 %v369
      %v388 = vpack.c.b16 %v385, %v384
      %v389 = vpack.c.b16 %v387, %v386
      %v393 = vsel %vm250, %v379, 0
      %v396 = vsel %vm250, %v378, 0
      %398 = vmatpush.bf16.msra.mxu0 0
      %399 = vmatpush.bf16.msra.mxu0 0
      %400 = vmatpush.bf16.msra.mxu0 0
      %401 = vmatpush.bf16.msra.mxu0 0
      %402 = vmatpush.bf16.msra.mxu0 0
      %403 = vmatpush.bf16.msra.mxu0 0
      %404 = vmatpush.bf16.msra.mxu0 %v389
      %405 = vmatpush.bf16.msra.mxu0 %v388
      %406 = vmatmul.bf16.gmra.mxu0 %v393
      %v407 = vpop.f32.mrf.mxu0
      %v408 = vadd.f32 0.0, %v407
      %v409 = vpop.f32.mrf.mxu0
      %v410 = vadd.f32 0.0, %v409
      %411 = vmatmul.bf16.gmra.mxu0 %v396
      %v412 = vpop.f32.mrf.mxu0
      %v413 = vadd.f32 0.0, %v412
      %v414 = vpop.f32.mrf.mxu0
      %415 = vdwg.mxu0
      %v416 = vadd.f32 %v360, %v408
      %v417 = vadd.f32 %v361, %v410
      %v418 = vadd.f32 %v362, %v413
      %v419 = vld [vmem:[%s192 + $0xc] sm:$0xf]
      %s420 = scalar_lea.vmem %s1, 64
      %v421 = vld [vmem:[%s420] sm:$0xf]
      %v422 = vld [vmem:[%s420 + $0x4] sm:$0xf]
      %v423 = vld [vmem:[%s420 + $0x8] sm:$0xf]
      %v424 = vld [vmem:[%s420 + $0xc] sm:$0xf]
      %v426 = vunpack.c.l.b16 %v419
      %v427 = vpack.c.b16 %v426, %v218
      %vm428 = vsmask.f32 4352
      %v430 = vshrl.u32 %v374, 16
      %v432 = vrot.slane %v430, 3
      %v433 = vshll.u32 %v374, 16
      %v435 = vrot.slane %v433, 4
      %v436 = vor.u32 %v432, %v435
      %v438 = vshrl.u32 %v427, 16
      %v440 = vrot.slane %v438, 3
      %v441 = vshll.u32 %v427, 16
      %v443 = vrot.slane %v441, 4
      %v444 = vor.u32 %v440, %v443
      %v445 = vsel %vm428, %v436, %v444
      %v450 = vunpack.c.l.b16 %v421
      %v451 = vunpack.c.l.b16 %v422
      %v452 = vunpack.c.l.b16 %v423
      %v453 = vunpack.c.l.b16 %v424
      %v454 = vpack.c.b16 %v451, %v450
      %v455 = vpack.c.b16 %v453, %v452
      %v459 = vsel %vm250, %v445, 0
      %v462 = vsel %vm250, %v444, 0
      %464 = vmatpush.bf16.msra.mxu0 0
      %465 = vmatpush.bf16.msra.mxu0 0
      %466 = vmatpush.bf16.msra.mxu0 0
      %467 = vmatpush.bf16.msra.mxu0 0
      %468 = vmatpush.bf16.msra.mxu0 0
      %469 = vmatpush.bf16.msra.mxu0 0
      %470 = vmatpush.bf16.msra.mxu0 %v455
      %471 = vmatpush.bf16.msra.mxu0 %v454
      %472 = vmatmul.bf16.gmra.mxu0 %v459
      %v473 = vpop.f32.mrf.mxu0
      %v474 = vadd.f32 0.0, %v473
      %v475 = vpop.f32.mrf.mxu0
      %v476 = vadd.f32 0.0, %v475
      %477 = vmatmul.bf16.gmra.mxu0 %v462
      %v478 = vpop.f32.mrf.mxu0
      %v479 = vadd.f32 0.0, %v478
      %v480 = vpop.f32.mrf.mxu0
      %481 = vdwg.mxu0
      %v482 = vadd.f32 %v416, %v474
      %v483 = vadd.f32 %v417, %v476
      %v484 = vadd.f32 %v418, %v479
      %s485 = scalar_lea.vmem %s1, 80
      %v486 = vld [vmem:[%s485] sm:$0xf]
      %v487 = vld [vmem:[%s485 + $0x4] sm:$0xf]
      %v488 = vld [vmem:[%s485 + $0x8] sm:$0xf]
      %v489 = vld [vmem:[%s485 + $0xc] sm:$0xf]
      %v490 = vpack.c.b16 %v218, %v217
      %v491 = vpack.c.b16 %v426, %v426
      %v496 = vunpack.c.l.b16 %v486
      %v497 = vunpack.c.l.b16 %v487
      %v498 = vunpack.c.l.b16 %v488
      %v499 = vunpack.c.l.b16 %v489
      %v500 = vpack.c.b16 %v497, %v496
      %v501 = vpack.c.b16 %v499, %v498
      %v505 = vsel %vm250, %v490, 0
      %v508 = vsel %vm250, %v491, 0
      %510 = vmatpush.bf16.msra.mxu0 0
      %511 = vmatpush.bf16.msra.mxu0 0
      %512 = vmatpush.bf16.msra.mxu0 0
      %513 = vmatpush.bf16.msra.mxu0 0
      %514 = vmatpush.bf16.msra.mxu0 0
      %515 = vmatpush.bf16.msra.mxu0 0
      %516 = vmatpush.bf16.msra.mxu0 %v501
      %517 = vmatpush.bf16.msra.mxu0 %v500
      %518 = vmatmul.bf16.gmra.mxu0 %v505
      %v519 = vpop.f32.mrf.mxu0
      %v520 = vadd.f32 0.0, %v519
      %v521 = vpop.f32.mrf.mxu0
      %v522 = vadd.f32 0.0, %v521
      %523 = vmatmul.bf16.gmra.mxu0 %v508
      %v524 = vpop.f32.mrf.mxu0
      %v525 = vadd.f32 0.0, %v524
      %v526 = vpop.f32.mrf.mxu0
      %527 = vdwg.mxu0
      %v528 = vadd.f32 %v482, %v520
      %v529 = vadd.f32 %v483, %v522
      %v530 = vadd.f32 %v484, %v525
      %v531 = vld [vmem:[%s192 + $0x4] sm:$0xc]
      %v532 = vld [vmem:[%s192 + $0x8] sm:$0xf]
      %v533 = vld [vmem:[%s192 + $0xc] sm:$0xf]
      %v534 = vld [vmem:[%s192 + $0x10] sm:$0x3]
      %s535 = scalar_lea.vmem %s1, 96
      %v536 = vld [vmem:[%s535] sm:$0xf]
      %v537 = vld [vmem:[%s535 + $0x4] sm:$0xf]
      %v538 = vld [vmem:[%s535 + $0x8] sm:$0xf]
      %v539 = vld [vmem:[%s535 + $0xc] sm:$0xf]
      %v544 = vunpack.c.l.b16 %v531
      %v545 = vunpack.c.l.b16 %v532
      %v546 = vunpack.c.l.b16 %v533
      %v547 = vunpack.c.l.b16 %v534
      %v548 = vpack.c.b16 %v545, %v544
      %v549 = vpack.c.b16 %v547, %v546
      %vm550 = vcmask 1045504
      %v551 = vrot.slane %v548, 2
      %v552 = vrot.slane %v549, 2
      %v553 = vsel %vm550, %v551, %v552
      %v558 = vunpack.c.l.b16 %v536
      %v559 = vunpack.c.l.b16 %v537
      %v560 = vunpack.c.l.b16 %v538
      %v561 = vunpack.c.l.b16 %v539
      %v562 = vpack.c.b16 %v559, %v558
      %v563 = vpack.c.b16 %v561, %v560
      %v567 = vsel %vm250, %v553, 0
      %v570 = vsel %vm250, %v552, 0
      %572 = vmatpush.bf16.msra.mxu0 0
      %573 = vmatpush.bf16.msra.mxu0 0
      %574 = vmatpush.bf16.msra.mxu0 0
      %575 = vmatpush.bf16.msra.mxu0 0
      %576 = vmatpush.bf16.msra.mxu0 0
      %577 = vmatpush.bf16.msra.mxu0 0
      %578 = vmatpush.bf16.msra.mxu0 %v563
      %579 = vmatpush.bf16.msra.mxu0 %v562
      %580 = vmatmul.bf16.gmra.mxu0 %v567
      %v581 = vpop.f32.mrf.mxu0
      %v582 = vadd.f32 0.0, %v581
      %v583 = vpop.f32.mrf.mxu0
      %v584 = vadd.f32 0.0, %v583
      %585 = vmatmul.bf16.gmra.mxu0 %v570
      %v586 = vpop.f32.mrf.mxu0
      %v587 = vadd.f32 0.0, %v586
      %v588 = vpop.f32.mrf.mxu0
      %589 = vdwg.mxu0
      %v590 = vadd.f32 %v528, %v582
      %v591 = vadd.f32 %v529, %v584
      %v592 = vadd.f32 %v530, %v587
      %v593 = vld [vmem:[%s192 + $0x10] sm:$0x7]
      %s594 = scalar_lea.vmem %s1, 112
      %v595 = vld [vmem:[%s594] sm:$0xf]
      %v596 = vld [vmem:[%s594 + $0x4] sm:$0xf]
      %v597 = vld [vmem:[%s594 + $0x8] sm:$0xf]
      %v598 = vld [vmem:[%s594 + $0xc] sm:$0xf]
      %v600 = vunpack.c.l.b16 %v593
      %v601 = vpack.c.b16 %v600, %v546
      %vm602 = vsmask.f32 5376
      %v604 = vshrl.u32 %v548, 16
      %v606 = vrot.slane %v604, 2
      %v607 = vshll.u32 %v548, 16
      %v609 = vrot.slane %v607, 3
      %v610 = vor.u32 %v606, %v609
      %v612 = vshrl.u32 %v601, 16
      %v614 = vrot.slane %v612, 2
      %v615 = vshll.u32 %v601, 16
      %v617 = vrot.slane %v615, 3
      %v618 = vor.u32 %v614, %v617
      %v619 = vsel %vm602, %v610, %v618
      %v624 = vunpack.c.l.b16 %v595
      %v625 = vunpack.c.l.b16 %v596
      %v626 = vunpack.c.l.b16 %v597
      %v627 = vunpack.c.l.b16 %v598
      %v628 = vpack.c.b16 %v625, %v624
      %v629 = vpack.c.b16 %v627, %v626
      %v633 = vsel %vm250, %v619, 0
      %v636 = vsel %vm250, %v618, 0
      %638 = vmatpush.bf16.msra.mxu0 0
      %639 = vmatpush.bf16.msra.mxu0 0
      %640 = vmatpush.bf16.msra.mxu0 0
      %641 = vmatpush.bf16.msra.mxu0 0
      %642 = vmatpush.bf16.msra.mxu0 0
      %643 = vmatpush.bf16.msra.mxu0 0
      %644 = vmatpush.bf16.msra.mxu0 %v629
      %645 = vmatpush.bf16.msra.mxu0 %v628
      %646 = vmatmul.bf16.gmra.mxu0 %v633
      %v647 = vpop.f32.mrf.mxu0
      %v648 = vadd.f32 0.0, %v647
      %v649 = vpop.f32.mrf.mxu0
      %v650 = vadd.f32 0.0, %v649
      %651 = vmatmul.bf16.gmra.mxu0 %v636
      %v652 = vpop.f32.mrf.mxu0
      %v653 = vadd.f32 0.0, %v652
      %v654 = vpop.f32.mrf.mxu0
      %655 = vdwg.mxu0
      %v656 = vadd.f32 %v590, %v648
      %v657 = vadd.f32 %v591, %v650
      %v658 = vadd.f32 %v592, %v653
      %v659 = vld [vmem:[%s192 + $0x4] sm:$0x8]
      %s660 = scalar_lea.vmem %s1, 128
      %v661 = vld [vmem:[%s660] sm:$0xf]
      %v662 = vld [vmem:[%s660 + $0x4] sm:$0xf]
      %v663 = vld [vmem:[%s660 + $0x8] sm:$0xf]
      %v664 = vld [vmem:[%s660 + $0xc] sm:$0xf]
      %v666 = vunpack.c.l.b16 %v659
      %v667 = vpack.c.b16 %v545, %v666
      %v668 = vrot.slane %v667, 3
      %v669 = vrot.slane %v601, 3
      %v670 = vsel %vm376, %v668, %v669
      %v675 = vunpack.c.l.b16 %v661
      %v676 = vunpack.c.l.b16 %v662
      %v677 = vunpack.c.l.b16 %v663
      %v678 = vunpack.c.l.b16 %v664
      %v679 = vpack.c.b16 %v676, %v675
      %v680 = vpack.c.b16 %v678, %v677
      %v684 = vsel %vm250, %v670, 0
      %v687 = vsel %vm250, %v669, 0
      %689 = vmatpush.bf16.msra.mxu0 0
      %690 = vmatpush.bf16.msra.mxu0 0
      %691 = vmatpush.bf16.msra.mxu0 0
      %692 = vmatpush.bf16.msra.mxu0 0
      %693 = vmatpush.bf16.msra.mxu0 0
      %694 = vmatpush.bf16.msra.mxu0 0
      %695 = vmatpush.bf16.msra.mxu0 %v680
      %696 = vmatpush.bf16.msra.mxu0 %v679
      %697 = vmatmul.bf16.gmra.mxu0 %v684
      %v698 = vpop.f32.mrf.mxu0
      %v699 = vadd.f32 0.0, %v698
      %v700 = vpop.f32.mrf.mxu0
      %v701 = vadd.f32 0.0, %v700
      %702 = vmatmul.bf16.gmra.mxu0 %v687
      %v703 = vpop.f32.mrf.mxu0
      %v704 = vadd.f32 0.0, %v703
      %v705 = vpop.f32.mrf.mxu0
      %706 = vdwg.mxu0
      %v707 = vadd.f32 %v656, %v699
      %v708 = vadd.f32 %v657, %v701
      %v709 = vadd.f32 %v658, %v704
      %v710 = vld [vmem:[%s2] sm:$0x1]
      %v712 = vperm.slane %v710, 0
      %v714 = vmul.f32 %v707, %v712
      %v715 = vmul.f32 %v708, %v712
      %v716 = vmul.f32 %v709, %v712
      %v717 = vld [vmem:[%s3] sm:$0x1]
      %v719 = vperm.slane %v717, 0
      %v721 = vadd.f32 %v714, %v719
      %v722 = vadd.f32 %v715, %v719
      %v723 = vadd.f32 %v716, %v719
      %v724 = vmax.f32 %v721, 0.0
      %v725 = vmax.f32 %v722, 0.0
      %v726 = vmax.f32 %v723, 0.0
      %v727 = vpack.c.bf16 %v724, %v724
      %v728 = vpack.c.bf16 %v725, %v725
      %v729 = vpack.c.bf16 %v726, %v726
      %vm730 = vcmask 257024
      %731 = vst.msk [vmem:[%s197] sm:$0xf] %vm730, %v727
      %732 = vst.msk [vmem:[%s197 + $0x4] sm:$0xf] %vm730, %v728
      %733 = vst.msk [vmem:[%s197 + $0x8] sm:$0xf] %vm730, %v729
      %p734 = scmp.lt.s32.totalorder %s15, 1
      %s735 = scalar_select %p734, %s15, 1
      %s736 = smul.addr %s735, 3
      %s737 = smul.addr %s736, 4
      %s738 = scalar_lea.vmem %s4, %s737
      // Predicated region
      $region37: #{convo_classifier_forward.12} parent=35 // pred_check
        %p739 = pneg %p122
      $region38: #{convo_classifier_forward.12} parent=35 // pred_check_branch
        %741 = sbr.rel (%p739) target = $region40
      $region39: #{convo_classifier_forward.12} parent=35 // pred_region
        _
      $region40: #{convo_classifier_forward.12} parent=35 // pred_fallthru
        _
    $region36: #{convo_classifier_forward.12} parent=5 // pred_fallthru
      _
    %p742 = scmp.le.s32.totalorder 2, %s10
    // Predicated region
    $region41: #{convo_classifier_forward.12} parent=5 // pred_check
      %p743 = pneg %p742
    $region42: #{convo_classifier_forward.12} parent=5 // pred_check_branch
      %745 = sbr.rel (%p743) target = $region44
    $region43: #{convo_classifier_forward.12} parent=5 // pred_region
      %s746 = ssub.s32 %s10, 2
      // Predicated region
      $region45: #{convo_classifier_forward.12} parent=43 // pred_check
        %p747 = pneg %p128
      $region46: #{convo_classifier_forward.12} parent=43 // pred_check_branch
        %749 = sbr.rel (%p747) target = $region48
      $region47: #{convo_classifier_forward.12} parent=43 // pred_region
        %p750 = scmp.lt.s32.totalorder %s16, 1
        %s751 = scalar_select %p750, %s16, 1
        %s752 = smul.addr %s751, 3
        %s753 = smul.addr %s752, 4
        %s754 = scalar_lea.vmem %s4, %s753
      $region48: #{convo_classifier_forward.12} parent=43 // pred_fallthru
        _
    $region44: #{convo_classifier_forward.12} parent=5 // pred_fallthru
      _
  $region6: #{convo_classifier_forward.12} parent=0 // loop_footer
    %s14 = sadd.s32 1, %s10
  $region7: #{convo_classifier_forward.12} parent=0 // loop_footer_branch
    %9 = sbr.rel target = $region3
  $region8: #{convo_classifier_forward.12} parent=0 // loop_exit
    _

// kernel: convo_classifier_forward.13
$region0: #{convo_classifier_forward.13}
  #allocation0 [shape = 'u32[]', space=smem, size = 0x4, offset = 0x4, fixed_abs, tag = 'smem constant byte address 0x4 - core index']
  #allocation1 [shape = 'u32[72,128]{1,0:T(1,128)}', space=vmem, size = 0x9000, scoped, tag = 'internal scratch']
  %s0 = inlined_call_operand.vmem [shape: bf16[16,288], index: 0, kind: input, shape index: {}]
  %s1 = inlined_call_operand.vmem [shape: bf16[288,64], index: 1, kind: input, shape index: {}]
  %s2 = inlined_call_operand.vmem [shape: f32[1,64], index: 2, kind: input, shape index: {}]
  %s3 = inlined_call_operand.vmem [shape: bf16[16,64], index: 3, kind: output, shape index: {}]
  %s4 = sld [smem:[#allocation0]]
  $region22: #{convo_classifier_forward.13} parent=0
    _
  %s6 = ssub.s32 1, %s4
  %s7 = scalar_select 0, %s6, %s4
  // Predicated region
  $region2: #{convo_classifier_forward.13} parent=0 // pred_check
    _
  $region3: #{convo_classifier_forward.13} parent=0 // pred_check_branch
    %9 = sbr.rel (0) target = $region5
  $region4: #{convo_classifier_forward.13} parent=0 // pred_region
    _
  $region5: #{convo_classifier_forward.13} parent=0 // pred_fallthru
    _
  // Predicated region
  $region6: #{convo_classifier_forward.13} parent=0 // pred_check
    _
  $region7: #{convo_classifier_forward.13} parent=0 // pred_check_branch
    %11 = sbr.rel (0) target = $region9
  $region8: #{convo_classifier_forward.13} parent=0 // pred_region
    _
  $region9: #{convo_classifier_forward.13} parent=0 // pred_fallthru
    _
  // Predicated region
  $region10: #{convo_classifier_forward.13} parent=0 // pred_check
    _
  $region11: #{convo_classifier_forward.13} parent=0 // pred_check_branch
    %13 = sbr.rel (0) target = $region13
  $region12: #{convo_classifier_forward.13} parent=0 // pred_region
    _
  $region13: #{convo_classifier_forward.13} parent=0 // pred_fallthru
    _
  %v15 = vld [vmem:[%s0] sm:$0xff]
  %v16 = vld [vmem:[%s0 + $0x8] sm:$0xf]
  %v17 = vld [vmem:[%s0 + $0xc] sm:$0xff]
  %v18 = vld [vmem:[%s0 + $0x14] sm:$0xf]
  %v19 = vld [vmem:[%s1] sm:$0xf]
  %v20 = vld [vmem:[%s1 + $0x4] sm:$0xf]
  %v21 = vld [vmem:[%s1 + $0x8] sm:$0xf]
  %v22 = vld [vmem:[%s1 + $0xc] sm:$0xf]
  %v23 = vld [vmem:[%s1 + $0x10] sm:$0xf]
  %v24 = vld [vmem:[%s1 + $0x14] sm:$0xf]
  %v25 = vld [vmem:[%s1 + $0x18] sm:$0xf]
  %v26 = vld [vmem:[%s1 + $0x1c] sm:$0xf]
  %v27 = vld [vmem:[%s1 + $0x20] sm:$0xf]
  %v28 = vld [vmem:[%s1 + $0x24] sm:$0xf]
  %v29 = vld [vmem:[%s1 + $0x28] sm:$0xf]
  %v30 = vld [vmem:[%s1 + $0x2c] sm:$0xf]
  %v31 = vld [vmem:[%s1 + $0x30] sm:$0xf]
  %v32 = vld [vmem:[%s1 + $0x34] sm:$0xf]
  %v33 = vld [vmem:[%s1 + $0x38] sm:$0xf]
  %v34 = vld [vmem:[%s1 + $0x3c] sm:$0xf]
  %v35 = vld [vmem:[%s1 + $0x40] sm:$0xf]
  %v36 = vld [vmem:[%s1 + $0x44] sm:$0xf]
  %v37 = vld [vmem:[%s1 + $0x48] sm:$0xf]
  %v38 = vld [vmem:[%s1 + $0x4c] sm:$0xf]
  %v39 = vld [vmem:[%s1 + $0x50] sm:$0xf]
  %v40 = vld [vmem:[%s1 + $0x54] sm:$0xf]
  %v41 = vld [vmem:[%s1 + $0x58] sm:$0xf]
  %v42 = vld [vmem:[%s1 + $0x5c] sm:$0xf]
  %v43 = vld [vmem:[%s1 + $0x60] sm:$0xf]
  %v44 = vld [vmem:[%s1 + $0x64] sm:$0xf]
  %v45 = vld [vmem:[%s1 + $0x68] sm:$0xf]
  %v46 = vld [vmem:[%s1 + $0x6c] sm:$0xf]
  %v47 = vld [vmem:[%s1 + $0x70] sm:$0xf]
  %v48 = vld [vmem:[%s1 + $0x74] sm:$0xf]
  %v49 = vld [vmem:[%s1 + $0x78] sm:$0xf]
  %v50 = vld [vmem:[%s1 + $0x7c] sm:$0xf]
  %v51 = vld [vmem:[%s1 + $0x80] sm:$0xf]
  %v52 = vld [vmem:[%s1 + $0x84] sm:$0xf]
  %v53 = vld [vmem:[%s1 + $0x88] sm:$0xf]
  %v54 = vld [vmem:[%s1 + $0x8c] sm:$0xf]
  %v55 = vld [vmem:[%s2] sm:$0x1]
  %v57 = vperm.slane %v55, 0
  %v63 = vunpack.c.l.b16 %v15
  %v64 = vunpack.c.h.b16 %v15
  %v65 = vunpack.c.l.b16 %v16
  %v66 = vunpack.c.l.b16 %v17
  %v67 = vunpack.c.h.b16 %v17
  %v68 = vunpack.c.l.b16 %v18
  %v69 = vpack.c.b16 %v66, %v63
  %v70 = vpack.c.b16 %v67, %v64
  %v71 = vpack.c.b16 %v68, %v65
  %v110 = vunpack.c.l.b16 %v19
  %v111 = vunpack.c.l.b16 %v20
  %v112 = vunpack.c.l.b16 %v21
  %v113 = vunpack.c.l.b16 %v22
  %v114 = vunpack.c.l.b16 %v23
  %v115 = vunpack.c.l.b16 %v24
  %v116 = vunpack.c.l.b16 %v25
  %v117 = vunpack.c.l.b16 %v26
  %v118 = vunpack.c.l.b16 %v27
  %v119 = vunpack.c.l.b16 %v28
  %v120 = vunpack.c.l.b16 %v29
  %v121 = vunpack.c.l.b16 %v30
  %v122 = vunpack.c.l.b16 %v31
  %v123 = vunpack.c.l.b16 %v32
  %v124 = vunpack.c.l.b16 %v33
  %v125 = vunpack.c.l.b16 %v34
  %v126 = vunpack.c.l.b16 %v35
  %v127 = vunpack.c.l.b16 %v36
  %v128 = vunpack.c.l.b16 %v37
  %v129 = vunpack.c.l.b16 %v38
  %v130 = vunpack.c.l.b16 %v39
  %v131 = vunpack.c.l.b16 %v40
  %v132 = vunpack.c.l.b16 %v41
  %v133 = vunpack.c.l.b16 %v42
  %v134 = vunpack.c.l.b16 %v43
  %v135 = vunpack.c.l.b16 %v44
  %v136 = vunpack.c.l.b16 %v45
  %v137 = vunpack.c.l.b16 %v46
  %v138 = vunpack.c.l.b16 %v47
  %v139 = vunpack.c.l.b16 %v48
  %v140 = vunpack.c.l.b16 %v49
  %v141 = vunpack.c.l.b16 %v50
  %v142 = vunpack.c.l.b16 %v51
  %v143 = vunpack.c.l.b16 %v52
  %v144 = vunpack.c.l.b16 %v53
  %v145 = vunpack.c.l.b16 %v54
  %v146 = vpack.c.b16 %v111, %v110
  %v147 = vpack.c.b16 %v113, %v112
  %v148 = vpack.c.b16 %v115, %v114
  %v149 = vpack.c.b16 %v117, %v116
  %v150 = vpack.c.b16 %v119, %v118
  %v151 = vpack.c.b16 %v121, %v120
  %v152 = vpack.c.b16 %v123, %v122
  %v153 = vpack.c.b16 %v125, %v124
  %v154 = vpack.c.b16 %v127, %v126
  %v155 = vpack.c.b16 %v129, %v128
  %v156 = vpack.c.b16 %v131, %v130
  %v157 = vpack.c.b16 %v133, %v132
  %v158 = vpack.c.b16 %v135, %v134
  %v159 = vpack.c.b16 %v137, %v136
  %v160 = vpack.c.b16 %v139, %v138
  %v161 = vpack.c.b16 %v141, %v140
  %v162 = vpack.c.b16 %v143, %v142
  %v163 = vpack.c.b16 %v145, %v144
  %vm182 = vcmask 261120
  %v184 = vsel %vm182, %v71, 0
  %186 = vmatpush.bf16.msra.mxu0 %v153
  %187 = vmatpush.bf16.msra.mxu0 %v152
  %188 = vmatpush.bf16.msra.mxu0 %v151
  %189 = vmatpush.bf16.msra.mxu0 %v150
  %190 = vmatpush.bf16.msra.mxu0 %v149
  %191 = vmatpush.bf16.msra.mxu0 %v148
  %192 = vmatpush.bf16.msra.mxu0 %v147
  %193 = vmatpush.bf16.msra.mxu0 %v146
  %194 = vmatmul.bf16.gmra.mxu0 %v69
  %v195 = vpop.f32.mrf.mxu0
  %v196 = vadd.f32 %v57, %v195
  %v197 = vpop.f32.mrf.mxu0
  %v198 = vadd.f32 %v57, %v197
  %199 = vdwg.mxu0
  %200 = vmatpush.bf16.msra.mxu0 %v161
  %201 = vmatpush.bf16.msra.mxu0 %v160
  %202 = vmatpush.bf16.msra.mxu0 %v159
  %203 = vmatpush.bf16.msra.mxu0 %v158
  %204 = vmatpush.bf16.msra.mxu0 %v157
  %205 = vmatpush.bf16.msra.mxu0 %v156
  %206 = vmatpush.bf16.msra.mxu0 %v155
  %207 = vmatpush.bf16.msra.mxu0 %v154
  %208 = vmatmul.bf16.gmra.mxu0 %v70
  %v209 = vpop.f32.mrf.mxu0
  %v210 = vadd.f32 %v196, %v209
  %v211 = vpop.f32.mrf.mxu0
  %v212 = vadd.f32 %v198, %v211
  %213 = vdwg.mxu0
  %214 = vmatpush.bf16.msra.mxu0 0
  %215 = vmatpush.bf16.msra.mxu0 0
  %216 = vmatpush.bf16.msra.mxu0 0
  %217 = vmatpush.bf16.msra.mxu0 0
  %218 = vmatpush.bf16.msra.mxu0 0
  %219 = vmatpush.bf16.msra.mxu0 0
  %220 = vmatpush.bf16.msra.mxu0 %v163
  %221 = vmatpush.bf16.msra.mxu0 %v162
  %222 = vmatmul.bf16.gmra.mxu0 %v184
  %v223 = vpop.f32.mrf.mxu0
  %v224 = vadd.f32 %v210, %v223
  %v225 = vpop.f32.mrf.mxu0
  %v226 = vadd.f32 %v212, %v225
  %227 = vdwg.mxu0
  %v228 = vmax.f32 %v224, 0.0
  %v229 = vmax.f32 %v226, 0.0
  %v230 = vpack.c.bf16 %v228, %v228
  %v231 = vpack.c.bf16 %v229, %v229
  %vm232 = vcmask 519168
  %233 = vst.msk [vmem:[%s3] sm:$0xf] %vm232, %v230
  %234 = vst.msk [vmem:[%s3 + $0x4] sm:$0xf] %vm232, %v231
  // Predicated region
  $region14: #{convo_classifier_forward.13} parent=0 // pred_check
    _
  $region15: #{convo_classifier_forward.13} parent=0 // pred_check_branch
    %236 = sbr.rel (0) target = $region17
  $region16: #{convo_classifier_forward.13} parent=0 // pred_region
    _
  $region17: #{convo_classifier_forward.13} parent=0 // pred_fallthru
    _
  // Predicated region
  $region18: #{convo_classifier_forward.13} parent=0 // pred_check
    _
  $region19: #{convo_classifier_forward.13} parent=0 // pred_check_branch
    %238 = sbr.rel (0) target = $region21
  $region20: #{convo_classifier_forward.13} parent=0 // pred_region
    _
  $region21: #{convo_classifier_forward.13} parent=0 // pred_fallthru
    _

// kernel: convo_classifier_forward.14
$region0: #{convo_classifier_forward.14}
  #allocation0 [shape = 'u32[]', space=smem, size = 0x4, offset = 0x4, fixed_abs, tag = 'smem constant byte address 0x4 - core index']
  #allocation1 [shape = 'u32[72,128]{1,0:T(1,128)}', space=vmem, size = 0x9000, scoped, tag = 'internal scratch']
  %s0 = inlined_call_operand.vmem [shape: bf16[2,24,64], index: 0, kind: input, shape index: {}]
  %s1 = inlined_call_operand.vmem [shape: bf16[9,64,64], index: 1, kind: input, shape index: {}]
  %s2 = inlined_call_operand.vmem [shape: f32[1,64], index: 2, kind: input, shape index: {}]
  %s3 = inlined_call_operand.vmem [shape: f32[1,64], index: 3, kind: input, shape index: {}]
  %s4 = inlined_call_operand.vmem [shape: bf16[2,8,64], index: 4, kind: output, shape index: {}]
  %s5 = sld [smem:[#allocation0]]
  $region49: #{convo_classifier_forward.14} parent=0
    _
  %s7 = ssub.s32 1, %s5
  %s8 = scalar_select 0, %s7, %s5
  loop: start=0, step=1, limit=4
  $region2: #{convo_classifier_forward.14} parent=0 // loop_pre_header
    _
  $region3: #{convo_classifier_forward.14} parent=0 // loop_header
    %s10 = sphi 0, %s14
    %p11 = scmp.ge.s32.totalorder %s10, 4
    %s20 = sphi 0, %s22
    %s23 = sphi 0, %s20
    %s24 = sphi 0, %s23
    %s40 = sphi 0, %s24
    %s44 = sphi 0, %s44
    %s46 = sphi 0, %s44
    %s47 = sphi 0, %s46
    %s61 = sphi 0, %s47
    %s65 = sphi 0, %s65
    %s67 = sphi 0, %s65
    %s68 = sphi 0, %s67
    %s82 = sphi 0, %s68
    %s86 = sphi 0, %s86
    %s88 = sphi 0, %s86
    %s89 = sphi 0, %s88
    %s103 = sphi 0, %s89
    %s109 = sphi 0, %s111
    %s112 = sphi 0, %s109
    %s113 = sphi 0, %s112
    %s129 = sphi 0, %s113
  $region4: #{convo_classifier_forward.14} parent=0 // loop_header_branch
    %13 = sbr.rel (%p11) target = $region8
  $region5: #{convo_classifier_forward.14} parent=0 // loop_body
    %s15 = ssub.s32 %s10, 1
    %s16 = ssub.s32 %s10, 2
    %s17 = sadd.s32 %s10, 1
    %s18 = ssub.s32 %s10, %s17
    %p19 = scmp.eq.s32.totalorder %s18, 0
    %s21 = sadd.s32 %s20, 1
    %s22 = scalar_select %p19, %s20, %s21
    %p25 = pneg %p19
    %p26 = scmp.eq.s32.totalorder %s10, 1
    %p27 = por %p25, %p26
    %p28 = scmp.ne.s32.totalorder %s20, %s23
    %p29 = scmp.eq.s32.totalorder %s10, 0
    %p30 = por %p28, %p29
    %p31 = scmp.ne.s32.totalorder %s20, %s23
    %p32 = scmp.eq.s32.totalorder %s15, 1
    %p33 = por %p31, %p32
    %p34 = scmp.ne.s32.totalorder %s23, %s24
    %p35 = scmp.eq.s32.totalorder %s15, 0
    %p36 = por %p34, %p35
    %p37 = scmp.ne.s32.totalorder %s23, %s24
    %p38 = scmp.eq.s32.totalorder %s16, 1
    %p39 = por %p37, %p38
    %p41 = scmp.ne.s32.totalorder %s24, %s40
    %p42 = scmp.eq.s32.totalorder %s16, 0
    %p43 = por %p41, %p42
    %s45 = sadd.s32 %s44, 1
    %p48 = scmp.eq.s32.totalorder %s10, 1
    %p49 = scmp.ne.s32.totalorder %s44, %s46
    %p50 = scmp.eq.s32.totalorder %s10, 0
    %p51 = por %p49, %p50
    %p52 = scmp.ne.s32.totalorder %s44, %s46
    %p53 = scmp.eq.s32.totalorder %s15, 1
    %p54 = por %p52, %p53
    %p55 = scmp.ne.s32.totalorder %s46, %s47
    %p56 = scmp.eq.s32.totalorder %s15, 0
    %p57 = por %p55, %p56
    %p58 = scmp.ne.s32.totalorder %s46, %s47
    %p59 = scmp.eq.s32.totalorder %s16, 1
    %p60 = por %p58, %p59
    %p62 = scmp.ne.s32.totalorder %s47, %s61
    %p63 = scmp.eq.s32.totalorder %s16, 0
    %p64 = por %p62, %p63
    %s66 = sadd.s32 %s65, 1
    %p69 = scmp.eq.s32.totalorder %s10, 1
    %p70 = scmp.ne.s32.totalorder %s65, %s67
    %p71 = scmp.eq.s32.totalorder %s10, 0
    %p72 = por %p70, %p71
    %p73 = scmp.ne.s32.totalorder %s65, %s67
    %p74 = scmp.eq.s32.totalorder %s15, 1
    %p75 = por %p73, %p74
    %p76 = scmp.ne.s32.totalorder %s67, %s68
    %p77 = scmp.eq.s32.totalorder %s15, 0
    %p78 = por %p76, %p77
    %p79 = scmp.ne.s32.totalorder %s67, %s68
    %p80 = scmp.eq.s32.totalorder %s16, 1
    %p81 = por %p79, %p80
    %p83 = scmp.ne.s32.totalorder %s68, %s82
    %p84 = scmp.eq.s32.totalorder %s16, 0
    %p85 = por %p83, %p84
    %s87 = sadd.s32 %s86, 1
    %p90 = scmp.eq.s32.totalorder %s10, 1
    %p91 = scmp.ne.s32.totalorder %s86, %s88
    %p92 = scmp.eq.s32.totalorder %s10, 0
    %p93 = por %p91, %p92
    %p94 = scmp.ne.s32.totalorder %s86, %s88
    %p95 = scmp.eq.s32.totalorder %s15, 1
    %p96 = por %p94, %p95
    %p97 = scmp.ne.s32.totalorder %s88, %s89
    %p98 = scmp.eq.s32.totalorder %s15, 0
    %p99 = por %p97, %p98
    %p100 = scmp.ne.s32.totalorder %s88, %s89
    %p101 = scmp.eq.s32.totalorder %s16, 1
    %p102 = por %p100, %p101
    %p104 = scmp.ne.s32.totalorder %s89, %s103
    %p105 = scmp.eq.s32.totalorder %s16, 0
    %p106 = por %p104, %p105
    %s107 = ssub.s32 %s10, %s17
    %p108 = scmp.eq.s32.totalorder %s107, 0
    %s110 = sadd.s32 %s109, 1
    %s111 = scalar_select %p108, %s109, %s110
    %p114 = pneg %p108
    %p115 = scmp.eq.s32.totalorder %s10, 1
    %p116 = por %p114, %p115
    %p117 = scmp.ne.s32.totalorder %s109, %s112
    %p118 = scmp.eq.s32.totalorder %s10, 0
    %p119 = por %p117, %p118
    %p120 = scmp.ne.s32.totalorder %s109, %s112
    %p121 = scmp.eq.s32.totalorder %s15, 1
    %p122 = por %p120, %p121
    %p123 = scmp.ne.s32.totalorder %s112, %s113
    %p124 = scmp.eq.s32.totalorder %s15, 0
    %p125 = por %p123, %p124
    %p126 = scmp.ne.s32.totalorder %s112, %s113
    %p127 = scmp.eq.s32.totalorder %s16, 1
    %p128 = por %p126, %p127
    %p130 = scmp.ne.s32.totalorder %s113, %s129
    %p131 = scmp.eq.s32.totalorder %s16, 0
    %p132 = por %p130, %p131
    %p133 = scmp.le.s32.totalorder 1, %s10
    %p134 = scmp.lt.s32.totalorder %s10, 3
    %p135 = pnand %p133, %p134
    %p136 = pneg %p135
    // Predicated region
    $region9: #{convo_classifier_forward.14} parent=5 // pred_check
      _
    $region10: #{convo_classifier_forward.14} parent=5 // pred_check_branch
      %138 = sbr.rel (%p135) target = $region12
    $region11: #{convo_classifier_forward.14} parent=5 // pred_region
      %s139 = ssub.s32 %s10, 1
      // Predicated region
      $region13: #{convo_classifier_forward.14} parent=11 // pred_check
        %p140 = pneg %p57
      $region14: #{convo_classifier_forward.14} parent=11 // pred_check_branch
        %142 = sbr.rel (%p140) target = $region16
      $region15: #{convo_classifier_forward.14} parent=11 // pred_region
        _
      $region16: #{convo_classifier_forward.14} parent=11 // pred_fallthru
        _
      // Predicated region
      $region17: #{convo_classifier_forward.14} parent=11 // pred_check
        %p143 = pneg %p78
      $region18: #{convo_classifier_forward.14} parent=11 // pred_check_branch
        %145 = sbr.rel (%p143) target = $region20
      $region19: #{convo_classifier_forward.14} parent=11 // pred_region
        _
      $region20: #{convo_classifier_forward.14} parent=11 // pred_fallthru
        _
      // Predicated region
      $region21: #{convo_classifier_forward.14} parent=11 // pred_check
        %p146 = pneg %p99
      $region22: #{convo_classifier_forward.14} parent=11 // pred_check_branch
        %148 = sbr.rel (%p146) target = $region24
      $region23: #{convo_classifier_forward.14} parent=11 // pred_region
        _
      $region24: #{convo_classifier_forward.14} parent=11 // pred_fallthru
        _
    $region12: #{convo_classifier_forward.14} parent=5 // pred_fallthru
      _
    %p149 = scmp.lt.s32.totalorder %s10, 2
    // Predicated region
    $region25: #{convo_classifier_forward.14} parent=5 // pred_check
      %p150 = pneg %p149
    $region26: #{convo_classifier_forward.14} parent=5 // pred_check_branch
      %152 = sbr.rel (%p150) target = $region28
    $region27: #{convo_classifier_forward.14} parent=5 // pred_region
      // Predicated region
      $region29: #{convo_classifier_forward.14} parent=27 // pred_check
        %p153 = pneg %p30
      $region30: #{convo_classifier_forward.14} parent=27 // pred_check_branch
        %155 = sbr.rel (%p153) target = $region32
      $region31: #{convo_classifier_forward.14} parent=27 // pred_region
        %p156 = scmp.lt.s32.totalorder %s10, 1
        %s157 = scalar_select %p156, %s10, 1
        %s158 = smul.addr %s157, 3
        %s159 = smul.addr %s158, 4
        %s160 = scalar_lea.vmem %s0, %s159
      $region32: #{convo_classifier_forward.14} parent=27 // pred_fallthru
        _
    $region28: #{convo_classifier_forward.14} parent=5 // pred_fallthru
      _
    %p161 = scmp.le.s32.totalorder 1, %s10
    %p162 = scmp.lt.s32.totalorder %s10, 3
    %p163 = pnand %p161, %p162
    %p164 = pneg %p163
    // Predicated region
    $region33: #{convo_classifier_forward.14} parent=5 // pred_check
      _
    $region34: #{convo_classifier_forward.14} parent=5 // pred_check_branch
      %166 = sbr.rel (%p163) target = $region36
    $region35: #{convo_classifier_forward.14} parent=5 // pred_region
      %s167 = ssub.s32 %s10, 1
      %p168 = scmp.lt.s32.totalorder %s15, 1
      %s169 = scalar_select %p168, %s15, 1
      %s170 = smul.addr %s169, 3
      %s171 = smul.addr %s170, 4
      %s172 = scalar_lea.vmem %s0, %s171
      %p173 = pneg %p36
      %p174 = pneg %p33
      %p175 = pneg %p57
      %p176 = pneg %p54
      %p177 = pneg %p78
      %p178 = pneg %p75
      %p179 = pneg %p99
      %p180 = pneg %p96
      %p181 = pneg %p125
      %p182 = pneg %p122
      %p183 = scmp.lt.s32.totalorder %s15, 1
      %s184 = scalar_select %p183, %s15, 1
      %s185 = smul.addr %s184, 4
      %s186 = scalar_lea.vmem %s4, %s185
      %p187 = scmp.lt.s32.totalorder %s15, 1
      %s188 = scalar_select %p187, %s15, 1
      %s189 = smul.addr %s188, 3
      %s190 = smul.addr %s189, 4
      %s191 = scalar_lea.vmem %s0, %s190
      %p192 = scmp.lt.s32.totalorder %s15, 1
      %s193 = scalar_select %p192, %s15, 1
      %s194 = smul.addr %s193, 4
      %s195 = scalar_lea.vmem %s4, %s194
      %v197 = vld [vmem:[%s191] sm:$0xf]
      %v198 = vld [vmem:[%s1] sm:$0xf]
      %v199 = vld [vmem:[%s1 + $0x4] sm:$0xf]
      %v200 = vld [vmem:[%s1 + $0x8] sm:$0xf]
      %v201 = vld [vmem:[%s1 + $0xc] sm:$0xf]
      %v202 = vld [vmem:[%s1 + $0x10] sm:$0xf]
      %v203 = vld [vmem:[%s1 + $0x14] sm:$0xf]
      %v204 = vld [vmem:[%s1 + $0x18] sm:$0xf]
      %v205 = vld [vmem:[%s1 + $0x1c] sm:$0xf]
      %v206 = vld [vmem:[%s191 + $0x4] sm:$0x1]
      %s207 = scalar_lea.vmem %s1, 32
      %v208 = vld [vmem:[%s207] sm:$0xf]
      %v209 = vld [vmem:[%s207 + $0x4] sm:$0xf]
      %v210 = vld [vmem:[%s207 + $0x8] sm:$0xf]
      %v211 = vld [vmem:[%s207 + $0xc] sm:$0xf]
      %v212 = vld [vmem:[%s207 + $0x10] sm:$0xf]
      %v213 = vld [vmem:[%s207 + $0x14] sm:$0xf]
      %v214 = vld [vmem:[%s207 + $0x18] sm:$0xf]
      %v215 = vld [vmem:[%s207 + $0x1c] sm:$0xf]
      %v218 = vunpack.c.l.b16 %v197
      %v219 = vunpack.c.l.b16 %v206
      %v220 = vpack.c.b16 %v219, %v218
      %v222 = vshrl.u32 %v220, 16
      %v224 = vshll.u32 %v220, 16
      %v226 = vrot.slane %v224, 1
      %v227 = vor.u32 %v222, %v226
      %v236 = vunpack.c.l.b16 %v208
      %v237 = vunpack.c.l.b16 %v209
      %v238 = vunpack.c.l.b16 %v210
      %v239 = vunpack.c.l.b16 %v211
      %v240 = vunpack.c.l.b16 %v212
      %v241 = vunpack.c.l.b16 %v213
      %v242 = vunpack.c.l.b16 %v214
      %v243 = vunpack.c.l.b16 %v215
      %v244 = vpack.c.b16 %v237, %v236
      %v245 = vpack.c.b16 %v239, %v238
      %v246 = vpack.c.b16 %v241, %v240
      %v247 = vpack.c.b16 %v243, %v242
      %vm252 = vcmask 523264
      %v254 = vsel %vm252, %v227, 0
      %256 = vmatpush.bf16.msra.mxu0 0
      %257 = vmatpush.bf16.msra.mxu0 0
      %258 = vmatpush.bf16.msra.mxu0 0
      %259 = vmatpush.bf16.msra.mxu0 0
      %260 = vmatpush.bf16.msra.mxu0 %v247
      %261 = vmatpush.bf16.msra.mxu0 %v246
      %262 = vmatpush.bf16.msra.mxu0 %v245
      %263 = vmatpush.bf16.msra.mxu0 %v244
      %264 = vmatmul.bf16.gmra.mxu0 %v254
      %v265 = vpop.f32.mrf.mxu0
      %v266 = vadd.f32 0.0, %v265
      %v267 = vpop.f32.mrf.mxu0
      %268 = vdwg.mxu0
      %v277 = vunpack.c.l.b16 %v198
      %v278 = vunpack.c.l.b16 %v199
      %v279 = vunpack.c.l.b16 %v200
      %v280 = vunpack.c.l.b16 %v201
      %v281 = vunpack.c.l.b16 %v202
      %v282 = vunpack.c.l.b16 %v203
      %v283 = vunpack.c.l.b16 %v204
      %v284 = vunpack.c.l.b16 %v205
      %v285 = vpack.c.b16 %v278, %v277
      %v286 = vpack.c.b16 %v280, %v279
      %v287 = vpack.c.b16 %v282, %v281
      %v288 = vpack.c.b16 %v284, %v283
      %v294 = vsel %vm252, %v197, 0
      %296 = vmatpush.bf16.msra.mxu0 0
      %297 = vmatpush.bf16.msra.mxu0 0
      %298 = vmatpush.bf16.msra.mxu0 0
      %299 = vmatpush.bf16.msra.mxu0 0
      %300 = vmatpush.bf16.msra.mxu0 %v288
      %301 = vmatpush.bf16.msra.mxu0 %v287
      %302 = vmatpush.bf16.msra.mxu0 %v286
      %303 = vmatpush.bf16.msra.mxu0 %v285
      %304 = vmatmul.bf16.gmra.mxu0 %v294
      %v305 = vpop.f32.mrf.mxu0
      %v306 = vadd.f32 %v266, %v305
      %v307 = vpop.f32.mrf.mxu0
      %308 = vdwg.mxu0
      %v309 = vld [vmem:[%s191] sm:$0xe]
      %s310 = scalar_lea.vmem %s1, 64
      %v311 = vld [vmem:[%s310] sm:$0xf]
      %v312 = vld [vmem:[%s310 + $0x4] sm:$0xf]
      %v313 = vld [vmem:[%s310 + $0x8] sm:$0xf]
      %v314 = vld [vmem:[%s310 + $0xc] sm:$0xf]
      %v315 = vld [vmem:[%s310 + $0x10] sm:$0xf]
      %v316 = vld [vmem:[%s310 + $0x14] sm:$0xf]
      %v317 = vld [vmem:[%s310 + $0x18] sm:$0xf]
      %v318 = vld [vmem:[%s310 + $0x1c] sm:$0xf]
      %v320 = vunpack.c.l.b16 %v309
      %v321 = vpack.c.b16 %v219, %v320
      %v322 = vrot.slane %v321, 1
      %v331 = vunpack.c.l.b16 %v311
      %v332 = vunpack.c.l.b16 %v312
      %v333 = vunpack.c.l.b16 %v313
      %v334 = vunpack.c.l.b16 %v314
      %v335 = vunpack.c.l.b16 %v315
      %v336 = vunpack.c.l.b16 %v316
      %v337 = vunpack.c.l.b16 %v317
      %v338 = vunpack.c.l.b16 %v318
      %v339 = vpack.c.b16 %v332, %v331
      %v340 = vpack.c.b16 %v334, %v333
      %v341 = vpack.c.b16 %v336, %v335
      %v342 = vpack.c.b16 %v338, %v337
      %v348 = vsel %vm252, %v322, 0
      %350 = vmatpush.bf16.msra.mxu0 0
      %351 = vmatpush.bf16.msra.mxu0 0
      %352 = vmatpush.bf16.msra.mxu0 0
      %353 = vmatpush.bf16.msra.mxu0 0
      %354 = vmatpush.bf16.msra.mxu0 %v342
      %355 = vmatpush.bf16.msra.mxu0 %v341
      %356 = vmatpush.bf16.msra.mxu0 %v340
      %357 = vmatpush.bf16.msra.mxu0 %v339
      %358 = vmatmul.bf16.gmra.mxu0 %v348
      %v359 = vpop.f32.mrf.mxu0
      %v360 = vadd.f32 0.0, %v359
      %v361 = vpop.f32.mrf.mxu0
      %362 = vdwg.mxu0
      %v363 = vadd.f32 %v306, %v360
      %v364 = vld [vmem:[%s191] sm:$0xc]
      %v365 = vld [vmem:[%s191 + $0x4] sm:$0x3]
      %s366 = scalar_lea.vmem %s1, 96
      %v367 = vld [vmem:[%s366] sm:$0xf]
      %v368 = vld [vmem:[%s366 + $0x4] sm:$0xf]
      %v369 = vld [vmem:[%s366 + $0x8] sm:$0xf]
      %v370 = vld [vmem:[%s366 + $0xc] sm:$0xf]
      %v371 = vld [vmem:[%s366 + $0x10] sm:$0xf]
      %v372 = vld [vmem:[%s366 + $0x14] sm:$0xf]
      %v373 = vld [vmem:[%s366 + $0x18] sm:$0xf]
      %v374 = vld [vmem:[%s366 + $0x1c] sm:$0xf]
      %v377 = vunpack.c.l.b16 %v364
      %v378 = vunpack.c.l.b16 %v365
      %v379 = vpack.c.b16 %v378, %v377
      %v380 = vrot.slane %v379, 2
      %v389 = vunpack.c.l.b16 %v367
      %v390 = vunpack.c.l.b16 %v368
      %v391 = vunpack.c.l.b16 %v369
      %v392 = vunpack.c.l.b16 %v370
      %v393 = vunpack.c.l.b16 %v371
      %v394 = vunpack.c.l.b16 %v372
      %v395 = vunpack.c.l.b16 %v373
      %v396 = vunpack.c.l.b16 %v374
      %v397 = vpack.c.b16 %v390, %v389
      %v398 = vpack.c.b16 %v392, %v391
      %v399 = vpack.c.b16 %v394, %v393
      %v400 = vpack.c.b16 %v396, %v395
      %v406 = vsel %vm252, %v380, 0
      %408 = vmatpush.bf16.msra.mxu0 0
      %409 = vmatpush.bf16.msra.mxu0 0
      %410 = vmatpush.bf16.msra.mxu0 0
      %411 = vmatpush.bf16.msra.mxu0 0
      %412 = vmatpush.bf16.msra.mxu0 %v400
      %413 = vmatpush.bf16.msra.mxu0 %v399
      %414 = vmatpush.bf16.msra.mxu0 %v398
      %415 = vmatpush.bf16.msra.mxu0 %v397
      %416 = vmatmul.bf16.gmra.mxu0 %v406
      %v417 = vpop.f32.mrf.mxu0
      %v418 = vadd.f32 0.0, %v417
      %v419 = vpop.f32.mrf.mxu0
      %420 = vdwg.mxu0
      %v421 = vadd.f32 %v363, %v418
      %v422 = vld [vmem:[%s191 + $0x4] sm:$0x7]
      %s423 = scalar_lea.vmem %s1, 128
      %v424 = vld [vmem:[%s423] sm:$0xf]
      %v425 = vld [vmem:[%s423 + $0x4] sm:$0xf]
      %v426 = vld [vmem:[%s423 + $0x8] sm:$0xf]
      %v427 = vld [vmem:[%s423 + $0xc] sm:$0xf]
      %v428 = vld [vmem:[%s423 + $0x10] sm:$0xf]
      %v429 = vld [vmem:[%s423 + $0x14] sm:$0xf]
      %v430 = vld [vmem:[%s423 + $0x18] sm:$0xf]
      %v431 = vld [vmem:[%s423 + $0x1c] sm:$0xf]
      %v433 = vunpack.c.l.b16 %v422
      %v434 = vpack.c.b16 %v433, %v377
      %v436 = vshrl.u32 %v434, 16
      %v438 = vrot.slane %v436, 2
      %v439 = vshll.u32 %v434, 16
      %v441 = vrot.slane %v439, 3
      %v442 = vor.u32 %v438, %v441
      %v451 = vunpack.c.l.b16 %v424
      %v452 = vunpack.c.l.b16 %v425
      %v453 = vunpack.c.l.b16 %v426
      %v454 = vunpack.c.l.b16 %v427
      %v455 = vunpack.c.l.b16 %v428
      %v456 = vunpack.c.l.b16 %v429
      %v457 = vunpack.c.l.b16 %v430
      %v458 = vunpack.c.l.b16 %v431
      %v459 = vpack.c.b16 %v452, %v451
      %v460 = vpack.c.b16 %v454, %v453
      %v461 = vpack.c.b16 %v456, %v455
      %v462 = vpack.c.b16 %v458, %v457
      %v468 = vsel %vm252, %v442, 0
      %470 = vmatpush.bf16.msra.mxu0 0
      %471 = vmatpush.bf16.msra.mxu0 0
      %472 = vmatpush.bf16.msra.mxu0 0
      %473 = vmatpush.bf16.msra.mxu0 0
      %474 = vmatpush.bf16.msra.mxu0 %v462
      %475 = vmatpush.bf16.msra.mxu0 %v461
      %476 = vmatpush.bf16.msra.mxu0 %v460
      %477 = vmatpush.bf16.msra.mxu0 %v459
      %478 = vmatmul.bf16.gmra.mxu0 %v468
      %v479 = vpop.f32.mrf.mxu0
      %v480 = vadd.f32 0.0, %v479
      %v481 = vpop.f32.mrf.mxu0
      %482 = vdwg.mxu0
      %v483 = vadd.f32 %v421, %v480
      %v484 = vld [vmem:[%s191] sm:$0x8]
      %s485 = scalar_lea.vmem %s1, 160
      %v486 = vld [vmem:[%s485] sm:$0xf]
      %v487 = vld [vmem:[%s485 + $0x4] sm:$0xf]
      %v488 = vld [vmem:[%s485 + $0x8] sm:$0xf]
      %v489 = vld [vmem:[%s485 + $0xc] sm:$0xf]
      %v490 = vld [vmem:[%s485 + $0x10] sm:$0xf]
      %v491 = vld [vmem:[%s485 + $0x14] sm:$0xf]
      %v492 = vld [vmem:[%s485 + $0x18] sm:$0xf]
      %v493 = vld [vmem:[%s485 + $0x1c] sm:$0xf]
      %v495 = vunpack.c.l.b16 %v484
      %v496 = vpack.c.b16 %v433, %v495
      %v497 = vrot.slane %v496, 3
      %v506 = vunpack.c.l.b16 %v486
      %v507 = vunpack.c.l.b16 %v487
      %v508 = vunpack.c.l.b16 %v488
      %v509 = vunpack.c.l.b16 %v489
      %v510 = vunpack.c.l.b16 %v490
      %v511 = vunpack.c.l.b16 %v491
      %v512 = vunpack.c.l.b16 %v492
      %v513 = vunpack.c.l.b16 %v493
      %v514 = vpack.c.b16 %v507, %v506
      %v515 = vpack.c.b16 %v509, %v508
      %v516 = vpack.c.b16 %v511, %v510
      %v517 = vpack.c.b16 %v513, %v512
      %v523 = vsel %vm252, %v497, 0
      %525 = vmatpush.bf16.msra.mxu0 0
      %526 = vmatpush.bf16.msra.mxu0 0
      %527 = vmatpush.bf16.msra.mxu0 0
      %528 = vmatpush.bf16.msra.mxu0 0
      %529 = vmatpush.bf16.msra.mxu0 %v517
      %530 = vmatpush.bf16.msra.mxu0 %v516
      %531 = vmatpush.bf16.msra.mxu0 %v515
      %532 = vmatpush.bf16.msra.mxu0 %v514
      %533 = vmatmul.bf16.gmra.mxu0 %v523
      %v534 = vpop.f32.mrf.mxu0
      %v535 = vadd.f32 0.0, %v534
      %v536 = vpop.f32.mrf.mxu0
      %537 = vdwg.mxu0
      %v538 = vadd.f32 %v483, %v535
      %v539 = vld [vmem:[%s191 + $0x4] sm:$0xf]
      %s540 = scalar_lea.vmem %s1, 192
      %v541 = vld [vmem:[%s540] sm:$0xf]
      %v542 = vld [vmem:[%s540 + $0x4] sm:$0xf]
      %v543 = vld [vmem:[%s540 + $0x8] sm:$0xf]
      %v544 = vld [vmem:[%s540 + $0xc] sm:$0xf]
      %v545 = vld [vmem:[%s540 + $0x10] sm:$0xf]
      %v546 = vld [vmem:[%s540 + $0x14] sm:$0xf]
      %v547 = vld [vmem:[%s540 + $0x18] sm:$0xf]
      %v548 = vld [vmem:[%s540 + $0x1c] sm:$0xf]
      %v557 = vunpack.c.l.b16 %v541
      %v558 = vunpack.c.l.b16 %v542
      %v559 = vunpack.c.l.b16 %v543
      %v560 = vunpack.c.l.b16 %v544
      %v561 = vunpack.c.l.b16 %v545
      %v562 = vunpack.c.l.b16 %v546
      %v563 = vunpack.c.l.b16 %v547
      %v564 = vunpack.c.l.b16 %v548
      %v565 = vpack.c.b16 %v558, %v557
      %v566 = vpack.c.b16 %v560, %v559
      %v567 = vpack.c.b16 %v562, %v561
      %v568 = vpack.c.b16 %v564, %v563
      %v574 = vsel %vm252, %v539, 0
      %576 = vmatpush.bf16.msra.mxu0 0
      %577 = vmatpush.bf16.msra.mxu0 0
      %578 = vmatpush.bf16.msra.mxu0 0
      %579 = vmatpush.bf16.msra.mxu0 0
      %580 = vmatpush.bf16.msra.mxu0 %v568
      %581 = vmatpush.bf16.msra.mxu0 %v567
      %582 = vmatpush.bf16.msra.mxu0 %v566
      %583 = vmatpush.bf16.msra.mxu0 %v565
      %584 = vmatmul.bf16.gmra.mxu0 %v574
      %v585 = vpop.f32.mrf.mxu0
      %v586 = vadd.f32 0.0, %v585
      %v587 = vpop.f32.mrf.mxu0
      %588 = vdwg.mxu0
      %v589 = vadd.f32 %v538, %v586
      %v590 = vld [vmem:[%s191 + $0x4] sm:$0xf]
      %v591 = vld [vmem:[%s191 + $0x8] sm:$0x1]
      %s592 = scalar_lea.vmem %s1, 224
      %v593 = vld [vmem:[%s592] sm:$0xf]
      %v594 = vld [vmem:[%s592 + $0x4] sm:$0xf]
      %v595 = vld [vmem:[%s592 + $0x8] sm:$0xf]
      %v596 = vld [vmem:[%s592 + $0xc] sm:$0xf]
      %v597 = vld [vmem:[%s592 + $0x10] sm:$0xf]
      %v598 = vld [vmem:[%s592 + $0x14] sm:$0xf]
      %v599 = vld [vmem:[%s592 + $0x18] sm:$0xf]
      %v600 = vld [vmem:[%s592 + $0x1c] sm:$0xf]
      %v603 = vunpack.c.l.b16 %v590
      %v604 = vunpack.c.l.b16 %v591
      %v605 = vpack.c.b16 %v604, %v603
      %v607 = vshrl.u32 %v605, 16
      %v609 = vshll.u32 %v605, 16
      %v611 = vrot.slane %v609, 1
      %v612 = vor.u32 %v607, %v611
      %v621 = vunpack.c.l.b16 %v593
      %v622 = vunpack.c.l.b16 %v594
      %v623 = vunpack.c.l.b16 %v595
      %v624 = vunpack.c.l.b16 %v596
      %v625 = vunpack.c.l.b16 %v597
      %v626 = vunpack.c.l.b16 %v598
      %v627 = vunpack.c.l.b16 %v599
      %v628 = vunpack.c.l.b16 %v600
      %v629 = vpack.c.b16 %v622, %v621
      %v630 = vpack.c.b16 %v624, %v623
      %v631 = vpack.c.b16 %v626, %v625
      %v632 = vpack.c.b16 %v628, %v627
      %v638 = vsel %vm252, %v612, 0
      %640 = vmatpush.bf16.msra.mxu0 0
      %641 = vmatpush.bf16.msra.mxu0 0
      %642 = vmatpush.bf16.msra.mxu0 0
      %643 = vmatpush.bf16.msra.mxu0 0
      %644 = vmatpush.bf16.msra.mxu0 %v632
      %645 = vmatpush.bf16.msra.mxu0 %v631
      %646 = vmatpush.bf16.msra.mxu0 %v630
      %647 = vmatpush.bf16.msra.mxu0 %v629
      %648 = vmatmul.bf16.gmra.mxu0 %v638
      %v649 = vpop.f32.mrf.mxu0
      %v650 = vadd.f32 0.0, %v649
      %v651 = vpop.f32.mrf.mxu0
      %652 = vdwg.mxu0
      %v653 = vadd.f32 %v589, %v650
      %v654 = vld [vmem:[%s191 + $0x4] sm:$0xe]
      %s655 = scalar_lea.vmem %s1, 256
      %v656 = vld [vmem:[%s655] sm:$0xf]
      %v657 = vld [vmem:[%s655 + $0x4] sm:$0xf]
      %v658 = vld [vmem:[%s655 + $0x8] sm:$0xf]
      %v659 = vld [vmem:[%s655 + $0xc] sm:$0xf]
      %v660 = vld [vmem:[%s655 + $0x10] sm:$0xf]
      %v661 = vld [vmem:[%s655 + $0x14] sm:$0xf]
      %v662 = vld [vmem:[%s655 + $0x18] sm:$0xf]
      %v663 = vld [vmem:[%s655 + $0x1c] sm:$0xf]
      %v665 = vunpack.c.l.b16 %v654
      %v666 = vpack.c.b16 %v604, %v665
      %v667 = vrot.slane %v666, 1
      %v676 = vunpack.c.l.b16 %v656
      %v677 = vunpack.c.l.b16 %v657
      %v678 = vunpack.c.l.b16 %v658
      %v679 = vunpack.c.l.b16 %v659
      %v680 = vunpack.c.l.b16 %v660
      %v681 = vunpack.c.l.b16 %v661
      %v682 = vunpack.c.l.b16 %v662
      %v683 = vunpack.c.l.b16 %v663
      %v684 = vpack.c.b16 %v677, %v676
      %v685 = vpack.c.b16 %v679, %v678
      %v686 = vpack.c.b16 %v681, %v680
      %v687 = vpack.c.b16 %v683, %v682
      %v693 = vsel %vm252, %v667, 0
      %695 = vmatpush.bf16.msra.mxu0 0
      %696 = vmatpush.bf16.msra.mxu0 0
      %697 = vmatpush.bf16.msra.mxu0 0
      %698 = vmatpush.bf16.msra.mxu0 0
      %699 = vmatpush.bf16.msra.mxu0 %v687
      %700 = vmatpush.bf16.msra.mxu0 %v686
      %701 = vmatpush.bf16.msra.mxu0 %v685
      %702 = vmatpush.bf16.msra.mxu0 %v684
      %703 = vmatmul.bf16.gmra.mxu0 %v693
      %v704 = vpop.f32.mrf.mxu0
      %v705 = vadd.f32 0.0, %v704
      %v706 = vpop.f32.mrf.mxu0
      %707 = vdwg.mxu0
      %v708 = vadd.f32 %v653, %v705
      %v709 = vld [vmem:[%s2] sm:$0x1]
      %v711 = vperm.slane %v709, 0
      %v713 = vmul.f32 %v708, %v711
      %v714 = vld [vmem:[%s3] sm:$0x1]
      %v716 = vperm.slane %v714, 0
      %v718 = vadd.f32 %v713, %v716
      %v719 = vmax.f32 %v718, 0.0
      %v720 = vpack.c.bf16 %v719, %v719
      %vm721 = vcmask 519168
      %722 = vst.msk [vmem:[%s195] sm:$0xf] %vm721, %v720
      %p723 = scmp.lt.s32.totalorder %s15, 1
      %s724 = scalar_select %p723, %s15, 1
      %s725 = smul.addr %s724, 4
      %s726 = scalar_lea.vmem %s4, %s725
      // Predicated region
      $region37: #{convo_classifier_forward.14} parent=35 // pred_check
        %p727 = pneg %p122
      $region38: #{convo_classifier_forward.14} parent=35 // pred_check_branch
        %729 = sbr.rel (%p727) target = $region40
      $region39: #{convo_classifier_forward.14} parent=35 // pred_region
        _
      $region40: #{convo_classifier_forward.14} parent=35 // pred_fallthru
        _
    $region36: #{convo_classifier_forward.14} parent=5 // pred_fallthru
      _
    %p730 = scmp.le.s32.totalorder 2, %s10
    // Predicated region
    $region41: #{convo_classifier_forward.14} parent=5 // pred_check
      %p731 = pneg %p730
    $region42: #{convo_classifier_forward.14} parent=5 // pred_check_branch
      %733 = sbr.rel (%p731) target = $region44
    $region43: #{convo_classifier_forward.14} parent=5 // pred_region
      %s734 = ssub.s32 %s10, 2
      // Predicated region
      $region45: #{convo_classifier_forward.14} parent=43 // pred_check
        %p735 = pneg %p128
      $region46: #{convo_classifier_forward.14} parent=43 // pred_check_branch
        %737 = sbr.rel (%p735) target = $region48
      $region47: #{convo_classifier_forward.14} parent=43 // pred_region
        %p738 = scmp.lt.s32.totalorder %s16, 1
        %s739 = scalar_select %p738, %s16, 1
        %s740 = smul.addr %s739, 4
        %s741 = scalar_lea.vmem %s4, %s740
      $region48: #{convo_classifier_forward.14} parent=43 // pred_fallthru
        _
    $region44: #{convo_classifier_forward.14} parent=5 // pred_fallthru
      _
  $region6: #{convo_classifier_forward.14} parent=0 // loop_footer
    %s14 = sadd.s32 1, %s10
  $region7: #{convo_classifier_forward.14} parent=0 // loop_footer_branch
    %9 = sbr.rel target = $region3
  $region8: #{convo_classifier_forward.14} parent=0 // loop_exit
    _

// kernel: convo_classifier_forward.15
$region0: #{convo_classifier_forward.15}
  #allocation0 [shape = 'u32[]', space=smem, size = 0x4, offset = 0x4, fixed_abs, tag = 'smem constant byte address 0x4 - core index']
  #allocation1 [shape = 'u32[72,128]{1,0:T(1,128)}', space=vmem, size = 0x9000, scoped, tag = 'internal scratch']
  %s0 = inlined_call_operand.vmem [shape: bf16[16,576], index: 0, kind: input, shape index: {}]
  %s1 = inlined_call_operand.vmem [shape: bf16[576,128], index: 1, kind: input, shape index: {}]
  %s2 = inlined_call_operand.vmem [shape: f32[1,128], index: 2, kind: input, shape index: {}]
  %s3 = inlined_call_operand.vmem [shape: bf16[16,128], index: 3, kind: output, shape index: {}]
  %s4 = sld [smem:[#allocation0]]
  $region22: #{convo_classifier_forward.15} parent=0
    _
  %s6 = ssub.s32 1, %s4
  %s7 = scalar_select 0, %s6, %s4
  // Predicated region
  $region2: #{convo_classifier_forward.15} parent=0 // pred_check
    _
  $region3: #{convo_classifier_forward.15} parent=0 // pred_check_branch
    %9 = sbr.rel (0) target = $region5
  $region4: #{convo_classifier_forward.15} parent=0 // pred_region
    _
  $region5: #{convo_classifier_forward.15} parent=0 // pred_fallthru
    _
  // Predicated region
  $region6: #{convo_classifier_forward.15} parent=0 // pred_check
    _
  $region7: #{convo_classifier_forward.15} parent=0 // pred_check_branch
    %11 = sbr.rel (0) target = $region9
  $region8: #{convo_classifier_forward.15} parent=0 // pred_region
    _
  $region9: #{convo_classifier_forward.15} parent=0 // pred_fallthru
    _
  // Predicated region
  $region10: #{convo_classifier_forward.15} parent=0 // pred_check
    _
  $region11: #{convo_classifier_forward.15} parent=0 // pred_check_branch
    %13 = sbr.rel (0) target = $region13
  $region12: #{convo_classifier_forward.15} parent=0 // pred_region
    _
  $region13: #{convo_classifier_forward.15} parent=0 // pred_fallthru
    _
  %v15 = vld [vmem:[%s0] sm:$0xff]
  %v16 = vld [vmem:[%s0 + $0x8] sm:$0xff]
  %v17 = vld [vmem:[%s0 + $0x10] sm:$0xf]
  %v18 = vld [vmem:[%s0 + $0x14] sm:$0xff]
  %v19 = vld [vmem:[%s0 + $0x1c] sm:$0xff]
  %v20 = vld [vmem:[%s0 + $0x24] sm:$0xf]
  %v21 = vld [vmem:[%s1] sm:$0xf]
  %v22 = vld [vmem:[%s1 + $0x4] sm:$0xf]
  %v23 = vld [vmem:[%s1 + $0x8] sm:$0xf]
  %v24 = vld [vmem:[%s1 + $0xc] sm:$0xf]
  %v25 = vld [vmem:[%s1 + $0x10] sm:$0xf]
  %v26 = vld [vmem:[%s1 + $0x14] sm:$0xf]
  %v27 = vld [vmem:[%s1 + $0x18] sm:$0xf]
  %v28 = vld [vmem:[%s1 + $0x1c] sm:$0xf]
  %v29 = vld [vmem:[%s1 + $0x20] sm:$0xf]
  %v30 = vld [vmem:[%s1 + $0x24] sm:$0xf]
  %v31 = vld [vmem:[%s1 + $0x28] sm:$0xf]
  %v32 = vld [vmem:[%s1 + $0x2c] sm:$0xf]
  %v33 = vld [vmem:[%s1 + $0x30] sm:$0xf]
  %v34 = vld [vmem:[%s1 + $0x34] sm:$0xf]
  %v35 = vld [vmem:[%s1 + $0x38] sm:$0xf]
  %v36 = vld [vmem:[%s1 + $0x3c] sm:$0xf]
  %v37 = vld [vmem:[%s1 + $0x40] sm:$0xf]
  %v38 = vld [vmem:[%s1 + $0x44] sm:$0xf]
  %v39 = vld [vmem:[%s1 + $0x48] sm:$0xf]
  %v40 = vld [vmem:[%s1 + $0x4c] sm:$0xf]
  %v41 = vld [vmem:[%s1 + $0x50] sm:$0xf]
  %v42 = vld [vmem:[%s1 + $0x54] sm:$0xf]
  %v43 = vld [vmem:[%s1 + $0x58] sm:$0xf]
  %v44 = vld [vmem:[%s1 + $0x5c] sm:$0xf]
  %v45 = vld [vmem:[%s1 + $0x60] sm:$0xf]
  %v46 = vld [vmem:[%s1 + $0x64] sm:$0xf]
  %v47 = vld [vmem:[%s1 + $0x68] sm:$0xf]
  %v48 = vld [vmem:[%s1 + $0x6c] sm:$0xf]
  %v49 = vld [vmem:[%s1 + $0x70] sm:$0xf]
  %v50 = vld [vmem:[%s1 + $0x74] sm:$0xf]
  %v51 = vld [vmem:[%s1 + $0x78] sm:$0xf]
  %v52 = vld [vmem:[%s1 + $0x7c] sm:$0xf]
  %v53 = vld [vmem:[%s1 + $0x80] sm:$0xf]
  %v54 = vld [vmem:[%s1 + $0x84] sm:$0xf]
  %v55 = vld [vmem:[%s1 + $0x88] sm:$0xf]
  %v56 = vld [vmem:[%s1 + $0x8c] sm:$0xf]
  %v57 = vld [vmem:[%s1 + $0x90] sm:$0xf]
  %v58 = vld [vmem:[%s1 + $0x94] sm:$0xf]
  %v59 = vld [vmem:[%s1 + $0x98] sm:$0xf]
  %v60 = vld [vmem:[%s1 + $0x9c] sm:$0xf]
  %v61 = vld [vmem:[%s1 + $0xa0] sm:$0xf]
  %v62 = vld [vmem:[%s1 + $0xa4] sm:$0xf]
  %v63 = vld [vmem:[%s1 + $0xa8] sm:$0xf]
  %v64 = vld [vmem:[%s1 + $0xac] sm:$0xf]
  %v65 = vld [vmem:[%s1 + $0xb0] sm:$0xf]
  %v66 = vld [vmem:[%s1 + $0xb4] sm:$0xf]
  %v67 = vld [vmem:[%s1 + $0xb8] sm:$0xf]
  %v68 = vld [vmem:[%s1 + $0xbc] sm:$0xf]
  %v69 = vld [vmem:[%s1 + $0xc0] sm:$0xf]
  %v70 = vld [vmem:[%s1 + $0xc4] sm:$0xf]
  %v71 = vld [vmem:[%s1 + $0xc8] sm:$0xf]
  %v72 = vld [vmem:[%s1 + $0xcc] sm:$0xf]
  %v73 = vld [vmem:[%s1 + $0xd0] sm:$0xf]
  %v74 = vld [vmem:[%s1 + $0xd4] sm:$0xf]
  %v75 = vld [vmem:[%s1 + $0xd8] sm:$0xf]
  %v76 = vld [vmem:[%s1 + $0xdc] sm:$0xf]
  %v77 = vld [vmem:[%s1 + $0xe0] sm:$0xf]
  %v78 = vld [vmem:[%s1 + $0xe4] sm:$0xf]
  %v79 = vld [vmem:[%s1 + $0xe8] sm:$0xf]
  %v80 = vld [vmem:[%s1 + $0xec] sm:$0xf]
  %v81 = vld [vmem:[%s1 + $0xf0] sm:$0xf]
  %v82 = vld [vmem:[%s1 + $0xf4] sm:$0xf]
  %v83 = vld [vmem:[%s1 + $0xf8] sm:$0xf]
  %v84 = vld [vmem:[%s1 + $0xfc] sm:$0xf]
  %v85 = vld [vmem:[%s1 + $0x100] sm:$0xf]
  %v86 = vld [vmem:[%s1 + $0x104] sm:$0xf]
  %v87 = vld [vmem:[%s1 + $0x108] sm:$0xf]
  %v88 = vld [vmem:[%s1 + $0x10c] sm:$0xf]
  %v89 = vld [vmem:[%s1 + $0x110] sm:$0xf]
  %v90 = vld [vmem:[%s1 + $0x114] sm:$0xf]
  %v91 = vld [vmem:[%s1 + $0x118] sm:$0xf]
  %v92 = vld [vmem:[%s1 + $0x11c] sm:$0xf]
  %v93 = vld [vmem:[%s2] sm:$0x1]
  %v95 = vperm.slane %v93, 0
  %v103 = vunpack.c.l.b16 %v15
  %v104 = vunpack.c.h.b16 %v15
  %v105 = vunpack.c.l.b16 %v16
  %v106 = vunpack.c.h.b16 %v16
  %v107 = vunpack.c.l.b16 %v17
  %v108 = vunpack.c.l.b16 %v18
  %v109 = vunpack.c.h.b16 %v18
  %v110 = vunpack.c.l.b16 %v19
  %v111 = vunpack.c.h.b16 %v19
  %v112 = vunpack.c.l.b16 %v20
  %v113 = vpack.c.b16 %v108, %v103
  %v114 = vpack.c.b16 %v109, %v104
  %v115 = vpack.c.b16 %v110, %v105
  %v116 = vpack.c.b16 %v111, %v106
  %v117 = vpack.c.b16 %v112, %v107
  %v194 = vunpack.c.l.b16 %v21
  %v195 = vunpack.c.l.b16 %v22
  %v196 = vunpack.c.l.b16 %v23
  %v197 = vunpack.c.l.b16 %v24
  %v198 = vunpack.c.l.b16 %v25
  %v199 = vunpack.c.l.b16 %v26
  %v200 = vunpack.c.l.b16 %v27
  %v201 = vunpack.c.l.b16 %v28
  %v202 = vunpack.c.l.b16 %v29
  %v203 = vunpack.c.l.b16 %v30
  %v204 = vunpack.c.l.b16 %v31
  %v205 = vunpack.c.l.b16 %v32
  %v206 = vunpack.c.l.b16 %v33
  %v207 = vunpack.c.l.b16 %v34
  %v208 = vunpack.c.l.b16 %v35
  %v209 = vunpack.c.l.b16 %v36
  %v210 = vunpack.c.l.b16 %v37
  %v211 = vunpack.c.l.b16 %v38
  %v212 = vunpack.c.l.b16 %v39
  %v213 = vunpack.c.l.b16 %v40
  %v214 = vunpack.c.l.b16 %v41
  %v215 = vunpack.c.l.b16 %v42
  %v216 = vunpack.c.l.b16 %v43
  %v217 = vunpack.c.l.b16 %v44
  %v218 = vunpack.c.l.b16 %v45
  %v219 = vunpack.c.l.b16 %v46
  %v220 = vunpack.c.l.b16 %v47
  %v221 = vunpack.c.l.b16 %v48
  %v222 = vunpack.c.l.b16 %v49
  %v223 = vunpack.c.l.b16 %v50
  %v224 = vunpack.c.l.b16 %v51
  %v225 = vunpack.c.l.b16 %v52
  %v226 = vunpack.c.l.b16 %v53
  %v227 = vunpack.c.l.b16 %v54
  %v228 = vunpack.c.l.b16 %v55
  %v229 = vunpack.c.l.b16 %v56
  %v230 = vunpack.c.l.b16 %v57
  %v231 = vunpack.c.l.b16 %v58
  %v232 = vunpack.c.l.b16 %v59
  %v233 = vunpack.c.l.b16 %v60
  %v234 = vunpack.c.l.b16 %v61
  %v235 = vunpack.c.l.b16 %v62
  %v236 = vunpack.c.l.b16 %v63
  %v237 = vunpack.c.l.b16 %v64
  %v238 = vunpack.c.l.b16 %v65
  %v239 = vunpack.c.l.b16 %v66
  %v240 = vunpack.c.l.b16 %v67
  %v241 = vunpack.c.l.b16 %v68
  %v242 = vunpack.c.l.b16 %v69
  %v243 = vunpack.c.l.b16 %v70
  %v244 = vunpack.c.l.b16 %v71
  %v245 = vunpack.c.l.b16 %v72
  %v246 = vunpack.c.l.b16 %v73
  %v247 = vunpack.c.l.b16 %v74
  %v248 = vunpack.c.l.b16 %v75
  %v249 = vunpack.c.l.b16 %v76
  %v250 = vunpack.c.l.b16 %v77
  %v251 = vunpack.c.l.b16 %v78
  %v252 = vunpack.c.l.b16 %v79
  %v253 = vunpack.c.l.b16 %v80
  %v254 = vunpack.c.l.b16 %v81
  %v255 = vunpack.c.l.b16 %v82
  %v256 = vunpack.c.l.b16 %v83
  %v257 = vunpack.c.l.b16 %v84
  %v258 = vunpack.c.l.b16 %v85
  %v259 = vunpack.c.l.b16 %v86
  %v260 = vunpack.c.l.b16 %v87
  %v261 = vunpack.c.l.b16 %v88
  %v262 = vunpack.c.l.b16 %v89
  %v263 = vunpack.c.l.b16 %v90
  %v264 = vunpack.c.l.b16 %v91
  %v265 = vunpack.c.l.b16 %v92
  %v266 = vpack.c.b16 %v195, %v194
  %v267 = vpack.c.b16 %v197, %v196
  %v268 = vpack.c.b16 %v199, %v198
  %v269 = vpack.c.b16 %v201, %v200
  %v270 = vpack.c.b16 %v203, %v202
  %v271 = vpack.c.b16 %v205, %v204
  %v272 = vpack.c.b16 %v207, %v206
  %v273 = vpack.c.b16 %v209, %v208
  %v274 = vpack.c.b16 %v211, %v210
  %v275 = vpack.c.b16 %v213, %v212
  %v276 = vpack.c.b16 %v215, %v214
  %v277 = vpack.c.b16 %v217, %v216
  %v278 = vpack.c.b16 %v219, %v218
  %v279 = vpack.c.b16 %v221, %v220
  %v280 = vpack.c.b16 %v223, %v222
  %v281 = vpack.c.b16 %v225, %v224
  %v282 = vpack.c.b16 %v227, %v226
  %v283 = vpack.c.b16 %v229, %v228
  %v284 = vpack.c.b16 %v231, %v230
  %v285 = vpack.c.b16 %v233, %v232
  %v286 = vpack.c.b16 %v235, %v234
  %v287 = vpack.c.b16 %v237, %v236
  %v288 = vpack.c.b16 %v239, %v238
  %v289 = vpack.c.b16 %v241, %v240
  %v290 = vpack.c.b16 %v243, %v242
  %v291 = vpack.c.b16 %v245, %v244
  %v292 = vpack.c.b16 %v247, %v246
  %v293 = vpack.c.b16 %v249, %v248
  %v294 = vpack.c.b16 %v251, %v250
  %v295 = vpack.c.b16 %v253, %v252
  %v296 = vpack.c.b16 %v255, %v254
  %v297 = vpack.c.b16 %v257, %v256
  %v298 = vpack.c.b16 %v259, %v258
  %v299 = vpack.c.b16 %v261, %v260
  %v300 = vpack.c.b16 %v263, %v262
  %v301 = vpack.c.b16 %v265, %v264
  %vm338 = vcmask 523264
  %v340 = vsel %vm338, %v117, 0
  %342 = vmatpush.bf16.msra.mxu0 %v273
  %343 = vmatpush.bf16.msra.mxu0 %v272
  %344 = vmatpush.bf16.msra.mxu0 %v271
  %345 = vmatpush.bf16.msra.mxu0 %v270
  %346 = vmatpush.bf16.msra.mxu0 %v269
  %347 = vmatpush.bf16.msra.mxu0 %v268
  %348 = vmatpush.bf16.msra.mxu0 %v267
  %349 = vmatpush.bf16.msra.mxu0 %v266
  %350 = vmatmul.bf16.gmra.mxu0 %v113
  %v351 = vpop.f32.mrf.mxu0
  %v352 = vadd.f32 %v95, %v351
  %v353 = vpop.f32.mrf.mxu0
  %v354 = vadd.f32 %v95, %v353
  %355 = vdwg.mxu0
  %356 = vmatpush.bf16.msra.mxu0 %v281
  %357 = vmatpush.bf16.msra.mxu0 %v280
  %358 = vmatpush.bf16.msra.mxu0 %v279
  %359 = vmatpush.bf16.msra.mxu0 %v278
  %360 = vmatpush.bf16.msra.mxu0 %v277
  %361 = vmatpush.bf16.msra.mxu0 %v276
  %362 = vmatpush.bf16.msra.mxu0 %v275
  %363 = vmatpush.bf16.msra.mxu0 %v274
  %364 = vmatmul.bf16.gmra.mxu0 %v114
  %v365 = vpop.f32.mrf.mxu0
  %v366 = vadd.f32 %v352, %v365
  %v367 = vpop.f32.mrf.mxu0
  %v368 = vadd.f32 %v354, %v367
  %369 = vdwg.mxu0
  %370 = vmatpush.bf16.msra.mxu0 %v289
  %371 = vmatpush.bf16.msra.mxu0 %v288
  %372 = vmatpush.bf16.msra.mxu0 %v287
  %373 = vmatpush.bf16.msra.mxu0 %v286
  %374 = vmatpush.bf16.msra.mxu0 %v285
  %375 = vmatpush.bf16.msra.mxu0 %v284
  %376 = vmatpush.bf16.msra.mxu0 %v283
  %377 = vmatpush.bf16.msra.mxu0 %v282
  %378 = vmatmul.bf16.gmra.mxu0 %v115
  %v379 = vpop.f32.mrf.mxu0
  %v380 = vadd.f32 %v366, %v379
  %v381 = vpop.f32.mrf.mxu0
  %v382 = vadd.f32 %v368, %v381
  %383 = vdwg.mxu0
  %384 = vmatpush.bf16.msra.mxu0 %v297
  %385 = vmatpush.bf16.msra.mxu0 %v296
  %386 = vmatpush.bf16.msra.mxu0 %v295
  %387 = vmatpush.bf16.msra.mxu0 %v294
  %388 = vmatpush.bf16.msra.mxu0 %v293
  %389 = vmatpush.bf16.msra.mxu0 %v292
  %390 = vmatpush.bf16.msra.mxu0 %v291
  %391 = vmatpush.bf16.msra.mxu0 %v290
  %392 = vmatmul.bf16.gmra.mxu0 %v116
  %v393 = vpop.f32.mrf.mxu0
  %v394 = vadd.f32 %v380, %v393
  %v395 = vpop.f32.mrf.mxu0
  %v396 = vadd.f32 %v382, %v395
  %397 = vdwg.mxu0
  %398 = vmatpush.bf16.msra.mxu0 0
  %399 = vmatpush.bf16.msra.mxu0 0
  %400 = vmatpush.bf16.msra.mxu0 0
  %401 = vmatpush.bf16.msra.mxu0 0
  %402 = vmatpush.bf16.msra.mxu0 %v301
  %403 = vmatpush.bf16.msra.mxu0 %v300
  %404 = vmatpush.bf16.msra.mxu0 %v299
  %405 = vmatpush.bf16.msra.mxu0 %v298
  %406 = vmatmul.bf16.gmra.mxu0 %v340
  %v407 = vpop.f32.mrf.mxu0
  %v408 = vadd.f32 %v394, %v407
  %v409 = vpop.f32.mrf.mxu0
  %v410 = vadd.f32 %v396, %v409
  %411 = vdwg.mxu0
  %v412 = vmax.f32 %v408, 0.0
  %v413 = vmax.f32 %v410, 0.0
  %v414 = vpack.c.bf16 %v412, %v412
  %v415 = vpack.c.bf16 %v413, %v413
  %416 = vst [vmem:[%s3] sm:$0xf] %v414
  %417 = vst [vmem:[%s3 + $0x4] sm:$0xf] %v415
  // Predicated region
  $region14: #{convo_classifier_forward.15} parent=0 // pred_check
    _
  $region15: #{convo_classifier_forward.15} parent=0 // pred_check_branch
    %419 = sbr.rel (0) target = $region17
  $region16: #{convo_classifier_forward.15} parent=0 // pred_region
    _
  $region17: #{convo_classifier_forward.15} parent=0 // pred_fallthru
    _
  // Predicated region
  $region18: #{convo_classifier_forward.15} parent=0 // pred_check
    _
  $region19: #{convo_classifier_forward.15} parent=0 // pred_check_branch
    %421 = sbr.rel (0) target = $region21
  $region20: #{convo_classifier_forward.15} parent=0 // pred_region
    _
  $region21: #{convo_classifier_forward.15} parent=0 // pred_fallthru
    _

// kernel: convo_classifier_forward.16
$region0: #{convo_classifier_forward.16}
  #allocation0 [shape = 'u32[]', space=smem, size = 0x4, offset = 0x4, fixed_abs, tag = 'smem constant byte address 0x4 - core index']
  #allocation1 [shape = 'u32[72,128]{1,0:T(1,128)}', space=vmem, size = 0x9000, scoped, tag = 'internal scratch']
  %s0 = inlined_call_operand.vmem [shape: bf16[2,16,128], index: 0, kind: input, shape index: {}]
  %s1 = inlined_call_operand.vmem [shape: bf16[9,128,128], index: 1, kind: input, shape index: {}]
  %s2 = inlined_call_operand.vmem [shape: f32[1,128], index: 2, kind: input, shape index: {}]
  %s3 = inlined_call_operand.vmem [shape: f32[1,128], index: 3, kind: input, shape index: {}]
  %s4 = inlined_call_operand.vmem [shape: bf16[2,3,128], index: 4, kind: output, shape index: {}]
  %s5 = sld [smem:[#allocation0]]
  $region49: #{convo_classifier_forward.16} parent=0
    _
  %s7 = ssub.s32 1, %s5
  %s8 = scalar_select 0, %s7, %s5
  loop: start=0, step=1, limit=4
  $region2: #{convo_classifier_forward.16} parent=0 // loop_pre_header
    _
  $region3: #{convo_classifier_forward.16} parent=0 // loop_header
    %s10 = sphi 0, %s14
    %p11 = scmp.ge.s32.totalorder %s10, 4
    %s20 = sphi 0, %s22
    %s23 = sphi 0, %s20
    %s24 = sphi 0, %s23
    %s40 = sphi 0, %s24
    %s44 = sphi 0, %s44
    %s46 = sphi 0, %s44
    %s47 = sphi 0, %s46
    %s61 = sphi 0, %s47
    %s65 = sphi 0, %s65
    %s67 = sphi 0, %s65
    %s68 = sphi 0, %s67
    %s82 = sphi 0, %s68
    %s86 = sphi 0, %s86
    %s88 = sphi 0, %s86
    %s89 = sphi 0, %s88
    %s103 = sphi 0, %s89
    %s109 = sphi 0, %s111
    %s112 = sphi 0, %s109
    %s113 = sphi 0, %s112
    %s129 = sphi 0, %s113
  $region4: #{convo_classifier_forward.16} parent=0 // loop_header_branch
    %13 = sbr.rel (%p11) target = $region8
  $region5: #{convo_classifier_forward.16} parent=0 // loop_body
    %s15 = ssub.s32 %s10, 1
    %s16 = ssub.s32 %s10, 2
    %s17 = sadd.s32 %s10, 1
    %s18 = ssub.s32 %s10, %s17
    %p19 = scmp.eq.s32.totalorder %s18, 0
    %s21 = sadd.s32 %s20, 1
    %s22 = scalar_select %p19, %s20, %s21
    %p25 = pneg %p19
    %p26 = scmp.eq.s32.totalorder %s10, 1
    %p27 = por %p25, %p26
    %p28 = scmp.ne.s32.totalorder %s20, %s23
    %p29 = scmp.eq.s32.totalorder %s10, 0
    %p30 = por %p28, %p29
    %p31 = scmp.ne.s32.totalorder %s20, %s23
    %p32 = scmp.eq.s32.totalorder %s15, 1
    %p33 = por %p31, %p32
    %p34 = scmp.ne.s32.totalorder %s23, %s24
    %p35 = scmp.eq.s32.totalorder %s15, 0
    %p36 = por %p34, %p35
    %p37 = scmp.ne.s32.totalorder %s23, %s24
    %p38 = scmp.eq.s32.totalorder %s16, 1
    %p39 = por %p37, %p38
    %p41 = scmp.ne.s32.totalorder %s24, %s40
    %p42 = scmp.eq.s32.totalorder %s16, 0
    %p43 = por %p41, %p42
    %s45 = sadd.s32 %s44, 1
    %p48 = scmp.eq.s32.totalorder %s10, 1
    %p49 = scmp.ne.s32.totalorder %s44, %s46
    %p50 = scmp.eq.s32.totalorder %s10, 0
    %p51 = por %p49, %p50
    %p52 = scmp.ne.s32.totalorder %s44, %s46
    %p53 = scmp.eq.s32.totalorder %s15, 1
    %p54 = por %p52, %p53
    %p55 = scmp.ne.s32.totalorder %s46, %s47
    %p56 = scmp.eq.s32.totalorder %s15, 0
    %p57 = por %p55, %p56
    %p58 = scmp.ne.s32.totalorder %s46, %s47
    %p59 = scmp.eq.s32.totalorder %s16, 1
    %p60 = por %p58, %p59
    %p62 = scmp.ne.s32.totalorder %s47, %s61
    %p63 = scmp.eq.s32.totalorder %s16, 0
    %p64 = por %p62, %p63
    %s66 = sadd.s32 %s65, 1
    %p69 = scmp.eq.s32.totalorder %s10, 1
    %p70 = scmp.ne.s32.totalorder %s65, %s67
    %p71 = scmp.eq.s32.totalorder %s10, 0
    %p72 = por %p70, %p71
    %p73 = scmp.ne.s32.totalorder %s65, %s67
    %p74 = scmp.eq.s32.totalorder %s15, 1
    %p75 = por %p73, %p74
    %p76 = scmp.ne.s32.totalorder %s67, %s68
    %p77 = scmp.eq.s32.totalorder %s15, 0
    %p78 = por %p76, %p77
    %p79 = scmp.ne.s32.totalorder %s67, %s68
    %p80 = scmp.eq.s32.totalorder %s16, 1
    %p81 = por %p79, %p80
    %p83 = scmp.ne.s32.totalorder %s68, %s82
    %p84 = scmp.eq.s32.totalorder %s16, 0
    %p85 = por %p83, %p84
    %s87 = sadd.s32 %s86, 1
    %p90 = scmp.eq.s32.totalorder %s10, 1
    %p91 = scmp.ne.s32.totalorder %s86, %s88
    %p92 = scmp.eq.s32.totalorder %s10, 0
    %p93 = por %p91, %p92
    %p94 = scmp.ne.s32.totalorder %s86, %s88
    %p95 = scmp.eq.s32.totalorder %s15, 1
    %p96 = por %p94, %p95
    %p97 = scmp.ne.s32.totalorder %s88, %s89
    %p98 = scmp.eq.s32.totalorder %s15, 0
    %p99 = por %p97, %p98
    %p100 = scmp.ne.s32.totalorder %s88, %s89
    %p101 = scmp.eq.s32.totalorder %s16, 1
    %p102 = por %p100, %p101
    %p104 = scmp.ne.s32.totalorder %s89, %s103
    %p105 = scmp.eq.s32.totalorder %s16, 0
    %p106 = por %p104, %p105
    %s107 = ssub.s32 %s10, %s17
    %p108 = scmp.eq.s32.totalorder %s107, 0
    %s110 = sadd.s32 %s109, 1
    %s111 = scalar_select %p108, %s109, %s110
    %p114 = pneg %p108
    %p115 = scmp.eq.s32.totalorder %s10, 1
    %p116 = por %p114, %p115
    %p117 = scmp.ne.s32.totalorder %s109, %s112
    %p118 = scmp.eq.s32.totalorder %s10, 0
    %p119 = por %p117, %p118
    %p120 = scmp.ne.s32.totalorder %s109, %s112
    %p121 = scmp.eq.s32.totalorder %s15, 1
    %p122 = por %p120, %p121
    %p123 = scmp.ne.s32.totalorder %s112, %s113
    %p124 = scmp.eq.s32.totalorder %s15, 0
    %p125 = por %p123, %p124
    %p126 = scmp.ne.s32.totalorder %s112, %s113
    %p127 = scmp.eq.s32.totalorder %s16, 1
    %p128 = por %p126, %p127
    %p130 = scmp.ne.s32.totalorder %s113, %s129
    %p131 = scmp.eq.s32.totalorder %s16, 0
    %p132 = por %p130, %p131
    %p133 = scmp.le.s32.totalorder 1, %s10
    %p134 = scmp.lt.s32.totalorder %s10, 3
    %p135 = pnand %p133, %p134
    %p136 = pneg %p135
    // Predicated region
    $region9: #{convo_classifier_forward.16} parent=5 // pred_check
      _
    $region10: #{convo_classifier_forward.16} parent=5 // pred_check_branch
      %138 = sbr.rel (%p135) target = $region12
    $region11: #{convo_classifier_forward.16} parent=5 // pred_region
      %s139 = ssub.s32 %s10, 1
      // Predicated region
      $region13: #{convo_classifier_forward.16} parent=11 // pred_check
        %p140 = pneg %p57
      $region14: #{convo_classifier_forward.16} parent=11 // pred_check_branch
        %142 = sbr.rel (%p140) target = $region16
      $region15: #{convo_classifier_forward.16} parent=11 // pred_region
        _
      $region16: #{convo_classifier_forward.16} parent=11 // pred_fallthru
        _
      // Predicated region
      $region17: #{convo_classifier_forward.16} parent=11 // pred_check
        %p143 = pneg %p78
      $region18: #{convo_classifier_forward.16} parent=11 // pred_check_branch
        %145 = sbr.rel (%p143) target = $region20
      $region19: #{convo_classifier_forward.16} parent=11 // pred_region
        _
      $region20: #{convo_classifier_forward.16} parent=11 // pred_fallthru
        _
      // Predicated region
      $region21: #{convo_classifier_forward.16} parent=11 // pred_check
        %p146 = pneg %p99
      $region22: #{convo_classifier_forward.16} parent=11 // pred_check_branch
        %148 = sbr.rel (%p146) target = $region24
      $region23: #{convo_classifier_forward.16} parent=11 // pred_region
        _
      $region24: #{convo_classifier_forward.16} parent=11 // pred_fallthru
        _
    $region12: #{convo_classifier_forward.16} parent=5 // pred_fallthru
      _
    %p149 = scmp.lt.s32.totalorder %s10, 2
    // Predicated region
    $region25: #{convo_classifier_forward.16} parent=5 // pred_check
      %p150 = pneg %p149
    $region26: #{convo_classifier_forward.16} parent=5 // pred_check_branch
      %152 = sbr.rel (%p150) target = $region28
    $region27: #{convo_classifier_forward.16} parent=5 // pred_region
      // Predicated region
      $region29: #{convo_classifier_forward.16} parent=27 // pred_check
        %p153 = pneg %p30
      $region30: #{convo_classifier_forward.16} parent=27 // pred_check_branch
        %155 = sbr.rel (%p153) target = $region32
      $region31: #{convo_classifier_forward.16} parent=27 // pred_region
        %p156 = scmp.lt.s32.totalorder %s10, 1
        %s157 = scalar_select %p156, %s10, 1
        %s158 = smul.addr %s157, 2
        %s159 = smul.addr %s158, 4
        %s160 = scalar_lea.vmem %s0, %s159
      $region32: #{convo_classifier_forward.16} parent=27 // pred_fallthru
        _
    $region28: #{convo_classifier_forward.16} parent=5 // pred_fallthru
      _
    %p161 = scmp.le.s32.totalorder 1, %s10
    %p162 = scmp.lt.s32.totalorder %s10, 3
    %p163 = pnand %p161, %p162
    %p164 = pneg %p163
    // Predicated region
    $region33: #{convo_classifier_forward.16} parent=5 // pred_check
      _
    $region34: #{convo_classifier_forward.16} parent=5 // pred_check_branch
      %166 = sbr.rel (%p163) target = $region36
    $region35: #{convo_classifier_forward.16} parent=5 // pred_region
      %s167 = ssub.s32 %s10, 1
      %p168 = scmp.lt.s32.totalorder %s15, 1
      %s169 = scalar_select %p168, %s15, 1
      %s170 = smul.addr %s169, 2
      %s171 = smul.addr %s170, 4
      %s172 = scalar_lea.vmem %s0, %s171
      %p173 = pneg %p36
      %p174 = pneg %p33
      %p175 = pneg %p57
      %p176 = pneg %p54
      %p177 = pneg %p78
      %p178 = pneg %p75
      %p179 = pneg %p99
      %p180 = pneg %p96
      %p181 = pneg %p125
      %p182 = pneg %p122
      %p183 = scmp.lt.s32.totalorder %s15, 1
      %s184 = scalar_select %p183, %s15, 1
      %s185 = smul.addr %s184, 2
      %s186 = scalar_lea.vmem %s4, %s185
      %p187 = scmp.lt.s32.totalorder %s15, 1
      %s188 = scalar_select %p187, %s15, 1
      %s189 = smul.addr %s188, 2
      %s190 = smul.addr %s189, 4
      %s191 = scalar_lea.vmem %s0, %s190
      %p192 = scmp.lt.s32.totalorder %s15, 1
      %s193 = scalar_select %p192, %s15, 1
      %s194 = smul.addr %s193, 2
      %s195 = scalar_lea.vmem %s4, %s194
      %v196 = vld [vmem:[%s191] sm:$0x3]
      %v197 = vld [vmem:[%s1] sm:$0xf]
      %v198 = vld [vmem:[%s1 + $0x4] sm:$0xf]
      %v199 = vld [vmem:[%s1 + $0x8] sm:$0xf]
      %v200 = vld [vmem:[%s1 + $0xc] sm:$0xf]
      %v201 = vld [vmem:[%s1 + $0x10] sm:$0xf]
      %v202 = vld [vmem:[%s1 + $0x14] sm:$0xf]
      %v203 = vld [vmem:[%s1 + $0x18] sm:$0xf]
      %v204 = vld [vmem:[%s1 + $0x1c] sm:$0xf]
      %v205 = vld [vmem:[%s1 + $0x20] sm:$0xf]
      %v206 = vld [vmem:[%s1 + $0x24] sm:$0xf]
      %v207 = vld [vmem:[%s1 + $0x28] sm:$0xf]
      %v208 = vld [vmem:[%s1 + $0x2c] sm:$0xf]
      %v209 = vld [vmem:[%s1 + $0x30] sm:$0xf]
      %v210 = vld [vmem:[%s1 + $0x34] sm:$0xf]
      %v211 = vld [vmem:[%s1 + $0x38] sm:$0xf]
      %v212 = vld [vmem:[%s1 + $0x3c] sm:$0xf]
      %s213 = scalar_lea.vmem %s1, 64
      %v214 = vld [vmem:[%s213] sm:$0xf]
      %v215 = vld [vmem:[%s213 + $0x4] sm:$0xf]
      %v216 = vld [vmem:[%s213 + $0x8] sm:$0xf]
      %v217 = vld [vmem:[%s213 + $0xc] sm:$0xf]
      %v218 = vld [vmem:[%s213 + $0x10] sm:$0xf]
      %v219 = vld [vmem:[%s213 + $0x14] sm:$0xf]
      %v220 = vld [vmem:[%s213 + $0x18] sm:$0xf]
      %v221 = vld [vmem:[%s213 + $0x1c] sm:$0xf]
      %v222 = vld [vmem:[%s213 + $0x20] sm:$0xf]
      %v223 = vld [vmem:[%s213 + $0x24] sm:$0xf]
      %v224 = vld [vmem:[%s213 + $0x28] sm:$0xf]
      %v225 = vld [vmem:[%s213 + $0x2c] sm:$0xf]
      %v226 = vld [vmem:[%s213 + $0x30] sm:$0xf]
      %v227 = vld [vmem:[%s213 + $0x34] sm:$0xf]
      %v228 = vld [vmem:[%s213 + $0x38] sm:$0xf]
      %v229 = vld [vmem:[%s213 + $0x3c] sm:$0xf]
      %v231 = vunpack.c.l.b16 %v196
      %v232 = vpack.c.b16 %v231, %v231
      %v234 = vshrl.u32 %v232, 16
      %v236 = vshll.u32 %v232, 16
      %v238 = vrot.slane %v236, 1
      %v239 = vor.u32 %v234, %v238
      %v257 = vunpack.c.l.b16 %v214
      %v258 = vunpack.c.l.b16 %v215
      %v259 = vunpack.c.l.b16 %v216
      %v260 = vunpack.c.l.b16 %v217
      %v261 = vunpack.c.l.b16 %v218
      %v262 = vunpack.c.l.b16 %v219
      %v263 = vunpack.c.l.b16 %v220
      %v264 = vunpack.c.l.b16 %v221
      %v265 = vunpack.c.l.b16 %v222
      %v266 = vunpack.c.l.b16 %v223
      %v267 = vunpack.c.l.b16 %v224
      %v268 = vunpack.c.l.b16 %v225
      %v269 = vunpack.c.l.b16 %v226
      %v270 = vunpack.c.l.b16 %v227
      %v271 = vunpack.c.l.b16 %v228
      %v272 = vunpack.c.l.b16 %v229
      %v273 = vpack.c.b16 %v258, %v257
      %v274 = vpack.c.b16 %v260, %v259
      %v275 = vpack.c.b16 %v262, %v261
      %v276 = vpack.c.b16 %v264, %v263
      %v277 = vpack.c.b16 %v266, %v265
      %v278 = vpack.c.b16 %v268, %v267
      %v279 = vpack.c.b16 %v270, %v269
      %v280 = vpack.c.b16 %v272, %v271
      %289 = vmatpush.bf16.msra.mxu0 %v280
      %290 = vmatpush.bf16.msra.mxu0 %v279
      %291 = vmatpush.bf16.msra.mxu0 %v278
      %292 = vmatpush.bf16.msra.mxu0 %v277
      %293 = vmatpush.bf16.msra.mxu0 %v276
      %294 = vmatpush.bf16.msra.mxu0 %v275
      %295 = vmatpush.bf16.msra.mxu0 %v274
      %296 = vmatpush.bf16.msra.mxu0 %v273
      %297 = vmatmul.bf16.gmra.mxu0 %v239
      %v298 = vpop.f32.mrf.mxu0
      %v299 = vadd.f32 0.0, %v298
      %v300 = vpop.f32.mrf.mxu0
      %301 = vdwg.mxu0
      %v318 = vunpack.c.l.b16 %v197
      %v319 = vunpack.c.l.b16 %v198
      %v320 = vunpack.c.l.b16 %v199
      %v321 = vunpack.c.l.b16 %v200
      %v322 = vunpack.c.l.b16 %v201
      %v323 = vunpack.c.l.b16 %v202
      %v324 = vunpack.c.l.b16 %v203
      %v325 = vunpack.c.l.b16 %v204
      %v326 = vunpack.c.l.b16 %v205
      %v327 = vunpack.c.l.b16 %v206
      %v328 = vunpack.c.l.b16 %v207
      %v329 = vunpack.c.l.b16 %v208
      %v330 = vunpack.c.l.b16 %v209
      %v331 = vunpack.c.l.b16 %v210
      %v332 = vunpack.c.l.b16 %v211
      %v333 = vunpack.c.l.b16 %v212
      %v334 = vpack.c.b16 %v319, %v318
      %v335 = vpack.c.b16 %v321, %v320
      %v336 = vpack.c.b16 %v323, %v322
      %v337 = vpack.c.b16 %v325, %v324
      %v338 = vpack.c.b16 %v327, %v326
      %v339 = vpack.c.b16 %v329, %v328
      %v340 = vpack.c.b16 %v331, %v330
      %v341 = vpack.c.b16 %v333, %v332
      %350 = vmatpush.bf16.msra.mxu0 %v341
      %351 = vmatpush.bf16.msra.mxu0 %v340
      %352 = vmatpush.bf16.msra.mxu0 %v339
      %353 = vmatpush.bf16.msra.mxu0 %v338
      %354 = vmatpush.bf16.msra.mxu0 %v337
      %355 = vmatpush.bf16.msra.mxu0 %v336
      %356 = vmatpush.bf16.msra.mxu0 %v335
      %357 = vmatpush.bf16.msra.mxu0 %v334
      %358 = vmatmul.bf16.gmra.mxu0 %v196
      %v359 = vpop.f32.mrf.mxu0
      %v360 = vadd.f32 %v299, %v359
      %v361 = vpop.f32.mrf.mxu0
      %362 = vdwg.mxu0
      %v363 = vld [vmem:[%s191] sm:$0x6]
      %s364 = scalar_lea.vmem %s1, 128
      %v365 = vld [vmem:[%s364] sm:$0xf]
      %v366 = vld [vmem:[%s364 + $0x4] sm:$0xf]
      %v367 = vld [vmem:[%s364 + $0x8] sm:$0xf]
      %v368 = vld [vmem:[%s364 + $0xc] sm:$0xf]
      %v369 = vld [vmem:[%s364 + $0x10] sm:$0xf]
      %v370 = vld [vmem:[%s364 + $0x14] sm:$0xf]
      %v371 = vld [vmem:[%s364 + $0x18] sm:$0xf]
      %v372 = vld [vmem:[%s364 + $0x1c] sm:$0xf]
      %v373 = vld [vmem:[%s364 + $0x20] sm:$0xf]
      %v374 = vld [vmem:[%s364 + $0x24] sm:$0xf]
      %v375 = vld [vmem:[%s364 + $0x28] sm:$0xf]
      %v376 = vld [vmem:[%s364 + $0x2c] sm:$0xf]
      %v377 = vld [vmem:[%s364 + $0x30] sm:$0xf]
      %v378 = vld [vmem:[%s364 + $0x34] sm:$0xf]
      %v379 = vld [vmem:[%s364 + $0x38] sm:$0xf]
      %v380 = vld [vmem:[%s364 + $0x3c] sm:$0xf]
      %v382 = vunpack.c.l.b16 %v363
      %v383 = vpack.c.b16 %v382, %v382
      %v384 = vrot.slane %v383, 1
      %v402 = vunpack.c.l.b16 %v365
      %v403 = vunpack.c.l.b16 %v366
      %v404 = vunpack.c.l.b16 %v367
      %v405 = vunpack.c.l.b16 %v368
      %v406 = vunpack.c.l.b16 %v369
      %v407 = vunpack.c.l.b16 %v370
      %v408 = vunpack.c.l.b16 %v371
      %v409 = vunpack.c.l.b16 %v372
      %v410 = vunpack.c.l.b16 %v373
      %v411 = vunpack.c.l.b16 %v374
      %v412 = vunpack.c.l.b16 %v375
      %v413 = vunpack.c.l.b16 %v376
      %v414 = vunpack.c.l.b16 %v377
      %v415 = vunpack.c.l.b16 %v378
      %v416 = vunpack.c.l.b16 %v379
      %v417 = vunpack.c.l.b16 %v380
      %v418 = vpack.c.b16 %v403, %v402
      %v419 = vpack.c.b16 %v405, %v404
      %v420 = vpack.c.b16 %v407, %v406
      %v421 = vpack.c.b16 %v409, %v408
      %v422 = vpack.c.b16 %v411, %v410
      %v423 = vpack.c.b16 %v413, %v412
      %v424 = vpack.c.b16 %v415, %v414
      %v425 = vpack.c.b16 %v417, %v416
      %434 = vmatpush.bf16.msra.mxu0 %v425
      %435 = vmatpush.bf16.msra.mxu0 %v424
      %436 = vmatpush.bf16.msra.mxu0 %v423
      %437 = vmatpush.bf16.msra.mxu0 %v422
      %438 = vmatpush.bf16.msra.mxu0 %v421
      %439 = vmatpush.bf16.msra.mxu0 %v420
      %440 = vmatpush.bf16.msra.mxu0 %v419
      %441 = vmatpush.bf16.msra.mxu0 %v418
      %442 = vmatmul.bf16.gmra.mxu0 %v384
      %v443 = vpop.f32.mrf.mxu0
      %v444 = vadd.f32 0.0, %v443
      %v445 = vpop.f32.mrf.mxu0
      %446 = vdwg.mxu0
      %v447 = vadd.f32 %v360, %v444
      %s448 = scalar_lea.vmem %s1, 192
      %v449 = vld [vmem:[%s448] sm:$0xf]
      %v450 = vld [vmem:[%s448 + $0x4] sm:$0xf]
      %v451 = vld [vmem:[%s448 + $0x8] sm:$0xf]
      %v452 = vld [vmem:[%s448 + $0xc] sm:$0xf]
      %v453 = vld [vmem:[%s448 + $0x10] sm:$0xf]
      %v454 = vld [vmem:[%s448 + $0x14] sm:$0xf]
      %v455 = vld [vmem:[%s448 + $0x18] sm:$0xf]
      %v456 = vld [vmem:[%s448 + $0x1c] sm:$0xf]
      %v457 = vld [vmem:[%s448 + $0x20] sm:$0xf]
      %v458 = vld [vmem:[%s448 + $0x24] sm:$0xf]
      %v459 = vld [vmem:[%s448 + $0x28] sm:$0xf]
      %v460 = vld [vmem:[%s448 + $0x2c] sm:$0xf]
      %v461 = vld [vmem:[%s448 + $0x30] sm:$0xf]
      %v462 = vld [vmem:[%s448 + $0x34] sm:$0xf]
      %v463 = vld [vmem:[%s448 + $0x38] sm:$0xf]
      %v464 = vld [vmem:[%s448 + $0x3c] sm:$0xf]
      %v466 = vshrl.u32 %v383, 16
      %v468 = vrot.slane %v466, 1
      %v469 = vshll.u32 %v383, 16
      %v471 = vrot.slane %v469, 2
      %v472 = vor.u32 %v468, %v471
      %v490 = vunpack.c.l.b16 %v449
      %v491 = vunpack.c.l.b16 %v450
      %v492 = vunpack.c.l.b16 %v451
      %v493 = vunpack.c.l.b16 %v452
      %v494 = vunpack.c.l.b16 %v453
      %v495 = vunpack.c.l.b16 %v454
      %v496 = vunpack.c.l.b16 %v455
      %v497 = vunpack.c.l.b16 %v456
      %v498 = vunpack.c.l.b16 %v457
      %v499 = vunpack.c.l.b16 %v458
      %v500 = vunpack.c.l.b16 %v459
      %v501 = vunpack.c.l.b16 %v460
      %v502 = vunpack.c.l.b16 %v461
      %v503 = vunpack.c.l.b16 %v462
      %v504 = vunpack.c.l.b16 %v463
      %v505 = vunpack.c.l.b16 %v464
      %v506 = vpack.c.b16 %v491, %v490
      %v507 = vpack.c.b16 %v493, %v492
      %v508 = vpack.c.b16 %v495, %v494
      %v509 = vpack.c.b16 %v497, %v496
      %v510 = vpack.c.b16 %v499, %v498
      %v511 = vpack.c.b16 %v501, %v500
      %v512 = vpack.c.b16 %v503, %v502
      %v513 = vpack.c.b16 %v505, %v504
      %522 = vmatpush.bf16.msra.mxu0 %v513
      %523 = vmatpush.bf16.msra.mxu0 %v512
      %524 = vmatpush.bf16.msra.mxu0 %v511
      %525 = vmatpush.bf16.msra.mxu0 %v510
      %526 = vmatpush.bf16.msra.mxu0 %v509
      %527 = vmatpush.bf16.msra.mxu0 %v508
      %528 = vmatpush.bf16.msra.mxu0 %v507
      %529 = vmatpush.bf16.msra.mxu0 %v506
      %530 = vmatmul.bf16.gmra.mxu0 %v472
      %v531 = vpop.f32.mrf.mxu0
      %v532 = vadd.f32 0.0, %v531
      %v533 = vpop.f32.mrf.mxu0
      %534 = vdwg.mxu0
      %v535 = vadd.f32 %v447, %v532
      %v536 = vld [vmem:[%s191] sm:$0xc]
      %s537 = scalar_lea.vmem %s1, 256
      %v538 = vld [vmem:[%s537] sm:$0xf]
      %v539 = vld [vmem:[%s537 + $0x4] sm:$0xf]
      %v540 = vld [vmem:[%s537 + $0x8] sm:$0xf]
      %v541 = vld [vmem:[%s537 + $0xc] sm:$0xf]
      %v542 = vld [vmem:[%s537 + $0x10] sm:$0xf]
      %v543 = vld [vmem:[%s537 + $0x14] sm:$0xf]
      %v544 = vld [vmem:[%s537 + $0x18] sm:$0xf]
      %v545 = vld [vmem:[%s537 + $0x1c] sm:$0xf]
      %v546 = vld [vmem:[%s537 + $0x20] sm:$0xf]
      %v547 = vld [vmem:[%s537 + $0x24] sm:$0xf]
      %v548 = vld [vmem:[%s537 + $0x28] sm:$0xf]
      %v549 = vld [vmem:[%s537 + $0x2c] sm:$0xf]
      %v550 = vld [vmem:[%s537 + $0x30] sm:$0xf]
      %v551 = vld [vmem:[%s537 + $0x34] sm:$0xf]
      %v552 = vld [vmem:[%s537 + $0x38] sm:$0xf]
      %v553 = vld [vmem:[%s537 + $0x3c] sm:$0xf]
      %v555 = vunpack.c.l.b16 %v536
      %v556 = vpack.c.b16 %v555, %v555
      %v557 = vrot.slane %v556, 2
      %v575 = vunpack.c.l.b16 %v538
      %v576 = vunpack.c.l.b16 %v539
      %v577 = vunpack.c.l.b16 %v540
      %v578 = vunpack.c.l.b16 %v541
      %v579 = vunpack.c.l.b16 %v542
      %v580 = vunpack.c.l.b16 %v543
      %v581 = vunpack.c.l.b16 %v544
      %v582 = vunpack.c.l.b16 %v545
      %v583 = vunpack.c.l.b16 %v546
      %v584 = vunpack.c.l.b16 %v547
      %v585 = vunpack.c.l.b16 %v548
      %v586 = vunpack.c.l.b16 %v549
      %v587 = vunpack.c.l.b16 %v550
      %v588 = vunpack.c.l.b16 %v551
      %v589 = vunpack.c.l.b16 %v552
      %v590 = vunpack.c.l.b16 %v553
      %v591 = vpack.c.b16 %v576, %v575
      %v592 = vpack.c.b16 %v578, %v577
      %v593 = vpack.c.b16 %v580, %v579
      %v594 = vpack.c.b16 %v582, %v581
      %v595 = vpack.c.b16 %v584, %v583
      %v596 = vpack.c.b16 %v586, %v585
      %v597 = vpack.c.b16 %v588, %v587
      %v598 = vpack.c.b16 %v590, %v589
      %607 = vmatpush.bf16.msra.mxu0 %v598
      %608 = vmatpush.bf16.msra.mxu0 %v597
      %609 = vmatpush.bf16.msra.mxu0 %v596
      %610 = vmatpush.bf16.msra.mxu0 %v595
      %611 = vmatpush.bf16.msra.mxu0 %v594
      %612 = vmatpush.bf16.msra.mxu0 %v593
      %613 = vmatpush.bf16.msra.mxu0 %v592
      %614 = vmatpush.bf16.msra.mxu0 %v591
      %615 = vmatmul.bf16.gmra.mxu0 %v557
      %v616 = vpop.f32.mrf.mxu0
      %v617 = vadd.f32 0.0, %v616
      %v618 = vpop.f32.mrf.mxu0
      %619 = vdwg.mxu0
      %v620 = vadd.f32 %v535, %v617
      %s621 = scalar_lea.vmem %s1, 320
      %v622 = vld [vmem:[%s621] sm:$0xf]
      %v623 = vld [vmem:[%s621 + $0x4] sm:$0xf]
      %v624 = vld [vmem:[%s621 + $0x8] sm:$0xf]
      %v625 = vld [vmem:[%s621 + $0xc] sm:$0xf]
      %v626 = vld [vmem:[%s621 + $0x10] sm:$0xf]
      %v627 = vld [vmem:[%s621 + $0x14] sm:$0xf]
      %v628 = vld [vmem:[%s621 + $0x18] sm:$0xf]
      %v629 = vld [vmem:[%s621 + $0x1c] sm:$0xf]
      %v630 = vld [vmem:[%s621 + $0x20] sm:$0xf]
      %v631 = vld [vmem:[%s621 + $0x24] sm:$0xf]
      %v632 = vld [vmem:[%s621 + $0x28] sm:$0xf]
      %v633 = vld [vmem:[%s621 + $0x2c] sm:$0xf]
      %v634 = vld [vmem:[%s621 + $0x30] sm:$0xf]
      %v635 = vld [vmem:[%s621 + $0x34] sm:$0xf]
      %v636 = vld [vmem:[%s621 + $0x38] sm:$0xf]
      %v637 = vld [vmem:[%s621 + $0x3c] sm:$0xf]
      %v639 = vshrl.u32 %v556, 16
      %v641 = vrot.slane %v639, 2
      %v642 = vshll.u32 %v556, 16
      %v644 = vrot.slane %v642, 3
      %v645 = vor.u32 %v641, %v644
      %v663 = vunpack.c.l.b16 %v622
      %v664 = vunpack.c.l.b16 %v623
      %v665 = vunpack.c.l.b16 %v624
      %v666 = vunpack.c.l.b16 %v625
      %v667 = vunpack.c.l.b16 %v626
      %v668 = vunpack.c.l.b16 %v627
      %v669 = vunpack.c.l.b16 %v628
      %v670 = vunpack.c.l.b16 %v629
      %v671 = vunpack.c.l.b16 %v630
      %v672 = vunpack.c.l.b16 %v631
      %v673 = vunpack.c.l.b16 %v632
      %v674 = vunpack.c.l.b16 %v633
      %v675 = vunpack.c.l.b16 %v634
      %v676 = vunpack.c.l.b16 %v635
      %v677 = vunpack.c.l.b16 %v636
      %v678 = vunpack.c.l.b16 %v637
      %v679 = vpack.c.b16 %v664, %v663
      %v680 = vpack.c.b16 %v666, %v665
      %v681 = vpack.c.b16 %v668, %v667
      %v682 = vpack.c.b16 %v670, %v669
      %v683 = vpack.c.b16 %v672, %v671
      %v684 = vpack.c.b16 %v674, %v673
      %v685 = vpack.c.b16 %v676, %v675
      %v686 = vpack.c.b16 %v678, %v677
      %695 = vmatpush.bf16.msra.mxu0 %v686
      %696 = vmatpush.bf16.msra.mxu0 %v685
      %697 = vmatpush.bf16.msra.mxu0 %v684
      %698 = vmatpush.bf16.msra.mxu0 %v683
      %699 = vmatpush.bf16.msra.mxu0 %v682
      %700 = vmatpush.bf16.msra.mxu0 %v681
      %701 = vmatpush.bf16.msra.mxu0 %v680
      %702 = vmatpush.bf16.msra.mxu0 %v679
      %703 = vmatmul.bf16.gmra.mxu0 %v645
      %v704 = vpop.f32.mrf.mxu0
      %v705 = vadd.f32 0.0, %v704
      %v706 = vpop.f32.mrf.mxu0
      %707 = vdwg.mxu0
      %v708 = vadd.f32 %v620, %v705
      %v709 = vld [vmem:[%s191] sm:$0x8]
      %v710 = vld [vmem:[%s191 + $0x4] sm:$0x1]
      %s711 = scalar_lea.vmem %s1, 384
      %v712 = vld [vmem:[%s711] sm:$0xf]
      %v713 = vld [vmem:[%s711 + $0x4] sm:$0xf]
      %v714 = vld [vmem:[%s711 + $0x8] sm:$0xf]
      %v715 = vld [vmem:[%s711 + $0xc] sm:$0xf]
      %v716 = vld [vmem:[%s711 + $0x10] sm:$0xf]
      %v717 = vld [vmem:[%s711 + $0x14] sm:$0xf]
      %v718 = vld [vmem:[%s711 + $0x18] sm:$0xf]
      %v719 = vld [vmem:[%s711 + $0x1c] sm:$0xf]
      %v720 = vld [vmem:[%s711 + $0x20] sm:$0xf]
      %v721 = vld [vmem:[%s711 + $0x24] sm:$0xf]
      %v722 = vld [vmem:[%s711 + $0x28] sm:$0xf]
      %v723 = vld [vmem:[%s711 + $0x2c] sm:$0xf]
      %v724 = vld [vmem:[%s711 + $0x30] sm:$0xf]
      %v725 = vld [vmem:[%s711 + $0x34] sm:$0xf]
      %v726 = vld [vmem:[%s711 + $0x38] sm:$0xf]
      %v727 = vld [vmem:[%s711 + $0x3c] sm:$0xf]
      %v730 = vunpack.c.l.b16 %v709
      %v731 = vunpack.c.l.b16 %v710
      %v732 = vpack.c.b16 %v731, %v730
      %v733 = vrot.slane %v732, 3
      %v751 = vunpack.c.l.b16 %v712
      %v752 = vunpack.c.l.b16 %v713
      %v753 = vunpack.c.l.b16 %v714
      %v754 = vunpack.c.l.b16 %v715
      %v755 = vunpack.c.l.b16 %v716
      %v756 = vunpack.c.l.b16 %v717
      %v757 = vunpack.c.l.b16 %v718
      %v758 = vunpack.c.l.b16 %v719
      %v759 = vunpack.c.l.b16 %v720
      %v760 = vunpack.c.l.b16 %v721
      %v761 = vunpack.c.l.b16 %v722
      %v762 = vunpack.c.l.b16 %v723
      %v763 = vunpack.c.l.b16 %v724
      %v764 = vunpack.c.l.b16 %v725
      %v765 = vunpack.c.l.b16 %v726
      %v766 = vunpack.c.l.b16 %v727
      %v767 = vpack.c.b16 %v752, %v751
      %v768 = vpack.c.b16 %v754, %v753
      %v769 = vpack.c.b16 %v756, %v755
      %v770 = vpack.c.b16 %v758, %v757
      %v771 = vpack.c.b16 %v760, %v759
      %v772 = vpack.c.b16 %v762, %v761
      %v773 = vpack.c.b16 %v764, %v763
      %v774 = vpack.c.b16 %v766, %v765
      %783 = vmatpush.bf16.msra.mxu0 %v774
      %784 = vmatpush.bf16.msra.mxu0 %v773
      %785 = vmatpush.bf16.msra.mxu0 %v772
      %786 = vmatpush.bf16.msra.mxu0 %v771
      %787 = vmatpush.bf16.msra.mxu0 %v770
      %788 = vmatpush.bf16.msra.mxu0 %v769
      %789 = vmatpush.bf16.msra.mxu0 %v768
      %790 = vmatpush.bf16.msra.mxu0 %v767
      %791 = vmatmul.bf16.gmra.mxu0 %v733
      %v792 = vpop.f32.mrf.mxu0
      %v793 = vadd.f32 0.0, %v792
      %v794 = vpop.f32.mrf.mxu0
      %795 = vdwg.mxu0
      %v796 = vadd.f32 %v708, %v793
      %s797 = scalar_lea.vmem %s1, 448
      %v798 = vld [vmem:[%s797] sm:$0xf]
      %v799 = vld [vmem:[%s797 + $0x4] sm:$0xf]
      %v800 = vld [vmem:[%s797 + $0x8] sm:$0xf]
      %v801 = vld [vmem:[%s797 + $0xc] sm:$0xf]
      %v802 = vld [vmem:[%s797 + $0x10] sm:$0xf]
      %v803 = vld [vmem:[%s797 + $0x14] sm:$0xf]
      %v804 = vld [vmem:[%s797 + $0x18] sm:$0xf]
      %v805 = vld [vmem:[%s797 + $0x1c] sm:$0xf]
      %v806 = vld [vmem:[%s797 + $0x20] sm:$0xf]
      %v807 = vld [vmem:[%s797 + $0x24] sm:$0xf]
      %v808 = vld [vmem:[%s797 + $0x28] sm:$0xf]
      %v809 = vld [vmem:[%s797 + $0x2c] sm:$0xf]
      %v810 = vld [vmem:[%s797 + $0x30] sm:$0xf]
      %v811 = vld [vmem:[%s797 + $0x34] sm:$0xf]
      %v812 = vld [vmem:[%s797 + $0x38] sm:$0xf]
      %v813 = vld [vmem:[%s797 + $0x3c] sm:$0xf]
      %v815 = vshrl.u32 %v732, 16
      %v817 = vrot.slane %v815, 3
      %v818 = vshll.u32 %v732, 16
      %v820 = vrot.slane %v818, 4
      %v821 = vor.u32 %v817, %v820
      %v839 = vunpack.c.l.b16 %v798
      %v840 = vunpack.c.l.b16 %v799
      %v841 = vunpack.c.l.b16 %v800
      %v842 = vunpack.c.l.b16 %v801
      %v843 = vunpack.c.l.b16 %v802
      %v844 = vunpack.c.l.b16 %v803
      %v845 = vunpack.c.l.b16 %v804
      %v846 = vunpack.c.l.b16 %v805
      %v847 = vunpack.c.l.b16 %v806
      %v848 = vunpack.c.l.b16 %v807
      %v849 = vunpack.c.l.b16 %v808
      %v850 = vunpack.c.l.b16 %v809
      %v851 = vunpack.c.l.b16 %v810
      %v852 = vunpack.c.l.b16 %v811
      %v853 = vunpack.c.l.b16 %v812
      %v854 = vunpack.c.l.b16 %v813
      %v855 = vpack.c.b16 %v840, %v839
      %v856 = vpack.c.b16 %v842, %v841
      %v857 = vpack.c.b16 %v844, %v843
      %v858 = vpack.c.b16 %v846, %v845
      %v859 = vpack.c.b16 %v848, %v847
      %v860 = vpack.c.b16 %v850, %v849
      %v861 = vpack.c.b16 %v852, %v851
      %v862 = vpack.c.b16 %v854, %v853
      %871 = vmatpush.bf16.msra.mxu0 %v862
      %872 = vmatpush.bf16.msra.mxu0 %v861
      %873 = vmatpush.bf16.msra.mxu0 %v860
      %874 = vmatpush.bf16.msra.mxu0 %v859
      %875 = vmatpush.bf16.msra.mxu0 %v858
      %876 = vmatpush.bf16.msra.mxu0 %v857
      %877 = vmatpush.bf16.msra.mxu0 %v856
      %878 = vmatpush.bf16.msra.mxu0 %v855
      %879 = vmatmul.bf16.gmra.mxu0 %v821
      %v880 = vpop.f32.mrf.mxu0
      %v881 = vadd.f32 0.0, %v880
      %v882 = vpop.f32.mrf.mxu0
      %883 = vdwg.mxu0
      %v884 = vadd.f32 %v796, %v881
      %v885 = vld [vmem:[%s191 + $0x4] sm:$0x3]
      %s886 = scalar_lea.vmem %s1, 512
      %v887 = vld [vmem:[%s886] sm:$0xf]
      %v888 = vld [vmem:[%s886 + $0x4] sm:$0xf]
      %v889 = vld [vmem:[%s886 + $0x8] sm:$0xf]
      %v890 = vld [vmem:[%s886 + $0xc] sm:$0xf]
      %v891 = vld [vmem:[%s886 + $0x10] sm:$0xf]
      %v892 = vld [vmem:[%s886 + $0x14] sm:$0xf]
      %v893 = vld [vmem:[%s886 + $0x18] sm:$0xf]
      %v894 = vld [vmem:[%s886 + $0x1c] sm:$0xf]
      %v895 = vld [vmem:[%s886 + $0x20] sm:$0xf]
      %v896 = vld [vmem:[%s886 + $0x24] sm:$0xf]
      %v897 = vld [vmem:[%s886 + $0x28] sm:$0xf]
      %v898 = vld [vmem:[%s886 + $0x2c] sm:$0xf]
      %v899 = vld [vmem:[%s886 + $0x30] sm:$0xf]
      %v900 = vld [vmem:[%s886 + $0x34] sm:$0xf]
      %v901 = vld [vmem:[%s886 + $0x38] sm:$0xf]
      %v902 = vld [vmem:[%s886 + $0x3c] sm:$0xf]
      %v919 = vunpack.c.l.b16 %v887
      %v920 = vunpack.c.l.b16 %v888
      %v921 = vunpack.c.l.b16 %v889
      %v922 = vunpack.c.l.b16 %v890
      %v923 = vunpack.c.l.b16 %v891
      %v924 = vunpack.c.l.b16 %v892
      %v925 = vunpack.c.l.b16 %v893
      %v926 = vunpack.c.l.b16 %v894
      %v927 = vunpack.c.l.b16 %v895
      %v928 = vunpack.c.l.b16 %v896
      %v929 = vunpack.c.l.b16 %v897
      %v930 = vunpack.c.l.b16 %v898
      %v931 = vunpack.c.l.b16 %v899
      %v932 = vunpack.c.l.b16 %v900
      %v933 = vunpack.c.l.b16 %v901
      %v934 = vunpack.c.l.b16 %v902
      %v935 = vpack.c.b16 %v920, %v919
      %v936 = vpack.c.b16 %v922, %v921
      %v937 = vpack.c.b16 %v924, %v923
      %v938 = vpack.c.b16 %v926, %v925
      %v939 = vpack.c.b16 %v928, %v927
      %v940 = vpack.c.b16 %v930, %v929
      %v941 = vpack.c.b16 %v932, %v931
      %v942 = vpack.c.b16 %v934, %v933
      %951 = vmatpush.bf16.msra.mxu0 %v942
      %952 = vmatpush.bf16.msra.mxu0 %v941
      %953 = vmatpush.bf16.msra.mxu0 %v940
      %954 = vmatpush.bf16.msra.mxu0 %v939
      %955 = vmatpush.bf16.msra.mxu0 %v938
      %956 = vmatpush.bf16.msra.mxu0 %v937
      %957 = vmatpush.bf16.msra.mxu0 %v936
      %958 = vmatpush.bf16.msra.mxu0 %v935
      %959 = vmatmul.bf16.gmra.mxu0 %v885
      %v960 = vpop.f32.mrf.mxu0
      %v961 = vadd.f32 0.0, %v960
      %v962 = vpop.f32.mrf.mxu0
      %963 = vdwg.mxu0
      %v964 = vadd.f32 %v884, %v961
      %v965 = vld [vmem:[%s2] sm:$0x1]
      %v967 = vperm.slane %v965, 0
      %v969 = vmul.f32 %v964, %v967
      %v970 = vld [vmem:[%s3] sm:$0x1]
      %v972 = vperm.slane %v970, 0
      %v974 = vadd.f32 %v969, %v972
      %v975 = vmax.f32 %v974, 0.0
      %v976 = vpack.c.bf16 %v975, %v975
      %vm977 = vcmask 1041408
      %vm978 = vsmask.f32 1280
      %vm979 = vmand %vm977, %vm978
      %v980 = vld [vmem:[%s195] sm:$0x3]
      %v981 = vsel %vm979, %v976, %v980
      %982 = vst [vmem:[%s195] sm:$0x3] %v981
      %p983 = scmp.lt.s32.totalorder %s15, 1
      %s984 = scalar_select %p983, %s15, 1
      %s985 = smul.addr %s984, 2
      %s986 = scalar_lea.vmem %s4, %s985
      // Predicated region
      $region37: #{convo_classifier_forward.16} parent=35 // pred_check
        %p987 = pneg %p122
      $region38: #{convo_classifier_forward.16} parent=35 // pred_check_branch
        %989 = sbr.rel (%p987) target = $region40
      $region39: #{convo_classifier_forward.16} parent=35 // pred_region
        _
      $region40: #{convo_classifier_forward.16} parent=35 // pred_fallthru
        _
    $region36: #{convo_classifier_forward.16} parent=5 // pred_fallthru
      _
    %p990 = scmp.le.s32.totalorder 2, %s10
    // Predicated region
    $region41: #{convo_classifier_forward.16} parent=5 // pred_check
      %p991 = pneg %p990
    $region42: #{convo_classifier_forward.16} parent=5 // pred_check_branch
      %993 = sbr.rel (%p991) target = $region44
    $region43: #{convo_classifier_forward.16} parent=5 // pred_region
      %s994 = ssub.s32 %s10, 2
      // Predicated region
      $region45: #{convo_classifier_forward.16} parent=43 // pred_check
        %p995 = pneg %p128
      $region46: #{convo_classifier_forward.16} parent=43 // pred_check_branch
        %997 = sbr.rel (%p995) target = $region48
      $region47: #{convo_classifier_forward.16} parent=43 // pred_region
        %p998 = scmp.lt.s32.totalorder %s16, 1
        %s999 = scalar_select %p998, %s16, 1
        %s1000 = smul.addr %s999, 2
        %s1001 = scalar_lea.vmem %s4, %s1000
      $region48: #{convo_classifier_forward.16} parent=43 // pred_fallthru
        _
    $region44: #{convo_classifier_forward.16} parent=5 // pred_fallthru
      _
  $region6: #{convo_classifier_forward.16} parent=0 // loop_footer
    %s14 = sadd.s32 1, %s10
  $region7: #{convo_classifier_forward.16} parent=0 // loop_footer_branch
    %9 = sbr.rel target = $region3
  $region8: #{convo_classifier_forward.16} parent=0 // loop_exit
    _

// kernel: convo_classifier_forward.17
$region0: #{convo_classifier_forward.17}
  #allocation0 [shape = 'u32[]', space=smem, size = 0x4, offset = 0x4, fixed_abs, tag = 'smem constant byte address 0x4 - core index']
  #allocation1 [shape = 'u32[72,128]{1,0:T(1,128)}', space=vmem, size = 0x9000, scoped, tag = 'internal scratch']
  %s0 = inlined_call_operand.vmem [shape: bf16[2,1,128], index: 0, kind: input, shape index: {}]
  %s1 = inlined_call_operand.vmem [shape: bf16[128,3], index: 1, kind: input, shape index: {}]
  %s2 = inlined_call_operand.vmem [shape: f32[1,3], index: 2, kind: input, shape index: {}]
  %s3 = inlined_call_operand.hbm [shape: f32[2,3], index: 3, kind: output, shape index: {}]
  %s4 = sld [smem:[#allocation0]]
  $region22: #{convo_classifier_forward.17} parent=0
    _
  %s6 = ssub.s32 1, %s4
  %s7 = scalar_select 0, %s6, %s4
  $region1: #{convo_classifier_forward.17} parent=0
    #allocation2 [shape = 'u8[1024]{0}', space=vmem, size = 0x400, scoped, tag = 'output window, operand 0, single buffered']
    #allocation3 [shape = 's32[1]{0}', space=sflag, size = 0x4, scoped, tag = 'scoped memory for convo_classifier_forward.17']
    %8 = vsyncpa [#allocation3], 0
    // Predicated region
    $region2: #{convo_classifier_forward.17} parent=1 // pred_check
      _
    $region3: #{convo_classifier_forward.17} parent=1 // pred_check_branch
      %10 = sbr.rel (0) target = $region5
    $region4: #{convo_classifier_forward.17} parent=1 // pred_region
      _
    $region5: #{convo_classifier_forward.17} parent=1 // pred_fallthru
      _
    // Predicated region
    $region6: #{convo_classifier_forward.17} parent=1 // pred_check
      _
    $region7: #{convo_classifier_forward.17} parent=1 // pred_check_branch
      %12 = sbr.rel (0) target = $region9
    $region8: #{convo_classifier_forward.17} parent=1 // pred_region
      _
    $region9: #{convo_classifier_forward.17} parent=1 // pred_fallthru
      _
    // Predicated region
    $region10: #{convo_classifier_forward.17} parent=1 // pred_check
      _
    $region11: #{convo_classifier_forward.17} parent=1 // pred_check_branch
      %14 = sbr.rel (0) target = $region13
    $region12: #{convo_classifier_forward.17} parent=1 // pred_region
      _
    $region13: #{convo_classifier_forward.17} parent=1 // pred_fallthru
      _
    %v15 = vld [vmem:[%s0] sm:$0x1]
    %v16 = vld [vmem:[%s0 + $0x1] sm:$0x1]
    %v17 = vunpack.c.l.bf16 %v15
    %v18 = vunpack.c.l.bf16 %v16
    %v19 = vadd.f32 %v17, 0.0
    %v20 = vadd.f32 %v18, 0.0
    %v21 = vpack.c.bf16 %v19, %v19
    %v22 = vpack.c.bf16 %v20, %v20
    %v23 = vld [vmem:[%s1] sm:$0xf]
    %v24 = vld [vmem:[%s1 + $0x4] sm:$0xf]
    %v25 = vld [vmem:[%s1 + $0x8] sm:$0xf]
    %v26 = vld [vmem:[%s1 + $0xc] sm:$0xf]
    %v27 = vld [vmem:[%s1 + $0x10] sm:$0xf]
    %v28 = vld [vmem:[%s1 + $0x14] sm:$0xf]
    %v29 = vld [vmem:[%s1 + $0x18] sm:$0xf]
    %v30 = vld [vmem:[%s1 + $0x1c] sm:$0xf]
    %v31 = vld [vmem:[%s1 + $0x20] sm:$0xf]
    %v32 = vld [vmem:[%s1 + $0x24] sm:$0xf]
    %v33 = vld [vmem:[%s1 + $0x28] sm:$0xf]
    %v34 = vld [vmem:[%s1 + $0x2c] sm:$0xf]
    %v35 = vld [vmem:[%s1 + $0x30] sm:$0xf]
    %v36 = vld [vmem:[%s1 + $0x34] sm:$0xf]
    %v37 = vld [vmem:[%s1 + $0x38] sm:$0xf]
    %v38 = vld [vmem:[%s1 + $0x3c] sm:$0xf]
    %v39 = vld [vmem:[%s2] sm:$0x1]
    %v41 = vperm.slane %v39, 0
    %v45 = vunpack.c.l.b16 %v21
    %v46 = vunpack.c.l.b16 %v22
    %v47 = vrot.slane %v46, 7
    %vm48 = vcmask 1041409
    %v49 = vsel %vm48, %v47, %v45
    %v50 = vpack.c.b16 %v49, %v49
    %v68 = vunpack.c.l.b16 %v23
    %v69 = vunpack.c.l.b16 %v24
    %v70 = vunpack.c.l.b16 %v25
    %v71 = vunpack.c.l.b16 %v26
    %v72 = vunpack.c.l.b16 %v27
    %v73 = vunpack.c.l.b16 %v28
    %v74 = vunpack.c.l.b16 %v29
    %v75 = vunpack.c.l.b16 %v30
    %v76 = vunpack.c.l.b16 %v31
    %v77 = vunpack.c.l.b16 %v32
    %v78 = vunpack.c.l.b16 %v33
    %v79 = vunpack.c.l.b16 %v34
    %v80 = vunpack.c.l.b16 %v35
    %v81 = vunpack.c.l.b16 %v36
    %v82 = vunpack.c.l.b16 %v37
    %v83 = vunpack.c.l.b16 %v38
    %v84 = vpack.c.b16 %v69, %v68
    %v85 = vpack.c.b16 %v71, %v70
    %v86 = vpack.c.b16 %v73, %v72
    %v87 = vpack.c.b16 %v75, %v74
    %v88 = vpack.c.b16 %v77, %v76
    %v89 = vpack.c.b16 %v79, %v78
    %v90 = vpack.c.b16 %v81, %v80
    %v91 = vpack.c.b16 %v83, %v82
    %100 = vmatpush.bf16.msra.mxu0 %v91
    %101 = vmatpush.bf16.msra.mxu0 %v90
    %102 = vmatpush.bf16.msra.mxu0 %v89
    %103 = vmatpush.bf16.msra.mxu0 %v88
    %104 = vmatpush.bf16.msra.mxu0 %v87
    %105 = vmatpush.bf16.msra.mxu0 %v86
    %106 = vmatpush.bf16.msra.mxu0 %v85
    %107 = vmatpush.bf16.msra.mxu0 %v84
    %108 = vmatmul.bf16.gmra.mxu0 %v50
    %v109 = vpop.f32.mrf.mxu0
    %v110 = vadd.f32 %v41, %v109
    %v111 = vpop.f32.mrf.mxu0
    %112 = vdwg.mxu0
    %vm113 = vcmask 17408
    %114 = vst.msk [vmem:[#allocation2] sm:$0x3] %vm113, %v110
    // Predicated region
    $region14: #{convo_classifier_forward.17} parent=1 // pred_check
      _
    $region15: #{convo_classifier_forward.17} parent=1 // pred_check_branch
      %116 = sbr.rel (0) target = $region17
    $region16: #{convo_classifier_forward.17} parent=1 // pred_region
      %118 = vsyncadd [#allocation3], 0
      %s120 = sshll.u32 [#allocation2], 4
      %s121 = int_to_ptr.vmem [resolvable:$true] %s120
      %s122 = sshll.u32 %s3, 4
      %s123 = int_to_ptr.hbm [resolvable:$true] %s122
      %125 = dma.vmem_to_hbm [thread:$0]  %s121, 32, %s123, [#allocation3]
    $region17: #{convo_classifier_forward.17} parent=1 // pred_fallthru
      _
    // Predicated region
    $region18: #{convo_classifier_forward.17} parent=1 // pred_check
      _
    $region19: #{convo_classifier_forward.17} parent=1 // pred_check_branch
      %127 = sbr.rel (0) target = $region21
    $region20: #{convo_classifier_forward.17} parent=1 // pred_region
      %129 = dma.done [#allocation3], 32
    $region21: #{convo_classifier_forward.17} parent=1 // pred_fallthru
      _
    %130 = vsyncpa [#allocation3], 1

</llo_original>
